<compile_context>
chip_gen: v6e
topology: v6e:2x2x1
jax: 0.10.0
libtpu: 0.0.40
codegen_flags: <defaults>
</compile_context>

<pallas_src>
import functools
import math

import jax
import jax.numpy as jnp
from jax.experimental import pallas as pl
from jax.experimental.pallas import tpu as pltpu


# --------------------------------------------------------------------------
# Kernel: one grid step == one encoder layer applied to the whole batch.
# --------------------------------------------------------------------------
def encoder_stack_kernel(x_ref, bias_ref,
                         wq_ref, bq_ref, wk_ref, bk_ref, wv_ref, bv_ref,
                         wo_ref, bo_ref, g1_ref, be1_ref,
                         w1_ref, bf1_ref, w2_ref, bf2_ref, g2_ref, be2_ref,
                         o_ref, *, n_heads, d_model, d_head, eps):
    layer = pl.program_id(0)

    # Layer 0: seed the resident activation (output block with constant index
    # map, so it stays in VMEM across all grid steps) with the input.
    @pl.when(layer == 0)
    def _():
        o_ref[...] = x_ref[...]

    h = o_ref[...]                       # (N, Dp)   N = B*S, Dp = padded d_model
    N, Dp = h.shape
    dhp = Dp // n_heads                  # padded (lane-aligned) head width
    inv_d = 1.0 / d_model                # LayerNorm stats over REAL features
    scale = 1.0 / math.sqrt(d_head)

    def linear(a, w_ref, b_ref):
        return (jnp.dot(a, w_ref[0], preferred_element_type=jnp.float32)
                + b_ref[0])

    def layer_norm(a, g_ref, b_ref):
        # Padded lanes of `a` are zero, so plain lane sums with the real
        # divisor give the exact mean / biased variance of the original
        # d_model features; gamma/beta are zero on padded lanes, keeping them 0.
        mu = jnp.sum(a, axis=-1, keepdims=True) * inv_d
        ex2 = jnp.sum(a * a, axis=-1, keepdims=True) * inv_d
        inv = jax.lax.rsqrt(ex2 - mu * mu + eps)
        return (a - mu) * inv * g_ref[0] + b_ref[0]

    # ---- multi-head self-attention ---------------------------------------
    q = linear(h, wq_ref, bq_ref) * scale          # fold 1/sqrt(dh) into q
    k = linear(h, wk_ref, bk_ref)
    v = linear(h, wv_ref, bv_ref)
    bias = bias_ref[...]                           # block-diagonal batch mask

    wo_mat = wo_ref[0]
    attn = jnp.zeros((N, Dp), jnp.float32)
    for hd in range(n_heads):                      # static, 32-lane-aligned heads
        sl = slice(hd * dhp, (hd + 1) * dhp)
        s = jnp.dot(q[:, sl], k[:, sl].T,
                    preferred_element_type=jnp.float32) + bias
        s = s - jnp.max(s, axis=-1, keepdims=True)
        e = jnp.exp(s)
        p = e * pl.reciprocal(jnp.sum(e, axis=-1, keepdims=True), approx=True)
        ctx_h = jnp.dot(p, v[:, sl], preferred_element_type=jnp.float32)
        # Output projection decomposed per head -> no lane concatenation.
        attn = attn + jnp.dot(ctx_h, wo_mat[sl, :],
                              preferred_element_type=jnp.float32)
    attn = attn + bo_ref[0]

    y = layer_norm(h + attn, g1_ref, be1_ref)

    # ---- position-wise feed-forward ---------------------------------------
    hidden = jnp.maximum(linear(y, w1_ref, bf1_ref), 0.0)
    ffn = linear(hidden, w2_ref, bf2_ref)
    out = layer_norm(y + ffn, g2_ref, be2_ref)

    o_ref[...] = out.astype(o_ref.dtype)


# --------------------------------------------------------------------------
# Host-side weight packing: pad d_model / d_ff to 128 lanes, with per-head
# repacking of the q/k/v columns and o rows so heads stay separated.
# --------------------------------------------------------------------------
def _pack_block_params(p, *, n_heads, d_pad, f_pad):
    d_model = p["wq"].shape[0]
    dh = d_model // n_heads
    dhp = d_pad // n_heads

    def pad2(w, rows, cols):
        r, c = w.shape
        return jnp.pad(w, ((0, rows - r), (0, cols - c)))

    def qkv_w(w):                      # (D, D) -> (Dp, Dp), per-head columns
        w = w.reshape(d_model, n_heads, dh)
        w = jnp.pad(w, ((0, d_pad - d_model), (0, 0), (0, dhp - dh)))
        return w.reshape(d_pad, d_pad)

    def qkv_b(b):                      # (1, D) -> (1, Dp), per-head packing
        b = b.reshape(n_heads, dh)
        b = jnp.pad(b, ((0, 0), (0, dhp - dh)))
        return b.reshape(1, d_pad)

    def out_w(w):                      # (D, D) -> (Dp, Dp), per-head rows
        w = w.reshape(n_heads, dh, d_model)
        w = jnp.pad(w, ((0, 0), (0, dhp - dh), (0, d_pad - d_model)))
        return w.reshape(d_pad, d_pad)

    return {
        "wq": qkv_w(p["wq"]), "bq": qkv_b(p["bq"]),
        "wk": qkv_w(p["wk"]), "bk": qkv_b(p["bk"]),
        "wv": qkv_w(p["wv"]), "bv": qkv_b(p["bv"]),
        "wo": out_w(p["wo"]), "bo": pad2(p["bo"], 1, d_pad),
        "g1": pad2(p["g1"], 1, d_pad), "be1": pad2(p["be1"], 1, d_pad),
        "w1": pad2(p["w1"], d_pad, f_pad), "bf1": pad2(p["bf1"], 1, f_pad),
        "w2": pad2(p["w2"], f_pad, d_pad), "bf2": pad2(p["bf2"], 1, d_pad),
        "g2": pad2(p["g2"], 1, d_pad), "be2": pad2(p["be2"], 1, d_pad),
    }


_PARAM_ORDER = ("wq", "bq", "wk", "bk", "wv", "bv", "wo", "bo",
                "g1", "be1", "w1", "bf1", "w2", "bf2", "g2", "be2")


def encoder_forward_pallas(x, layer_params_list, *, n_heads, eps=1e-5,
                           d_pad=128, f_pad=128):
    """Mirrors Encoder.forward: n_layer blocks, fused into one pallas_call."""
    B, S, D = x.shape
    n_layer = len(layer_params_list)
    N = B * S

    packed = [_pack_block_params(p, n_heads=n_heads, d_pad=d_pad, f_pad=f_pad)
              for p in layer_params_list]
    stacked = [jnp.stack([pk[name] for pk in packed], axis=0)
               for name in _PARAM_ORDER]

    x_p = jnp.pad(x.reshape(N, D), ((0, 0), (0, d_pad - D)))

    # Block-diagonal additive mask keeps attention within each batch element
    # even though rows of all batches are processed in one 2-D matmul.
    row_b = jnp.arange(N, dtype=jnp.int32) // S
    attn_bias = jnp.where(row_b[:, None] == row_b[None, :],
                          jnp.float32(0.0), jnp.float32(-1e30))

    in_specs = [pl.BlockSpec((N, d_pad), lambda l: (0, 0)),
                pl.BlockSpec((N, N), lambda l: (0, 0))]
    for w in stacked:
        in_specs.append(pl.BlockSpec((1,) + w.shape[1:], lambda l: (l, 0, 0)))

    kernel = functools.partial(
        encoder_stack_kernel, n_heads=n_heads, d_model=D,
        d_head=D // n_heads, eps=eps)

    flops = n_layer * (8 * N * d_pad * d_pad + 4 * N * d_pad * f_pad
                       + 4 * N * N * d_pad)
    transcendentals = n_layer * (n_heads * N * N + (n_heads + 2) * N)
    bytes_accessed = 4 * (2 * N * d_pad + N * N
                          + sum(int(w.size) for w in stacked))

    out = pl.pallas_call(
        kernel,
        out_shape=jax.ShapeDtypeStruct((N, d_pad), x.dtype),
        grid_spec=pltpu.PrefetchScalarGridSpec(
            num_scalar_prefetch=0,
            grid=(n_layer,),                       # layers are sequential
            in_specs=in_specs,
            out_specs=pl.BlockSpec((N, d_pad), lambda l: (0, 0)),
        ),
        compiler_params=pltpu.CompilerParams(
            dimension_semantics=("arbitrary",)),
        cost_estimate=pl.CostEstimate(
            flops=int(flops), transcendentals=int(transcendentals),
            bytes_accessed=int(bytes_accessed)),
    )(x_p, attn_bias, *stacked)

    return out[:, :D].reshape(B, S, D)


# --------------------------------------------------------------------------
# Pure-JAX reference (unpadded) and parameter init.
# --------------------------------------------------------------------------
def _encoder_block_ref(x, p, *, n_heads, eps=1e-5):
    B, S, D = x.shape
    dh = D // n_heads

    def linear(a, w, b):
        return a @ w + b[0]

    def layer_norm(a, g, b):
        mu = jnp.mean(a, axis=-1, keepdims=True)
        var = jnp.mean((a - mu) ** 2, axis=-1, keepdims=True)
        return (a - mu) * jax.lax.rsqrt(var + eps) * g[0] + b[0]

    q = linear(x, p["wq"], p["bq"]).reshape(B, S, n_heads, dh)
    k = linear(x, p["wk"], p["bk"]).reshape(B, S, n_heads, dh)
    v = linear(x, p["wv"], p["bv"]).reshape(B, S, n_heads, dh)
    s = jnp.einsum("bihd,bjhd->bhij", q, k) / math.sqrt(dh)
    a = jax.nn.softmax(s, axis=-1)
    ctx = jnp.einsum("bhij,bjhd->bihd", a, v).reshape(B, S, D)
    y = layer_norm(x + linear(ctx, p["wo"], p["bo"]), p["g1"], p["be1"])
    hid = jax.nn.relu(linear(y, p["w1"], p["bf1"]))
    return layer_norm(y + linear(hid, p["w2"], p["bf2"]), p["g2"], p["be2"])


def encoder_forward_ref(x, layer_params_list, *, n_heads):
    out = x
    for p in layer_params_list:
        out = _encoder_block_ref(out, p, n_heads=n_heads)
    return out


def init_block_params(key, d_model, d_ff):
    ks = jax.random.split(key, 6)
    s = 0.02
    return {
        "wq": s * jax.random.normal(ks[0], (d_model, d_model), jnp.float32),
        "wk": s * jax.random.normal(ks[1], (d_model, d_model), jnp.float32),
        "wv": s * jax.random.normal(ks[2], (d_model, d_model), jnp.float32),
        "wo": s * jax.random.normal(ks[3], (d_model, d_model), jnp.float32),
        "w1": s * jax.random.normal(ks[4], (d_model, d_ff), jnp.float32),
        "w2": s * jax.random.normal(ks[5], (d_ff, d_model), jnp.float32),
        "bq": jnp.zeros((1, d_model), jnp.float32),
        "bk": jnp.zeros((1, d_model), jnp.float32),
        "bv": jnp.zeros((1, d_model), jnp.float32),
        "bo": jnp.zeros((1, d_model), jnp.float32),
        "bf1": jnp.zeros((1, d_ff), jnp.float32),
        "bf2": jnp.zeros((1, d_model), jnp.float32),
        "g1": jnp.ones((1, d_model), jnp.float32),
        "be1": jnp.zeros((1, d_model), jnp.float32),
        "g2": jnp.ones((1, d_model), jnp.float32),
        "be2": jnp.zeros((1, d_model), jnp.float32),
    }


if __name__ == "__main__":
    B, S, D = 2, 8, 32
    n_heads = 4
    d_ff = 64
    n_layer = 2

    key = jax.random.PRNGKey(0)
    kx, kp = jax.random.split(key)
    x = jax.random.normal(kx, (B, S, D), jnp.float32)

    # Encoder uses copy.deepcopy(encoder_block): every layer has the SAME
    # (untrained) weights, so we reuse one parameter set n_layer times.
    block_params = init_block_params(kp, D, d_ff)
    layer_params_list = [block_params] * n_layer

    fwd = jax.jit(functools.partial(encoder_forward_pallas, n_heads=n_heads))
    out = fwd(x, layer_params_list)
    jax.block_until_ready(out)

    assert out.shape == (B, S, D)
    assert bool(jnp.all(jnp.isfinite(out)))

    ref = encoder_forward_ref(x, layer_params_list, n_heads=n_heads)
    max_err = float(jnp.max(jnp.abs(out - ref)))
    assert max_err < 1e-2, f"mismatch vs reference: max abs err = {max_err}"

    print("KERNEL_OK")
</pallas_src>

<mosaic_0001>
module attributes {stable_mosaic.version = 11 : i64} {
  func.func @encoder_stack_kernel(%arg0: i32, %arg1: memref<16x128xf32, #tpu.memory_space<vmem>>, %arg2: memref<16x16xf32, #tpu.memory_space<vmem>>, %arg3: memref<1x128x128xf32, #tpu.memory_space<vmem>>, %arg4: memref<1x1x128xf32, #tpu.memory_space<vmem>>, %arg5: memref<1x128x128xf32, #tpu.memory_space<vmem>>, %arg6: memref<1x1x128xf32, #tpu.memory_space<vmem>>, %arg7: memref<1x128x128xf32, #tpu.memory_space<vmem>>, %arg8: memref<1x1x128xf32, #tpu.memory_space<vmem>>, %arg9: memref<1x128x128xf32, #tpu.memory_space<vmem>>, %arg10: memref<1x1x128xf32, #tpu.memory_space<vmem>>, %arg11: memref<1x1x128xf32, #tpu.memory_space<vmem>>, %arg12: memref<1x1x128xf32, #tpu.memory_space<vmem>>, %arg13: memref<1x128x128xf32, #tpu.memory_space<vmem>>, %arg14: memref<1x1x128xf32, #tpu.memory_space<vmem>>, %arg15: memref<1x128x128xf32, #tpu.memory_space<vmem>>, %arg16: memref<1x1x128xf32, #tpu.memory_space<vmem>>, %arg17: memref<1x1x128xf32, #tpu.memory_space<vmem>>, %arg18: memref<1x1x128xf32, #tpu.memory_space<vmem>>, %arg19: memref<16x128xf32, #tpu.memory_space<vmem>>) attributes {dimension_semantics = [#tpu.dimension_semantics<arbitrary>], iteration_bounds = array<i64: 2>, scalar_prefetch = 0 : i64, scratch_operands = 0 : i64, tpu.core_type = #tpu.core_type<tc>, window_params = [{pipeline_mode = #tpu.pipeline_mode<synchronous>, transform_indices = @transform_0, window_bounds = array<i64: 16, 128>}, {pipeline_mode = #tpu.pipeline_mode<synchronous>, transform_indices = @transform_1, window_bounds = array<i64: 16, 16>}, {transform_indices = @transform_2, window_bounds = array<i64: 1, 128, 128>}, {transform_indices = @transform_3, window_bounds = array<i64: 1, 1, 128>}, {transform_indices = @transform_4, window_bounds = array<i64: 1, 128, 128>}, {transform_indices = @transform_5, window_bounds = array<i64: 1, 1, 128>}, {transform_indices = @transform_6, window_bounds = array<i64: 1, 128, 128>}, {transform_indices = @transform_7, window_bounds = array<i64: 1, 1, 128>}, {transform_indices = @transform_8, window_bounds = array<i64: 1, 128, 128>}, {transform_indices = @transform_9, window_bounds = array<i64: 1, 1, 128>}, {transform_indices = @transform_10, window_bounds = array<i64: 1, 1, 128>}, {transform_indices = @transform_11, window_bounds = array<i64: 1, 1, 128>}, {transform_indices = @transform_12, window_bounds = array<i64: 1, 128, 128>}, {transform_indices = @transform_13, window_bounds = array<i64: 1, 1, 128>}, {transform_indices = @transform_14, window_bounds = array<i64: 1, 128, 128>}, {transform_indices = @transform_15, window_bounds = array<i64: 1, 1, 128>}, {transform_indices = @transform_16, window_bounds = array<i64: 1, 1, 128>}, {transform_indices = @transform_17, window_bounds = array<i64: 1, 1, 128>}, {pipeline_mode = #tpu.pipeline_mode<synchronous>, transform_indices = @transform_18, window_bounds = array<i64: 16, 128>}]} {
    %c0_i32 = arith.constant 0 : i32
    %0 = arith.cmpi eq, %arg0, %c0_i32 : i32
    %1 = arith.extui %0 : i1 to i32
    %c0_i32_0 = arith.constant 0 : i32
    %2 = arith.cmpi ne, %1, %c0_i32_0 : i32
    scf.if %2 {
      %c0_91 = arith.constant 0 : index
      %c0_92 = arith.constant 0 : index
      %186 = vector.load %arg1[%c0_91, %c0_92] : memref<16x128xf32, #tpu.memory_space<vmem>>, vector<16x128xf32>
      %c0_93 = arith.constant 0 : index
      %c0_94 = arith.constant 0 : index
      %187 = vector.load %arg19[%c0_93, %c0_94] : memref<16x128xf32, #tpu.memory_space<vmem>>, vector<16x128xf32>
      tpu.vector_store %arg19[%c0_93, %c0_94], %186 {strides = array<i32>} : memref<16x128xf32, #tpu.memory_space<vmem>>, vector<16x128xf32>,
    } else {
    }
    %c0 = arith.constant 0 : index
    %c0_1 = arith.constant 0 : index
    %3 = vector.load %arg19[%c0, %c0_1] : memref<16x128xf32, #tpu.memory_space<vmem>>, vector<16x128xf32>
    %c0_2 = arith.constant 0 : index
    %c0_3 = arith.constant 0 : index
    %c0_4 = arith.constant 0 : index
    %4 = vector.load %arg3[%c0_2, %c0_3, %c0_4] : memref<1x128x128xf32, #tpu.memory_space<vmem>>, vector<1x128x128xf32>
    %5 = vector.shape_cast %4 : vector<1x128x128xf32> to vector<128x128xf32>
    %cst = arith.constant dense<0.000000e+00> : vector<16x128xf32>
    %6 = tpu.matmul %3, %5, %cst {dimension_numbers = #tpu.dot_dimension_numbers<[1], [0], [0], [1], [0, 0, 1, 1], [], []>} : vector<16x128xf32>, vector<128x128xf32>, vector<16x128xf32> -> vector<16x128xf32>
    %c0_5 = arith.constant 0 : index
    %c0_6 = arith.constant 0 : index
    %c0_7 = arith.constant 0 : index
    %7 = vector.load %arg4[%c0_5, %c0_6, %c0_7] : memref<1x1x128xf32, #tpu.memory_space<vmem>>, vector<1x1x128xf32>
    %8 = vector.shape_cast %7 : vector<1x1x128xf32> to vector<1x128xf32>
    %9 = vector.broadcast %8 : vector<1x128xf32> to vector<16x128xf32>
    %10 = arith.addf %6, %9 : vector<16x128xf32>
    %cst_8 = arith.constant 0.353553385 : f32
    %11 = vector.broadcast %cst_8 : f32 to vector<16x128xf32>
    %12 = arith.mulf %10, %11 : vector<16x128xf32>
    %c0_9 = arith.constant 0 : index
    %c0_10 = arith.constant 0 : index
    %c0_11 = arith.constant 0 : index
    %13 = vector.load %arg5[%c0_9, %c0_10, %c0_11] : memref<1x128x128xf32, #tpu.memory_space<vmem>>, vector<1x128x128xf32>
    %14 = vector.shape_cast %13 : vector<1x128x128xf32> to vector<128x128xf32>
    %cst_12 = arith.constant dense<0.000000e+00> : vector<16x128xf32>
    %15 = tpu.matmul %3, %14, %cst_12 {dimension_numbers = #tpu.dot_dimension_numbers<[1], [0], [0], [1], [0, 0, 1, 1], [], []>} : vector<16x128xf32>, vector<128x128xf32>, vector<16x128xf32> -> vector<16x128xf32>
    %c0_13 = arith.constant 0 : index
    %c0_14 = arith.constant 0 : index
    %c0_15 = arith.constant 0 : index
    %16 = vector.load %arg6[%c0_13, %c0_14, %c0_15] : memref<1x1x128xf32, #tpu.memory_space<vmem>>, vector<1x1x128xf32>
    %17 = vector.shape_cast %16 : vector<1x1x128xf32> to vector<1x128xf32>
    %18 = vector.broadcast %17 : vector<1x128xf32> to vector<16x128xf32>
    %19 = arith.addf %15, %18 : vector<16x128xf32>
    %c0_16 = arith.constant 0 : index
    %c0_17 = arith.constant 0 : index
    %c0_18 = arith.constant 0 : index
    %20 = vector.load %arg7[%c0_16, %c0_17, %c0_18] : memref<1x128x128xf32, #tpu.memory_space<vmem>>, vector<1x128x128xf32>
    %21 = vector.shape_cast %20 : vector<1x128x128xf32> to vector<128x128xf32>
    %cst_19 = arith.constant dense<0.000000e+00> : vector<16x128xf32>
    %22 = tpu.matmul %3, %21, %cst_19 {dimension_numbers = #tpu.dot_dimension_numbers<[1], [0], [0], [1], [0, 0, 1, 1], [], []>} : vector<16x128xf32>, vector<128x128xf32>, vector<16x128xf32> -> vector<16x128xf32>
    %c0_20 = arith.constant 0 : index
    %c0_21 = arith.constant 0 : index
    %c0_22 = arith.constant 0 : index
    %23 = vector.load %arg8[%c0_20, %c0_21, %c0_22] : memref<1x1x128xf32, #tpu.memory_space<vmem>>, vector<1x1x128xf32>
    %24 = vector.shape_cast %23 : vector<1x1x128xf32> to vector<1x128xf32>
    %25 = vector.broadcast %24 : vector<1x128xf32> to vector<16x128xf32>
    %26 = arith.addf %22, %25 : vector<16x128xf32>
    %c0_23 = arith.constant 0 : index
    %c0_24 = arith.constant 0 : index
    %27 = vector.load %arg2[%c0_23, %c0_24] : memref<16x16xf32, #tpu.memory_space<vmem>>, vector<16x16xf32>
    %c0_25 = arith.constant 0 : index
    %c0_26 = arith.constant 0 : index
    %c0_27 = arith.constant 0 : index
    %28 = vector.load %arg9[%c0_25, %c0_26, %c0_27] : memref<1x128x128xf32, #tpu.memory_space<vmem>>, vector<1x128x128xf32>
    %29 = vector.shape_cast %28 : vector<1x128x128xf32> to vector<128x128xf32>
    %cst_28 = arith.constant 0.000000e+00 : f32
    %30 = vector.broadcast %cst_28 : f32 to vector<16x128xf32>
    %31 = vector.extract_strided_slice %12 {offsets = [0, 0], sizes = [16, 32], strides = [1, 1]} : vector<16x128xf32> to vector<16x32xf32>
    %32 = vector.extract_strided_slice %19 {offsets = [0, 0], sizes = [16, 32], strides = [1, 1]} : vector<16x128xf32> to vector<16x32xf32>
    %33 = tpu.transpose %32, [1, 0] : vector<16x32xf32> -> vector<32x16xf32>
    %cst_29 = arith.constant dense<0.000000e+00> : vector<16x16xf32>
    %34 = tpu.matmul %31, %33, %cst_29 {dimension_numbers = #tpu.dot_dimension_numbers<[1], [0], [0], [1], [0, 0, 1, 1], [], []>} : vector<16x32xf32>, vector<32x16xf32>, vector<16x16xf32> -> vector<16x16xf32>
    %35 = arith.addf %34, %27 : vector<16x16xf32>
    %cst_30 = arith.constant dense<0xFF800000> : vector<16xf32>
    %36 = vector.multi_reduction <maximumf>, %35, %cst_30 [1] : vector<16x16xf32> to vector<16xf32>
    %37 = vector.shape_cast %36 : vector<16xf32> to vector<16x1xf32>
    %38 = vector.broadcast %37 : vector<16x1xf32> to vector<16x16xf32>
    %39 = arith.subf %35, %38 : vector<16x16xf32>
    %40 = math.exp %39 : vector<16x16xf32>
    %cst_31 = arith.constant dense<0.000000e+00> : vector<16xf32>
    %41 = vector.multi_reduction <add>, %40, %cst_31 [1] : vector<16x16xf32> to vector<16xf32>
    %42 = vector.shape_cast %41 : vector<16xf32> to vector<16x1xf32>
    %43 = tpu.reciprocal %42 {approx = true} : vector<16x1xf32> -> vector<16x1xf32>
    %44 = vector.broadcast %43 : vector<16x1xf32> to vector<16x16xf32>
    %45 = arith.mulf %40, %44 : vector<16x16xf32>
    %46 = vector.extract_strided_slice %26 {offsets = [0, 0], sizes = [16, 32], strides = [1, 1]} : vector<16x128xf32> to vector<16x32xf32>
    %cst_32 = arith.constant dense<0.000000e+00> : vector<16x32xf32>
    %47 = tpu.matmul %45, %46, %cst_32 {dimension_numbers = #tpu.dot_dimension_numbers<[1], [0], [0], [1], [0, 0, 1, 1], [], []>} : vector<16x16xf32>, vector<16x32xf32>, vector<16x32xf32> -> vector<16x32xf32>
    %48 = vector.extract_strided_slice %29 {offsets = [0, 0], sizes = [32, 128], strides = [1, 1]} : vector<128x128xf32> to vector<32x128xf32>
    %cst_33 = arith.constant dense<0.000000e+00> : vector<16x128xf32>
    %49 = tpu.matmul %47, %48, %cst_33 {dimension_numbers = #tpu.dot_dimension_numbers<[1], [0], [0], [1], [0, 0, 1, 1], [], []>} : vector<16x32xf32>, vector<32x128xf32>, vector<16x128xf32> -> vector<16x128xf32>
    %50 = arith.addf %30, %49 : vector<16x128xf32>
    %51 = vector.extract_strided_slice %12 {offsets = [0, 32], sizes = [16, 32], strides = [1, 1]} : vector<16x128xf32> to vector<16x32xf32>
    %52 = vector.extract_strided_slice %19 {offsets = [0, 32], sizes = [16, 32], strides = [1, 1]} : vector<16x128xf32> to vector<16x32xf32>
    %53 = tpu.transpose %52, [1, 0] : vector<16x32xf32> -> vector<32x16xf32>
    %cst_34 = arith.constant dense<0.000000e+00> : vector<16x16xf32>
    %54 = tpu.matmul %51, %53, %cst_34 {dimension_numbers = #tpu.dot_dimension_numbers<[1], [0], [0], [1], [0, 0, 1, 1], [], []>} : vector<16x32xf32>, vector<32x16xf32>, vector<16x16xf32> -> vector<16x16xf32>
    %55 = arith.addf %54, %27 : vector<16x16xf32>
    %cst_35 = arith.constant dense<0xFF800000> : vector<16xf32>
    %56 = vector.multi_reduction <maximumf>, %55, %cst_35 [1] : vector<16x16xf32> to vector<16xf32>
    %57 = vector.shape_cast %56 : vector<16xf32> to vector<16x1xf32>
    %58 = vector.broadcast %57 : vector<16x1xf32> to vector<16x16xf32>
    %59 = arith.subf %55, %58 : vector<16x16xf32>
    %60 = math.exp %59 : vector<16x16xf32>
    %cst_36 = arith.constant dense<0.000000e+00> : vector<16xf32>
    %61 = vector.multi_reduction <add>, %60, %cst_36 [1] : vector<16x16xf32> to vector<16xf32>
    %62 = vector.shape_cast %61 : vector<16xf32> to vector<16x1xf32>
    %63 = tpu.reciprocal %62 {approx = true} : vector<16x1xf32> -> vector<16x1xf32>
    %64 = vector.broadcast %63 : vector<16x1xf32> to vector<16x16xf32>
    %65 = arith.mulf %60, %64 : vector<16x16xf32>
    %66 = vector.extract_strided_slice %26 {offsets = [0, 32], sizes = [16, 32], strides = [1, 1]} : vector<16x128xf32> to vector<16x32xf32>
    %cst_37 = arith.constant dense<0.000000e+00> : vector<16x32xf32>
    %67 = tpu.matmul %65, %66, %cst_37 {dimension_numbers = #tpu.dot_dimension_numbers<[1], [0], [0], [1], [0, 0, 1, 1], [], []>} : vector<16x16xf32>, vector<16x32xf32>, vector<16x32xf32> -> vector<16x32xf32>
    %68 = vector.extract_strided_slice %29 {offsets = [32, 0], sizes = [32, 128], strides = [1, 1]} : vector<128x128xf32> to vector<32x128xf32>
    %cst_38 = arith.constant dense<0.000000e+00> : vector<16x128xf32>
    %69 = tpu.matmul %67, %68, %cst_38 {dimension_numbers = #tpu.dot_dimension_numbers<[1], [0], [0], [1], [0, 0, 1, 1], [], []>} : vector<16x32xf32>, vector<32x128xf32>, vector<16x128xf32> -> vector<16x128xf32>
    %70 = arith.addf %50, %69 : vector<16x128xf32>
    %71 = vector.extract_strided_slice %12 {offsets = [0, 64], sizes = [16, 32], strides = [1, 1]} : vector<16x128xf32> to vector<16x32xf32>
    %72 = vector.extract_strided_slice %19 {offsets = [0, 64], sizes = [16, 32], strides = [1, 1]} : vector<16x128xf32> to vector<16x32xf32>
    %73 = tpu.transpose %72, [1, 0] : vector<16x32xf32> -> vector<32x16xf32>
    %cst_39 = arith.constant dense<0.000000e+00> : vector<16x16xf32>
    %74 = tpu.matmul %71, %73, %cst_39 {dimension_numbers = #tpu.dot_dimension_numbers<[1], [0], [0], [1], [0, 0, 1, 1], [], []>} : vector<16x32xf32>, vector<32x16xf32>, vector<16x16xf32> -> vector<16x16xf32>
    %75 = arith.addf %74, %27 : vector<16x16xf32>
    %cst_40 = arith.constant dense<0xFF800000> : vector<16xf32>
    %76 = vector.multi_reduction <maximumf>, %75, %cst_40 [1] : vector<16x16xf32> to vector<16xf32>
    %77 = vector.shape_cast %76 : vector<16xf32> to vector<16x1xf32>
    %78 = vector.broadcast %77 : vector<16x1xf32> to vector<16x16xf32>
    %79 = arith.subf %75, %78 : vector<16x16xf32>
    %80 = math.exp %79 : vector<16x16xf32>
    %cst_41 = arith.constant dense<0.000000e+00> : vector<16xf32>
    %81 = vector.multi_reduction <add>, %80, %cst_41 [1] : vector<16x16xf32> to vector<16xf32>
    %82 = vector.shape_cast %81 : vector<16xf32> to vector<16x1xf32>
    %83 = tpu.reciprocal %82 {approx = true} : vector<16x1xf32> -> vector<16x1xf32>
    %84 = vector.broadcast %83 : vector<16x1xf32> to vector<16x16xf32>
    %85 = arith.mulf %80, %84 : vector<16x16xf32>
    %86 = vector.extract_strided_slice %26 {offsets = [0, 64], sizes = [16, 32], strides = [1, 1]} : vector<16x128xf32> to vector<16x32xf32>
    %cst_42 = arith.constant dense<0.000000e+00> : vector<16x32xf32>
    %87 = tpu.matmul %85, %86, %cst_42 {dimension_numbers = #tpu.dot_dimension_numbers<[1], [0], [0], [1], [0, 0, 1, 1], [], []>} : vector<16x16xf32>, vector<16x32xf32>, vector<16x32xf32> -> vector<16x32xf32>
    %88 = vector.extract_strided_slice %29 {offsets = [64, 0], sizes = [32, 128], strides = [1, 1]} : vector<128x128xf32> to vector<32x128xf32>
    %cst_43 = arith.constant dense<0.000000e+00> : vector<16x128xf32>
    %89 = tpu.matmul %87, %88, %cst_43 {dimension_numbers = #tpu.dot_dimension_numbers<[1], [0], [0], [1], [0, 0, 1, 1], [], []>} : vector<16x32xf32>, vector<32x128xf32>, vector<16x128xf32> -> vector<16x128xf32>
    %90 = arith.addf %70, %89 : vector<16x128xf32>
    %91 = vector.extract_strided_slice %12 {offsets = [0, 96], sizes = [16, 32], strides = [1, 1]} : vector<16x128xf32> to vector<16x32xf32>
    %92 = vector.extract_strided_slice %19 {offsets = [0, 96], sizes = [16, 32], strides = [1, 1]} : vector<16x128xf32> to vector<16x32xf32>
    %93 = tpu.transpose %92, [1, 0] : vector<16x32xf32> -> vector<32x16xf32>
    %cst_44 = arith.constant dense<0.000000e+00> : vector<16x16xf32>
    %94 = tpu.matmul %91, %93, %cst_44 {dimension_numbers = #tpu.dot_dimension_numbers<[1], [0], [0], [1], [0, 0, 1, 1], [], []>} : vector<16x32xf32>, vector<32x16xf32>, vector<16x16xf32> -> vector<16x16xf32>
    %95 = arith.addf %94, %27 : vector<16x16xf32>
    %cst_45 = arith.constant dense<0xFF800000> : vector<16xf32>
    %96 = vector.multi_reduction <maximumf>, %95, %cst_45 [1] : vector<16x16xf32> to vector<16xf32>
    %97 = vector.shape_cast %96 : vector<16xf32> to vector<16x1xf32>
    %98 = vector.broadcast %97 : vector<16x1xf32> to vector<16x16xf32>
    %99 = arith.subf %95, %98 : vector<16x16xf32>
    %100 = math.exp %99 : vector<16x16xf32>
    %cst_46 = arith.constant dense<0.000000e+00> : vector<16xf32>
    %101 = vector.multi_reduction <add>, %100, %cst_46 [1] : vector<16x16xf32> to vector<16xf32>
    %102 = vector.shape_cast %101 : vector<16xf32> to vector<16x1xf32>
    %103 = tpu.reciprocal %102 {approx = true} : vector<16x1xf32> -> vector<16x1xf32>
    %104 = vector.broadcast %103 : vector<16x1xf32> to vector<16x16xf32>
    %105 = arith.mulf %100, %104 : vector<16x16xf32>
    %106 = vector.extract_strided_slice %26 {offsets = [0, 96], sizes = [16, 32], strides = [1, 1]} : vector<16x128xf32> to vector<16x32xf32>
    %cst_47 = arith.constant dense<0.000000e+00> : vector<16x32xf32>
    %107 = tpu.matmul %105, %106, %cst_47 {dimension_numbers = #tpu.dot_dimension_numbers<[1], [0], [0], [1], [0, 0, 1, 1], [], []>} : vector<16x16xf32>, vector<16x32xf32>, vector<16x32xf32> -> vector<16x32xf32>
    %108 = vector.extract_strided_slice %29 {offsets = [96, 0], sizes = [32, 128], strides = [1, 1]} : vector<128x128xf32> to vector<32x128xf32>
    %cst_48 = arith.constant dense<0.000000e+00> : vector<16x128xf32>
    %109 = tpu.matmul %107, %108, %cst_48 {dimension_numbers = #tpu.dot_dimension_numbers<[1], [0], [0], [1], [0, 0, 1, 1], [], []>} : vector<16x32xf32>, vector<32x128xf32>, vector<16x128xf32> -> vector<16x128xf32>
    %110 = arith.addf %90, %109 : vector<16x128xf32>
    %c0_49 = arith.constant 0 : index
    %c0_50 = arith.constant 0 : index
    %c0_51 = arith.constant 0 : index
    %111 = vector.load %arg10[%c0_49, %c0_50, %c0_51] : memref<1x1x128xf32, #tpu.memory_space<vmem>>, vector<1x1x128xf32>
    %112 = vector.shape_cast %111 : vector<1x1x128xf32> to vector<1x128xf32>
    %113 = vector.broadcast %112 : vector<1x128xf32> to vector<16x128xf32>
    %114 = arith.addf %110, %113 : vector<16x128xf32>
    %115 = arith.addf %3, %114 : vector<16x128xf32>
    %cst_52 = arith.constant dense<0.000000e+00> : vector<16xf32>
    %116 = vector.multi_reduction <add>, %115, %cst_52 [1] : vector<16x128xf32> to vector<16xf32>
    %117 = vector.shape_cast %116 : vector<16xf32> to vector<16x1xf32>
    %cst_53 = arith.constant 3.125000e-02 : f32
    %118 = vector.broadcast %cst_53 : f32 to vector<16x1xf32>
    %119 = arith.mulf %117, %118 : vector<16x1xf32>
    %120 = arith.mulf %115, %115 : vector<16x128xf32>
    %cst_54 = arith.constant dense<0.000000e+00> : vector<16xf32>
    %121 = vector.multi_reduction <add>, %120, %cst_54 [1] : vector<16x128xf32> to vector<16xf32>
    %122 = vector.shape_cast %121 : vector<16xf32> to vector<16x1xf32>
    %cst_55 = arith.constant 3.125000e-02 : f32
    %123 = vector.broadcast %cst_55 : f32 to vector<16x1xf32>
    %124 = arith.mulf %122, %123 : vector<16x1xf32>
    %125 = arith.mulf %119, %119 : vector<16x1xf32>
    %126 = arith.subf %124, %125 : vector<16x1xf32>
    %cst_56 = arith.constant 9.99999974E-6 : f32
    %127 = vector.broadcast %cst_56 : f32 to vector<16x1xf32>
    %128 = arith.addf %126, %127 : vector<16x1xf32>
    %129 = math.rsqrt %128 : vector<16x1xf32>
    %130 = vector.broadcast %119 : vector<16x1xf32> to vector<16x128xf32>
    %131 = arith.subf %115, %130 : vector<16x128xf32>
    %132 = vector.broadcast %129 : vector<16x1xf32> to vector<16x128xf32>
    %133 = arith.mulf %131, %132 : vector<16x128xf32>
    %c0_57 = arith.constant 0 : index
    %c0_58 = arith.constant 0 : index
    %c0_59 = arith.constant 0 : index
    %134 = vector.load %arg11[%c0_57, %c0_58, %c0_59] : memref<1x1x128xf32, #tpu.memory_space<vmem>>, vector<1x1x128xf32>
    %135 = vector.shape_cast %134 : vector<1x1x128xf32> to vector<1x128xf32>
    %136 = vector.broadcast %135 : vector<1x128xf32> to vector<16x128xf32>
    %137 = arith.mulf %133, %136 : vector<16x128xf32>
    %c0_60 = arith.constant 0 : index
    %c0_61 = arith.constant 0 : index
    %c0_62 = arith.constant 0 : index
    %138 = vector.load %arg12[%c0_60, %c0_61, %c0_62] : memref<1x1x128xf32, #tpu.memory_space<vmem>>, vector<1x1x128xf32>
    %139 = vector.shape_cast %138 : vector<1x1x128xf32> to vector<1x128xf32>
    %140 = vector.broadcast %139 : vector<1x128xf32> to vector<16x128xf32>
    %141 = arith.addf %137, %140 : vector<16x128xf32>
    %c0_63 = arith.constant 0 : index
    %c0_64 = arith.constant 0 : index
    %c0_65 = arith.constant 0 : index
    %142 = vector.load %arg13[%c0_63, %c0_64, %c0_65] : memref<1x128x128xf32, #tpu.memory_space<vmem>>, vector<1x128x128xf32>
    %143 = vector.shape_cast %142 : vector<1x128x128xf32> to vector<128x128xf32>
    %cst_66 = arith.constant dense<0.000000e+00> : vector<16x128xf32>
    %144 = tpu.matmul %141, %143, %cst_66 {dimension_numbers = #tpu.dot_dimension_numbers<[1], [0], [0], [1], [0, 0, 1, 1], [], []>} : vector<16x128xf32>, vector<128x128xf32>, vector<16x128xf32> -> vector<16x128xf32>
    %c0_67 = arith.constant 0 : index
    %c0_68 = arith.constant 0 : index
    %c0_69 = arith.constant 0 : index
    %145 = vector.load %arg14[%c0_67, %c0_68, %c0_69] : memref<1x1x128xf32, #tpu.memory_space<vmem>>, vector<1x1x128xf32>
    %146 = vector.shape_cast %145 : vector<1x1x128xf32> to vector<1x128xf32>
    %147 = vector.broadcast %146 : vector<1x128xf32> to vector<16x128xf32>
    %148 = arith.addf %144, %147 : vector<16x128xf32>
    %cst_70 = arith.constant 0.000000e+00 : f32
    %149 = vector.broadcast %cst_70 : f32 to vector<16x128xf32>
    %150 = arith.maximumf %148, %149 : vector<16x128xf32>
    %c0_71 = arith.constant 0 : index
    %c0_72 = arith.constant 0 : index
    %c0_73 = arith.constant 0 : index
    %151 = vector.load %arg15[%c0_71, %c0_72, %c0_73] : memref<1x128x128xf32, #tpu.memory_space<vmem>>, vector<1x128x128xf32>
    %152 = vector.shape_cast %151 : vector<1x128x128xf32> to vector<128x128xf32>
    %cst_74 = arith.constant dense<0.000000e+00> : vector<16x128xf32>
    %153 = tpu.matmul %150, %152, %cst_74 {dimension_numbers = #tpu.dot_dimension_numbers<[1], [0], [0], [1], [0, 0, 1, 1], [], []>} : vector<16x128xf32>, vector<128x128xf32>, vector<16x128xf32> -> vector<16x128xf32>
    %c0_75 = arith.constant 0 : index
    %c0_76 = arith.constant 0 : index
    %c0_77 = arith.constant 0 : index
    %154 = vector.load %arg16[%c0_75, %c0_76, %c0_77] : memref<1x1x128xf32, #tpu.memory_space<vmem>>, vector<1x1x128xf32>
    %155 = vector.shape_cast %154 : vector<1x1x128xf32> to vector<1x128xf32>
    %156 = vector.broadcast %155 : vector<1x128xf32> to vector<16x128xf32>
    %157 = arith.addf %153, %156 : vector<16x128xf32>
    %158 = arith.addf %141, %157 : vector<16x128xf32>
    %cst_78 = arith.constant dense<0.000000e+00> : vector<16xf32>
    %159 = vector.multi_reduction <add>, %158, %cst_78 [1] : vector<16x128xf32> to vector<16xf32>
    %160 = vector.shape_cast %159 : vector<16xf32> to vector<16x1xf32>
    %cst_79 = arith.constant 3.125000e-02 : f32
    %161 = vector.broadcast %cst_79 : f32 to vector<16x1xf32>
    %162 = arith.mulf %160, %161 : vector<16x1xf32>
    %163 = arith.mulf %158, %158 : vector<16x128xf32>
    %cst_80 = arith.constant dense<0.000000e+00> : vector<16xf32>
    %164 = vector.multi_reduction <add>, %163, %cst_80 [1] : vector<16x128xf32> to vector<16xf32>
    %165 = vector.shape_cast %164 : vector<16xf32> to vector<16x1xf32>
    %cst_81 = arith.constant 3.125000e-02 : f32
    %166 = vector.broadcast %cst_81 : f32 to vector<16x1xf32>
    %167 = arith.mulf %165, %166 : vector<16x1xf32>
    %168 = arith.mulf %162, %162 : vector<16x1xf32>
    %169 = arith.subf %167, %168 : vector<16x1xf32>
    %cst_82 = arith.constant 9.99999974E-6 : f32
    %170 = vector.broadcast %cst_82 : f32 to vector<16x1xf32>
    %171 = arith.addf %169, %170 : vector<16x1xf32>
    %172 = math.rsqrt %171 : vector<16x1xf32>
    %173 = vector.broadcast %162 : vector<16x1xf32> to vector<16x128xf32>
    %174 = arith.subf %158, %173 : vector<16x128xf32>
    %175 = vector.broadcast %172 : vector<16x1xf32> to vector<16x128xf32>
    %176 = arith.mulf %174, %175 : vector<16x128xf32>
    %c0_83 = arith.constant 0 : index
    %c0_84 = arith.constant 0 : index
    %c0_85 = arith.constant 0 : index
    %177 = vector.load %arg17[%c0_83, %c0_84, %c0_85] : memref<1x1x128xf32, #tpu.memory_space<vmem>>, vector<1x1x128xf32>
    %178 = vector.shape_cast %177 : vector<1x1x128xf32> to vector<1x128xf32>
    %179 = vector.broadcast %178 : vector<1x128xf32> to vector<16x128xf32>
    %180 = arith.mulf %176, %179 : vector<16x128xf32>
    %c0_86 = arith.constant 0 : index
    %c0_87 = arith.constant 0 : index
    %c0_88 = arith.constant 0 : index
    %181 = vector.load %arg18[%c0_86, %c0_87, %c0_88] : memref<1x1x128xf32, #tpu.memory_space<vmem>>, vector<1x1x128xf32>
    %182 = vector.shape_cast %181 : vector<1x1x128xf32> to vector<1x128xf32>
    %183 = vector.broadcast %182 : vector<1x128xf32> to vector<16x128xf32>
    %184 = arith.addf %180, %183 : vector<16x128xf32>
    %c0_89 = arith.constant 0 : index
    %c0_90 = arith.constant 0 : index
    %185 = vector.load %arg19[%c0_89, %c0_90] : memref<16x128xf32, #tpu.memory_space<vmem>>, vector<16x128xf32>
    tpu.vector_store %arg19[%c0_89, %c0_90], %184 {strides = array<i32>} : memref<16x128xf32, #tpu.memory_space<vmem>>, vector<16x128xf32>,
    return
  }
  func.func @transform_0(%arg0: i32) -> (i32, i32) {
    %c0_i32 = arith.constant 0 : i32
    %c0_i32_0 = arith.constant 0 : i32
    %c0_i32_1 = arith.constant 0 : i32
    return %c0_i32, %c0_i32_0 : i32, i32
  }
  func.func @transform_1(%arg0: i32) -> (i32, i32) {
    %c0_i32 = arith.constant 0 : i32
    %c0_i32_0 = arith.constant 0 : i32
    %c0_i32_1 = arith.constant 0 : i32
    return %c0_i32, %c0_i32_0 : i32, i32
  }
  func.func @transform_2(%arg0: i32) -> (i32, i32, i32) {
    %c0_i32 = arith.constant 0 : i32
    %c0_i32_0 = arith.constant 0 : i32
    %c0_i32_1 = arith.constant 0 : i32
    return %arg0, %c0_i32, %c0_i32_0 : i32, i32, i32
  }
  func.func @transform_3(%arg0: i32) -> (i32, i32, i32) {
    %c0_i32 = arith.constant 0 : i32
    %c0_i32_0 = arith.constant 0 : i32
    %c0_i32_1 = arith.constant 0 : i32
    return %arg0, %c0_i32, %c0_i32_0 : i32, i32, i32
  }
  func.func @transform_4(%arg0: i32) -> (i32, i32, i32) {
    %c0_i32 = arith.constant 0 : i32
    %c0_i32_0 = arith.constant 0 : i32
    %c0_i32_1 = arith.constant 0 : i32
    return %arg0, %c0_i32, %c0_i32_0 : i32, i32, i32
  }
  func.func @transform_5(%arg0: i32) -> (i32, i32, i32) {
    %c0_i32 = arith.constant 0 : i32
    %c0_i32_0 = arith.constant 0 : i32
    %c0_i32_1 = arith.constant 0 : i32
    return %arg0, %c0_i32, %c0_i32_0 : i32, i32, i32
  }
  func.func @transform_6(%arg0: i32) -> (i32, i32, i32) {
    %c0_i32 = arith.constant 0 : i32
    %c0_i32_0 = arith.constant 0 : i32
    %c0_i32_1 = arith.constant 0 : i32
    return %arg0, %c0_i32, %c0_i32_0 : i32, i32, i32
  }
  func.func @transform_7(%arg0: i32) -> (i32, i32, i32) {
    %c0_i32 = arith.constant 0 : i32
    %c0_i32_0 = arith.constant 0 : i32
    %c0_i32_1 = arith.constant 0 : i32
    return %arg0, %c0_i32, %c0_i32_0 : i32, i32, i32
  }
  func.func @transform_8(%arg0: i32) -> (i32, i32, i32) {
    %c0_i32 = arith.constant 0 : i32
    %c0_i32_0 = arith.constant 0 : i32
    %c0_i32_1 = arith.constant 0 : i32
    return %arg0, %c0_i32, %c0_i32_0 : i32, i32, i32
  }
  func.func @transform_9(%arg0: i32) -> (i32, i32, i32) {
    %c0_i32 = arith.constant 0 : i32
    %c0_i32_0 = arith.constant 0 : i32
    %c0_i32_1 = arith.constant 0 : i32
    return %arg0, %c0_i32, %c0_i32_0 : i32, i32, i32
  }
  func.func @transform_10(%arg0: i32) -> (i32, i32, i32) {
    %c0_i32 = arith.constant 0 : i32
    %c0_i32_0 = arith.constant 0 : i32
    %c0_i32_1 = arith.constant 0 : i32
    return %arg0, %c0_i32, %c0_i32_0 : i32, i32, i32
  }
  func.func @transform_11(%arg0: i32) -> (i32, i32, i32) {
    %c0_i32 = arith.constant 0 : i32
    %c0_i32_0 = arith.constant 0 : i32
    %c0_i32_1 = arith.constant 0 : i32
    return %arg0, %c0_i32, %c0_i32_0 : i32, i32, i32
  }
  func.func @transform_12(%arg0: i32) -> (i32, i32, i32) {
    %c0_i32 = arith.constant 0 : i32
    %c0_i32_0 = arith.constant 0 : i32
    %c0_i32_1 = arith.constant 0 : i32
    return %arg0, %c0_i32, %c0_i32_0 : i32, i32, i32
  }
  func.func @transform_13(%arg0: i32) -> (i32, i32, i32) {
    %c0_i32 = arith.constant 0 : i32
    %c0_i32_0 = arith.constant 0 : i32
    %c0_i32_1 = arith.constant 0 : i32
    return %arg0, %c0_i32, %c0_i32_0 : i32, i32, i32
  }
  func.func @transform_14(%arg0: i32) -> (i32, i32, i32) {
    %c0_i32 = arith.constant 0 : i32
    %c0_i32_0 = arith.constant 0 : i32
    %c0_i32_1 = arith.constant 0 : i32
    return %arg0, %c0_i32, %c0_i32_0 : i32, i32, i32
  }
  func.func @transform_15(%arg0: i32) -> (i32, i32, i32) {
    %c0_i32 = arith.constant 0 : i32
    %c0_i32_0 = arith.constant 0 : i32
    %c0_i32_1 = arith.constant 0 : i32
    return %arg0, %c0_i32, %c0_i32_0 : i32, i32, i32
  }
  func.func @transform_16(%arg0: i32) -> (i32, i32, i32) {
    %c0_i32 = arith.constant 0 : i32
    %c0_i32_0 = arith.constant 0 : i32
    %c0_i32_1 = arith.constant 0 : i32
    return %arg0, %c0_i32, %c0_i32_0 : i32, i32, i32
  }
  func.func @transform_17(%arg0: i32) -> (i32, i32, i32) {
    %c0_i32 = arith.constant 0 : i32
    %c0_i32_0 = arith.constant 0 : i32
    %c0_i32_1 = arith.constant 0 : i32
    return %arg0, %c0_i32, %c0_i32_0 : i32, i32, i32
  }
  func.func @transform_18(%arg0: i32) -> (i32, i32) {
    %c0_i32 = arith.constant 0 : i32
    %c0_i32_0 = arith.constant 0 : i32
    %c0_i32_1 = arith.constant 0 : i32
    return %c0_i32, %c0_i32_0 : i32, i32
  }
}

</mosaic_0001>

<llo_original>
// kernel: encoder_forward_pallas.1
$region0: #{encoder_forward_pallas.1}
  #allocation0 [shape = 'u32[]', space=smem, size = 0x4, offset = 0x4, fixed_abs, tag = 'smem constant byte address 0x4 - core index']
  #allocation1 [shape = 'u32[144,128]{1,0:T(1,128)}', space=vmem, size = 0x12000, scoped, tag = 'internal scratch']
  %s0 = inlined_call_operand.vmem [shape: f32[16,128], index: 0, kind: input, shape index: {}]
  %s1 = inlined_call_operand.vmem [shape: f32[16,16], index: 1, kind: input, shape index: {}]
  %s2 = inlined_call_operand.vmem [shape: f32[2,128,128], index: 2, kind: input, shape index: {}]
  %s3 = inlined_call_operand.vmem [shape: f32[2,1,128], index: 3, kind: input, shape index: {}]
  %s4 = inlined_call_operand.vmem [shape: f32[2,128,128], index: 4, kind: input, shape index: {}]
  %s5 = inlined_call_operand.vmem [shape: f32[2,1,128], index: 5, kind: input, shape index: {}]
  %s6 = inlined_call_operand.vmem [shape: f32[2,128,128], index: 6, kind: input, shape index: {}]
  %s7 = inlined_call_operand.vmem [shape: f32[2,1,128], index: 7, kind: input, shape index: {}]
  %s8 = inlined_call_operand.vmem [shape: f32[2,128,128], index: 8, kind: input, shape index: {}]
  %s9 = inlined_call_operand.vmem [shape: f32[2,1,128], index: 9, kind: input, shape index: {}]
  %s10 = inlined_call_operand.vmem [shape: f32[2,1,128], index: 10, kind: input, shape index: {}]
  %s11 = inlined_call_operand.vmem [shape: f32[2,1,128], index: 11, kind: input, shape index: {}]
  %s12 = inlined_call_operand.vmem [shape: f32[2,128,128], index: 12, kind: input, shape index: {}]
  %s13 = inlined_call_operand.vmem [shape: f32[2,1,128], index: 13, kind: input, shape index: {}]
  %s14 = inlined_call_operand.vmem [shape: f32[2,128,128], index: 14, kind: input, shape index: {}]
  %s15 = inlined_call_operand.vmem [shape: f32[2,1,128], index: 15, kind: input, shape index: {}]
  %s16 = inlined_call_operand.vmem [shape: f32[2,1,128], index: 16, kind: input, shape index: {}]
  %s17 = inlined_call_operand.vmem [shape: f32[2,1,128], index: 17, kind: input, shape index: {}]
  %s18 = inlined_call_operand.vmem [shape: f32[16,128], index: 18, kind: output, shape index: {}]
  %s19 = sld [smem:[#allocation0]]
  $region109: #{encoder_forward_pallas.1} parent=0
    _
  %s21 = ssub.s32 1, %s19
  %s22 = scalar_select 0, %s21, %s19
  loop: start=0, step=1, limit=4
  $region2: #{encoder_forward_pallas.1} parent=0 // loop_pre_header
    _
  $region3: #{encoder_forward_pallas.1} parent=0 // loop_header
    %s24 = sphi 0, %s28
    %p25 = scmp.ge.s32.totalorder %s24, 4
    %s32 = sphi 0, %s32
    %s34 = sphi 0, %s32
    %s35 = sphi 0, %s34
    %s49 = sphi 0, %s35
    %s53 = sphi 0, %s53
    %s55 = sphi 0, %s53
    %s56 = sphi 0, %s55
    %s70 = sphi 0, %s56
    %s76 = sphi 0, %s78
    %s79 = sphi 0, %s76
    %s80 = sphi 0, %s79
    %s96 = sphi 0, %s80
    %s102 = sphi 0, %s104
    %s105 = sphi 0, %s102
    %s106 = sphi 0, %s105
    %s122 = sphi 0, %s106
    %s128 = sphi 0, %s130
    %s131 = sphi 0, %s128
    %s132 = sphi 0, %s131
    %s148 = sphi 0, %s132
    %s154 = sphi 0, %s156
    %s157 = sphi 0, %s154
    %s158 = sphi 0, %s157
    %s174 = sphi 0, %s158
    %s180 = sphi 0, %s182
    %s183 = sphi 0, %s180
    %s184 = sphi 0, %s183
    %s200 = sphi 0, %s184
    %s206 = sphi 0, %s208
    %s209 = sphi 0, %s206
    %s210 = sphi 0, %s209
    %s226 = sphi 0, %s210
    %s232 = sphi 0, %s234
    %s235 = sphi 0, %s232
    %s236 = sphi 0, %s235
    %s252 = sphi 0, %s236
    %s258 = sphi 0, %s260
    %s261 = sphi 0, %s258
    %s262 = sphi 0, %s261
    %s278 = sphi 0, %s262
    %s284 = sphi 0, %s286
    %s287 = sphi 0, %s284
    %s288 = sphi 0, %s287
    %s304 = sphi 0, %s288
    %s310 = sphi 0, %s312
    %s313 = sphi 0, %s310
    %s314 = sphi 0, %s313
    %s330 = sphi 0, %s314
    %s336 = sphi 0, %s338
    %s339 = sphi 0, %s336
    %s340 = sphi 0, %s339
    %s356 = sphi 0, %s340
    %s362 = sphi 0, %s364
    %s365 = sphi 0, %s362
    %s366 = sphi 0, %s365
    %s382 = sphi 0, %s366
    %s388 = sphi 0, %s390
    %s391 = sphi 0, %s388
    %s392 = sphi 0, %s391
    %s408 = sphi 0, %s392
    %s414 = sphi 0, %s416
    %s417 = sphi 0, %s414
    %s418 = sphi 0, %s417
    %s434 = sphi 0, %s418
    %s440 = sphi 0, %s442
    %s443 = sphi 0, %s440
    %s444 = sphi 0, %s443
    %s460 = sphi 0, %s444
    %s466 = sphi 0, %s468
    %s469 = sphi 0, %s466
    %s470 = sphi 0, %s469
    %s486 = sphi 0, %s470
    %s490 = sphi 0, %s490
    %s492 = sphi 0, %s490
    %s493 = sphi 0, %s492
    %s507 = sphi 0, %s493
  $region4: #{encoder_forward_pallas.1} parent=0 // loop_header_branch
    %27 = sbr.rel (%p25) target = $region8
  $region5: #{encoder_forward_pallas.1} parent=0 // loop_body
    %s29 = ssub.s32 %s24, 1
    %s30 = ssub.s32 %s24, 2
    %s31 = sadd.s32 %s24, 1
    %s33 = sadd.s32 %s32, 1
    %p36 = scmp.eq.s32.totalorder %s24, 1
    %p37 = scmp.ne.s32.totalorder %s32, %s34
    %p38 = scmp.eq.s32.totalorder %s24, 0
    %p39 = por %p37, %p38
    %p40 = scmp.ne.s32.totalorder %s32, %s34
    %p41 = scmp.eq.s32.totalorder %s29, 1
    %p42 = por %p40, %p41
    %p43 = scmp.ne.s32.totalorder %s34, %s35
    %p44 = scmp.eq.s32.totalorder %s29, 0
    %p45 = por %p43, %p44
    %p46 = scmp.ne.s32.totalorder %s34, %s35
    %p47 = scmp.eq.s32.totalorder %s30, 1
    %p48 = por %p46, %p47
    %p50 = scmp.ne.s32.totalorder %s35, %s49
    %p51 = scmp.eq.s32.totalorder %s30, 0
    %p52 = por %p50, %p51
    %s54 = sadd.s32 %s53, 1
    %p57 = scmp.eq.s32.totalorder %s24, 1
    %p58 = scmp.ne.s32.totalorder %s53, %s55
    %p59 = scmp.eq.s32.totalorder %s24, 0
    %p60 = por %p58, %p59
    %p61 = scmp.ne.s32.totalorder %s53, %s55
    %p62 = scmp.eq.s32.totalorder %s29, 1
    %p63 = por %p61, %p62
    %p64 = scmp.ne.s32.totalorder %s55, %s56
    %p65 = scmp.eq.s32.totalorder %s29, 0
    %p66 = por %p64, %p65
    %p67 = scmp.ne.s32.totalorder %s55, %s56
    %p68 = scmp.eq.s32.totalorder %s30, 1
    %p69 = por %p67, %p68
    %p71 = scmp.ne.s32.totalorder %s56, %s70
    %p72 = scmp.eq.s32.totalorder %s30, 0
    %p73 = por %p71, %p72
    %s74 = ssub.s32 %s24, %s31
    %p75 = scmp.eq.s32.totalorder %s74, 0
    %s77 = sadd.s32 %s76, 1
    %s78 = scalar_select %p75, %s76, %s77
    %p81 = pneg %p75
    %p82 = scmp.eq.s32.totalorder %s24, 1
    %p83 = por %p81, %p82
    %p84 = scmp.ne.s32.totalorder %s76, %s79
    %p85 = scmp.eq.s32.totalorder %s24, 0
    %p86 = por %p84, %p85
    %p87 = scmp.ne.s32.totalorder %s76, %s79
    %p88 = scmp.eq.s32.totalorder %s29, 1
    %p89 = por %p87, %p88
    %p90 = scmp.ne.s32.totalorder %s79, %s80
    %p91 = scmp.eq.s32.totalorder %s29, 0
    %p92 = por %p90, %p91
    %p93 = scmp.ne.s32.totalorder %s79, %s80
    %p94 = scmp.eq.s32.totalorder %s30, 1
    %p95 = por %p93, %p94
    %p97 = scmp.ne.s32.totalorder %s80, %s96
    %p98 = scmp.eq.s32.totalorder %s30, 0
    %p99 = por %p97, %p98
    %s100 = ssub.s32 %s24, %s31
    %p101 = scmp.eq.s32.totalorder %s100, 0
    %s103 = sadd.s32 %s102, 1
    %s104 = scalar_select %p101, %s102, %s103
    %p107 = pneg %p101
    %p108 = scmp.eq.s32.totalorder %s24, 1
    %p109 = por %p107, %p108
    %p110 = scmp.ne.s32.totalorder %s102, %s105
    %p111 = scmp.eq.s32.totalorder %s24, 0
    %p112 = por %p110, %p111
    %p113 = scmp.ne.s32.totalorder %s102, %s105
    %p114 = scmp.eq.s32.totalorder %s29, 1
    %p115 = por %p113, %p114
    %p116 = scmp.ne.s32.totalorder %s105, %s106
    %p117 = scmp.eq.s32.totalorder %s29, 0
    %p118 = por %p116, %p117
    %p119 = scmp.ne.s32.totalorder %s105, %s106
    %p120 = scmp.eq.s32.totalorder %s30, 1
    %p121 = por %p119, %p120
    %p123 = scmp.ne.s32.totalorder %s106, %s122
    %p124 = scmp.eq.s32.totalorder %s30, 0
    %p125 = por %p123, %p124
    %s126 = ssub.s32 %s24, %s31
    %p127 = scmp.eq.s32.totalorder %s126, 0
    %s129 = sadd.s32 %s128, 1
    %s130 = scalar_select %p127, %s128, %s129
    %p133 = pneg %p127
    %p134 = scmp.eq.s32.totalorder %s24, 1
    %p135 = por %p133, %p134
    %p136 = scmp.ne.s32.totalorder %s128, %s131
    %p137 = scmp.eq.s32.totalorder %s24, 0
    %p138 = por %p136, %p137
    %p139 = scmp.ne.s32.totalorder %s128, %s131
    %p140 = scmp.eq.s32.totalorder %s29, 1
    %p141 = por %p139, %p140
    %p142 = scmp.ne.s32.totalorder %s131, %s132
    %p143 = scmp.eq.s32.totalorder %s29, 0
    %p144 = por %p142, %p143
    %p145 = scmp.ne.s32.totalorder %s131, %s132
    %p146 = scmp.eq.s32.totalorder %s30, 1
    %p147 = por %p145, %p146
    %p149 = scmp.ne.s32.totalorder %s132, %s148
    %p150 = scmp.eq.s32.totalorder %s30, 0
    %p151 = por %p149, %p150
    %s152 = ssub.s32 %s24, %s31
    %p153 = scmp.eq.s32.totalorder %s152, 0
    %s155 = sadd.s32 %s154, 1
    %s156 = scalar_select %p153, %s154, %s155
    %p159 = pneg %p153
    %p160 = scmp.eq.s32.totalorder %s24, 1
    %p161 = por %p159, %p160
    %p162 = scmp.ne.s32.totalorder %s154, %s157
    %p163 = scmp.eq.s32.totalorder %s24, 0
    %p164 = por %p162, %p163
    %p165 = scmp.ne.s32.totalorder %s154, %s157
    %p166 = scmp.eq.s32.totalorder %s29, 1
    %p167 = por %p165, %p166
    %p168 = scmp.ne.s32.totalorder %s157, %s158
    %p169 = scmp.eq.s32.totalorder %s29, 0
    %p170 = por %p168, %p169
    %p171 = scmp.ne.s32.totalorder %s157, %s158
    %p172 = scmp.eq.s32.totalorder %s30, 1
    %p173 = por %p171, %p172
    %p175 = scmp.ne.s32.totalorder %s158, %s174
    %p176 = scmp.eq.s32.totalorder %s30, 0
    %p177 = por %p175, %p176
    %s178 = ssub.s32 %s24, %s31
    %p179 = scmp.eq.s32.totalorder %s178, 0
    %s181 = sadd.s32 %s180, 1
    %s182 = scalar_select %p179, %s180, %s181
    %p185 = pneg %p179
    %p186 = scmp.eq.s32.totalorder %s24, 1
    %p187 = por %p185, %p186
    %p188 = scmp.ne.s32.totalorder %s180, %s183
    %p189 = scmp.eq.s32.totalorder %s24, 0
    %p190 = por %p188, %p189
    %p191 = scmp.ne.s32.totalorder %s180, %s183
    %p192 = scmp.eq.s32.totalorder %s29, 1
    %p193 = por %p191, %p192
    %p194 = scmp.ne.s32.totalorder %s183, %s184
    %p195 = scmp.eq.s32.totalorder %s29, 0
    %p196 = por %p194, %p195
    %p197 = scmp.ne.s32.totalorder %s183, %s184
    %p198 = scmp.eq.s32.totalorder %s30, 1
    %p199 = por %p197, %p198
    %p201 = scmp.ne.s32.totalorder %s184, %s200
    %p202 = scmp.eq.s32.totalorder %s30, 0
    %p203 = por %p201, %p202
    %s204 = ssub.s32 %s24, %s31
    %p205 = scmp.eq.s32.totalorder %s204, 0
    %s207 = sadd.s32 %s206, 1
    %s208 = scalar_select %p205, %s206, %s207
    %p211 = pneg %p205
    %p212 = scmp.eq.s32.totalorder %s24, 1
    %p213 = por %p211, %p212
    %p214 = scmp.ne.s32.totalorder %s206, %s209
    %p215 = scmp.eq.s32.totalorder %s24, 0
    %p216 = por %p214, %p215
    %p217 = scmp.ne.s32.totalorder %s206, %s209
    %p218 = scmp.eq.s32.totalorder %s29, 1
    %p219 = por %p217, %p218
    %p220 = scmp.ne.s32.totalorder %s209, %s210
    %p221 = scmp.eq.s32.totalorder %s29, 0
    %p222 = por %p220, %p221
    %p223 = scmp.ne.s32.totalorder %s209, %s210
    %p224 = scmp.eq.s32.totalorder %s30, 1
    %p225 = por %p223, %p224
    %p227 = scmp.ne.s32.totalorder %s210, %s226
    %p228 = scmp.eq.s32.totalorder %s30, 0
    %p229 = por %p227, %p228
    %s230 = ssub.s32 %s24, %s31
    %p231 = scmp.eq.s32.totalorder %s230, 0
    %s233 = sadd.s32 %s232, 1
    %s234 = scalar_select %p231, %s232, %s233
    %p237 = pneg %p231
    %p238 = scmp.eq.s32.totalorder %s24, 1
    %p239 = por %p237, %p238
    %p240 = scmp.ne.s32.totalorder %s232, %s235
    %p241 = scmp.eq.s32.totalorder %s24, 0
    %p242 = por %p240, %p241
    %p243 = scmp.ne.s32.totalorder %s232, %s235
    %p244 = scmp.eq.s32.totalorder %s29, 1
    %p245 = por %p243, %p244
    %p246 = scmp.ne.s32.totalorder %s235, %s236
    %p247 = scmp.eq.s32.totalorder %s29, 0
    %p248 = por %p246, %p247
    %p249 = scmp.ne.s32.totalorder %s235, %s236
    %p250 = scmp.eq.s32.totalorder %s30, 1
    %p251 = por %p249, %p250
    %p253 = scmp.ne.s32.totalorder %s236, %s252
    %p254 = scmp.eq.s32.totalorder %s30, 0
    %p255 = por %p253, %p254
    %s256 = ssub.s32 %s24, %s31
    %p257 = scmp.eq.s32.totalorder %s256, 0
    %s259 = sadd.s32 %s258, 1
    %s260 = scalar_select %p257, %s258, %s259
    %p263 = pneg %p257
    %p264 = scmp.eq.s32.totalorder %s24, 1
    %p265 = por %p263, %p264
    %p266 = scmp.ne.s32.totalorder %s258, %s261
    %p267 = scmp.eq.s32.totalorder %s24, 0
    %p268 = por %p266, %p267
    %p269 = scmp.ne.s32.totalorder %s258, %s261
    %p270 = scmp.eq.s32.totalorder %s29, 1
    %p271 = por %p269, %p270
    %p272 = scmp.ne.s32.totalorder %s261, %s262
    %p273 = scmp.eq.s32.totalorder %s29, 0
    %p274 = por %p272, %p273
    %p275 = scmp.ne.s32.totalorder %s261, %s262
    %p276 = scmp.eq.s32.totalorder %s30, 1
    %p277 = por %p275, %p276
    %p279 = scmp.ne.s32.totalorder %s262, %s278
    %p280 = scmp.eq.s32.totalorder %s30, 0
    %p281 = por %p279, %p280
    %s282 = ssub.s32 %s24, %s31
    %p283 = scmp.eq.s32.totalorder %s282, 0
    %s285 = sadd.s32 %s284, 1
    %s286 = scalar_select %p283, %s284, %s285
    %p289 = pneg %p283
    %p290 = scmp.eq.s32.totalorder %s24, 1
    %p291 = por %p289, %p290
    %p292 = scmp.ne.s32.totalorder %s284, %s287
    %p293 = scmp.eq.s32.totalorder %s24, 0
    %p294 = por %p292, %p293
    %p295 = scmp.ne.s32.totalorder %s284, %s287
    %p296 = scmp.eq.s32.totalorder %s29, 1
    %p297 = por %p295, %p296
    %p298 = scmp.ne.s32.totalorder %s287, %s288
    %p299 = scmp.eq.s32.totalorder %s29, 0
    %p300 = por %p298, %p299
    %p301 = scmp.ne.s32.totalorder %s287, %s288
    %p302 = scmp.eq.s32.totalorder %s30, 1
    %p303 = por %p301, %p302
    %p305 = scmp.ne.s32.totalorder %s288, %s304
    %p306 = scmp.eq.s32.totalorder %s30, 0
    %p307 = por %p305, %p306
    %s308 = ssub.s32 %s24, %s31
    %p309 = scmp.eq.s32.totalorder %s308, 0
    %s311 = sadd.s32 %s310, 1
    %s312 = scalar_select %p309, %s310, %s311
    %p315 = pneg %p309
    %p316 = scmp.eq.s32.totalorder %s24, 1
    %p317 = por %p315, %p316
    %p318 = scmp.ne.s32.totalorder %s310, %s313
    %p319 = scmp.eq.s32.totalorder %s24, 0
    %p320 = por %p318, %p319
    %p321 = scmp.ne.s32.totalorder %s310, %s313
    %p322 = scmp.eq.s32.totalorder %s29, 1
    %p323 = por %p321, %p322
    %p324 = scmp.ne.s32.totalorder %s313, %s314
    %p325 = scmp.eq.s32.totalorder %s29, 0
    %p326 = por %p324, %p325
    %p327 = scmp.ne.s32.totalorder %s313, %s314
    %p328 = scmp.eq.s32.totalorder %s30, 1
    %p329 = por %p327, %p328
    %p331 = scmp.ne.s32.totalorder %s314, %s330
    %p332 = scmp.eq.s32.totalorder %s30, 0
    %p333 = por %p331, %p332
    %s334 = ssub.s32 %s24, %s31
    %p335 = scmp.eq.s32.totalorder %s334, 0
    %s337 = sadd.s32 %s336, 1
    %s338 = scalar_select %p335, %s336, %s337
    %p341 = pneg %p335
    %p342 = scmp.eq.s32.totalorder %s24, 1
    %p343 = por %p341, %p342
    %p344 = scmp.ne.s32.totalorder %s336, %s339
    %p345 = scmp.eq.s32.totalorder %s24, 0
    %p346 = por %p344, %p345
    %p347 = scmp.ne.s32.totalorder %s336, %s339
    %p348 = scmp.eq.s32.totalorder %s29, 1
    %p349 = por %p347, %p348
    %p350 = scmp.ne.s32.totalorder %s339, %s340
    %p351 = scmp.eq.s32.totalorder %s29, 0
    %p352 = por %p350, %p351
    %p353 = scmp.ne.s32.totalorder %s339, %s340
    %p354 = scmp.eq.s32.totalorder %s30, 1
    %p355 = por %p353, %p354
    %p357 = scmp.ne.s32.totalorder %s340, %s356
    %p358 = scmp.eq.s32.totalorder %s30, 0
    %p359 = por %p357, %p358
    %s360 = ssub.s32 %s24, %s31
    %p361 = scmp.eq.s32.totalorder %s360, 0
    %s363 = sadd.s32 %s362, 1
    %s364 = scalar_select %p361, %s362, %s363
    %p367 = pneg %p361
    %p368 = scmp.eq.s32.totalorder %s24, 1
    %p369 = por %p367, %p368
    %p370 = scmp.ne.s32.totalorder %s362, %s365
    %p371 = scmp.eq.s32.totalorder %s24, 0
    %p372 = por %p370, %p371
    %p373 = scmp.ne.s32.totalorder %s362, %s365
    %p374 = scmp.eq.s32.totalorder %s29, 1
    %p375 = por %p373, %p374
    %p376 = scmp.ne.s32.totalorder %s365, %s366
    %p377 = scmp.eq.s32.totalorder %s29, 0
    %p378 = por %p376, %p377
    %p379 = scmp.ne.s32.totalorder %s365, %s366
    %p380 = scmp.eq.s32.totalorder %s30, 1
    %p381 = por %p379, %p380
    %p383 = scmp.ne.s32.totalorder %s366, %s382
    %p384 = scmp.eq.s32.totalorder %s30, 0
    %p385 = por %p383, %p384
    %s386 = ssub.s32 %s24, %s31
    %p387 = scmp.eq.s32.totalorder %s386, 0
    %s389 = sadd.s32 %s388, 1
    %s390 = scalar_select %p387, %s388, %s389
    %p393 = pneg %p387
    %p394 = scmp.eq.s32.totalorder %s24, 1
    %p395 = por %p393, %p394
    %p396 = scmp.ne.s32.totalorder %s388, %s391
    %p397 = scmp.eq.s32.totalorder %s24, 0
    %p398 = por %p396, %p397
    %p399 = scmp.ne.s32.totalorder %s388, %s391
    %p400 = scmp.eq.s32.totalorder %s29, 1
    %p401 = por %p399, %p400
    %p402 = scmp.ne.s32.totalorder %s391, %s392
    %p403 = scmp.eq.s32.totalorder %s29, 0
    %p404 = por %p402, %p403
    %p405 = scmp.ne.s32.totalorder %s391, %s392
    %p406 = scmp.eq.s32.totalorder %s30, 1
    %p407 = por %p405, %p406
    %p409 = scmp.ne.s32.totalorder %s392, %s408
    %p410 = scmp.eq.s32.totalorder %s30, 0
    %p411 = por %p409, %p410
    %s412 = ssub.s32 %s24, %s31
    %p413 = scmp.eq.s32.totalorder %s412, 0
    %s415 = sadd.s32 %s414, 1
    %s416 = scalar_select %p413, %s414, %s415
    %p419 = pneg %p413
    %p420 = scmp.eq.s32.totalorder %s24, 1
    %p421 = por %p419, %p420
    %p422 = scmp.ne.s32.totalorder %s414, %s417
    %p423 = scmp.eq.s32.totalorder %s24, 0
    %p424 = por %p422, %p423
    %p425 = scmp.ne.s32.totalorder %s414, %s417
    %p426 = scmp.eq.s32.totalorder %s29, 1
    %p427 = por %p425, %p426
    %p428 = scmp.ne.s32.totalorder %s417, %s418
    %p429 = scmp.eq.s32.totalorder %s29, 0
    %p430 = por %p428, %p429
    %p431 = scmp.ne.s32.totalorder %s417, %s418
    %p432 = scmp.eq.s32.totalorder %s30, 1
    %p433 = por %p431, %p432
    %p435 = scmp.ne.s32.totalorder %s418, %s434
    %p436 = scmp.eq.s32.totalorder %s30, 0
    %p437 = por %p435, %p436
    %s438 = ssub.s32 %s24, %s31
    %p439 = scmp.eq.s32.totalorder %s438, 0
    %s441 = sadd.s32 %s440, 1
    %s442 = scalar_select %p439, %s440, %s441
    %p445 = pneg %p439
    %p446 = scmp.eq.s32.totalorder %s24, 1
    %p447 = por %p445, %p446
    %p448 = scmp.ne.s32.totalorder %s440, %s443
    %p449 = scmp.eq.s32.totalorder %s24, 0
    %p450 = por %p448, %p449
    %p451 = scmp.ne.s32.totalorder %s440, %s443
    %p452 = scmp.eq.s32.totalorder %s29, 1
    %p453 = por %p451, %p452
    %p454 = scmp.ne.s32.totalorder %s443, %s444
    %p455 = scmp.eq.s32.totalorder %s29, 0
    %p456 = por %p454, %p455
    %p457 = scmp.ne.s32.totalorder %s443, %s444
    %p458 = scmp.eq.s32.totalorder %s30, 1
    %p459 = por %p457, %p458
    %p461 = scmp.ne.s32.totalorder %s444, %s460
    %p462 = scmp.eq.s32.totalorder %s30, 0
    %p463 = por %p461, %p462
    %s464 = ssub.s32 %s24, %s31
    %p465 = scmp.eq.s32.totalorder %s464, 0
    %s467 = sadd.s32 %s466, 1
    %s468 = scalar_select %p465, %s466, %s467
    %p471 = pneg %p465
    %p472 = scmp.eq.s32.totalorder %s24, 1
    %p473 = por %p471, %p472
    %p474 = scmp.ne.s32.totalorder %s466, %s469
    %p475 = scmp.eq.s32.totalorder %s24, 0
    %p476 = por %p474, %p475
    %p477 = scmp.ne.s32.totalorder %s466, %s469
    %p478 = scmp.eq.s32.totalorder %s29, 1
    %p479 = por %p477, %p478
    %p480 = scmp.ne.s32.totalorder %s469, %s470
    %p481 = scmp.eq.s32.totalorder %s29, 0
    %p482 = por %p480, %p481
    %p483 = scmp.ne.s32.totalorder %s469, %s470
    %p484 = scmp.eq.s32.totalorder %s30, 1
    %p485 = por %p483, %p484
    %p487 = scmp.ne.s32.totalorder %s470, %s486
    %p488 = scmp.eq.s32.totalorder %s30, 0
    %p489 = por %p487, %p488
    %s491 = sadd.s32 %s490, 1
    %p494 = scmp.eq.s32.totalorder %s24, 1
    %p495 = scmp.ne.s32.totalorder %s490, %s492
    %p496 = scmp.eq.s32.totalorder %s24, 0
    %p497 = por %p495, %p496
    %p498 = scmp.ne.s32.totalorder %s490, %s492
    %p499 = scmp.eq.s32.totalorder %s29, 1
    %p500 = por %p498, %p499
    %p501 = scmp.ne.s32.totalorder %s492, %s493
    %p502 = scmp.eq.s32.totalorder %s29, 0
    %p503 = por %p501, %p502
    %p504 = scmp.ne.s32.totalorder %s492, %s493
    %p505 = scmp.eq.s32.totalorder %s30, 1
    %p506 = por %p504, %p505
    %p508 = scmp.ne.s32.totalorder %s493, %s507
    %p509 = scmp.eq.s32.totalorder %s30, 0
    %p510 = por %p508, %p509
    %p511 = scmp.le.s32.totalorder 1, %s24
    %p512 = scmp.lt.s32.totalorder %s24, 3
    %p513 = pnand %p511, %p512
    %p514 = pneg %p513
    // Predicated region
    $region9: #{encoder_forward_pallas.1} parent=5 // pred_check
      _
    $region10: #{encoder_forward_pallas.1} parent=5 // pred_check_branch
      %516 = sbr.rel (%p513) target = $region12
    $region11: #{encoder_forward_pallas.1} parent=5 // pred_region
      %s517 = ssub.s32 %s24, 1
      // Predicated region
      $region13: #{encoder_forward_pallas.1} parent=11 // pred_check
        %p518 = pneg %p45
      $region14: #{encoder_forward_pallas.1} parent=11 // pred_check_branch
        %520 = sbr.rel (%p518) target = $region16
      $region15: #{encoder_forward_pallas.1} parent=11 // pred_region
        _
      $region16: #{encoder_forward_pallas.1} parent=11 // pred_fallthru
        _
      // Predicated region
      $region17: #{encoder_forward_pallas.1} parent=11 // pred_check
        %p521 = pneg %p66
      $region18: #{encoder_forward_pallas.1} parent=11 // pred_check_branch
        %523 = sbr.rel (%p521) target = $region20
      $region19: #{encoder_forward_pallas.1} parent=11 // pred_region
        _
      $region20: #{encoder_forward_pallas.1} parent=11 // pred_fallthru
        _
    $region12: #{encoder_forward_pallas.1} parent=5 // pred_fallthru
      _
    %p524 = scmp.lt.s32.totalorder %s24, 2
    // Predicated region
    $region21: #{encoder_forward_pallas.1} parent=5 // pred_check
      %p525 = pneg %p524
    $region22: #{encoder_forward_pallas.1} parent=5 // pred_check_branch
      %527 = sbr.rel (%p525) target = $region24
    $region23: #{encoder_forward_pallas.1} parent=5 // pred_region
      // Predicated region
      $region25: #{encoder_forward_pallas.1} parent=23 // pred_check
        %p528 = pneg %p86
      $region26: #{encoder_forward_pallas.1} parent=23 // pred_check_branch
        %530 = sbr.rel (%p528) target = $region28
      $region27: #{encoder_forward_pallas.1} parent=23 // pred_region
        %p531 = scmp.lt.s32.totalorder %s24, 1
        %s532 = scalar_select %p531, %s24, 1
        %s533 = smul.addr %s532, 16
        %s534 = smul.addr %s533, 8
        %s535 = scalar_lea.vmem %s2, %s534
      $region28: #{encoder_forward_pallas.1} parent=23 // pred_fallthru
        _
      // Predicated region
      $region29: #{encoder_forward_pallas.1} parent=23 // pred_check
        %p536 = pneg %p112
      $region30: #{encoder_forward_pallas.1} parent=23 // pred_check_branch
        %538 = sbr.rel (%p536) target = $region32
      $region31: #{encoder_forward_pallas.1} parent=23 // pred_region
        %p539 = scmp.lt.s32.totalorder %s24, 1
        %s540 = scalar_select %p539, %s24, 1
        %s541 = scalar_lea.vmem %s3, %s540
      $region32: #{encoder_forward_pallas.1} parent=23 // pred_fallthru
        _
      // Predicated region
      $region33: #{encoder_forward_pallas.1} parent=23 // pred_check
        %p542 = pneg %p138
      $region34: #{encoder_forward_pallas.1} parent=23 // pred_check_branch
        %544 = sbr.rel (%p542) target = $region36
      $region35: #{encoder_forward_pallas.1} parent=23 // pred_region
        %p545 = scmp.lt.s32.totalorder %s24, 1
        %s546 = scalar_select %p545, %s24, 1
        %s547 = smul.addr %s546, 16
        %s548 = smul.addr %s547, 8
        %s549 = scalar_lea.vmem %s4, %s548
      $region36: #{encoder_forward_pallas.1} parent=23 // pred_fallthru
        _
      // Predicated region
      $region37: #{encoder_forward_pallas.1} parent=23 // pred_check
        %p550 = pneg %p164
      $region38: #{encoder_forward_pallas.1} parent=23 // pred_check_branch
        %552 = sbr.rel (%p550) target = $region40
      $region39: #{encoder_forward_pallas.1} parent=23 // pred_region
        %p553 = scmp.lt.s32.totalorder %s24, 1
        %s554 = scalar_select %p553, %s24, 1
        %s555 = scalar_lea.vmem %s5, %s554
      $region40: #{encoder_forward_pallas.1} parent=23 // pred_fallthru
        _
      // Predicated region
      $region41: #{encoder_forward_pallas.1} parent=23 // pred_check
        %p556 = pneg %p190
      $region42: #{encoder_forward_pallas.1} parent=23 // pred_check_branch
        %558 = sbr.rel (%p556) target = $region44
      $region43: #{encoder_forward_pallas.1} parent=23 // pred_region
        %p559 = scmp.lt.s32.totalorder %s24, 1
        %s560 = scalar_select %p559, %s24, 1
        %s561 = smul.addr %s560, 16
        %s562 = smul.addr %s561, 8
        %s563 = scalar_lea.vmem %s6, %s562
      $region44: #{encoder_forward_pallas.1} parent=23 // pred_fallthru
        _
      // Predicated region
      $region45: #{encoder_forward_pallas.1} parent=23 // pred_check
        %p564 = pneg %p216
      $region46: #{encoder_forward_pallas.1} parent=23 // pred_check_branch
        %566 = sbr.rel (%p564) target = $region48
      $region47: #{encoder_forward_pallas.1} parent=23 // pred_region
        %p567 = scmp.lt.s32.totalorder %s24, 1
        %s568 = scalar_select %p567, %s24, 1
        %s569 = scalar_lea.vmem %s7, %s568
      $region48: #{encoder_forward_pallas.1} parent=23 // pred_fallthru
        _
      // Predicated region
      $region49: #{encoder_forward_pallas.1} parent=23 // pred_check
        %p570 = pneg %p242
      $region50: #{encoder_forward_pallas.1} parent=23 // pred_check_branch
        %572 = sbr.rel (%p570) target = $region52
      $region51: #{encoder_forward_pallas.1} parent=23 // pred_region
        %p573 = scmp.lt.s32.totalorder %s24, 1
        %s574 = scalar_select %p573, %s24, 1
        %s575 = smul.addr %s574, 16
        %s576 = smul.addr %s575, 8
        %s577 = scalar_lea.vmem %s8, %s576
      $region52: #{encoder_forward_pallas.1} parent=23 // pred_fallthru
        _
      // Predicated region
      $region53: #{encoder_forward_pallas.1} parent=23 // pred_check
        %p578 = pneg %p268
      $region54: #{encoder_forward_pallas.1} parent=23 // pred_check_branch
        %580 = sbr.rel (%p578) target = $region56
      $region55: #{encoder_forward_pallas.1} parent=23 // pred_region
        %p581 = scmp.lt.s32.totalorder %s24, 1
        %s582 = scalar_select %p581, %s24, 1
        %s583 = scalar_lea.vmem %s9, %s582
      $region56: #{encoder_forward_pallas.1} parent=23 // pred_fallthru
        _
      // Predicated region
      $region57: #{encoder_forward_pallas.1} parent=23 // pred_check
        %p584 = pneg %p294
      $region58: #{encoder_forward_pallas.1} parent=23 // pred_check_branch
        %586 = sbr.rel (%p584) target = $region60
      $region59: #{encoder_forward_pallas.1} parent=23 // pred_region
        %p587 = scmp.lt.s32.totalorder %s24, 1
        %s588 = scalar_select %p587, %s24, 1
        %s589 = scalar_lea.vmem %s10, %s588
      $region60: #{encoder_forward_pallas.1} parent=23 // pred_fallthru
        _
      // Predicated region
      $region61: #{encoder_forward_pallas.1} parent=23 // pred_check
        %p590 = pneg %p320
      $region62: #{encoder_forward_pallas.1} parent=23 // pred_check_branch
        %592 = sbr.rel (%p590) target = $region64
      $region63: #{encoder_forward_pallas.1} parent=23 // pred_region
        %p593 = scmp.lt.s32.totalorder %s24, 1
        %s594 = scalar_select %p593, %s24, 1
        %s595 = scalar_lea.vmem %s11, %s594
      $region64: #{encoder_forward_pallas.1} parent=23 // pred_fallthru
        _
      // Predicated region
      $region65: #{encoder_forward_pallas.1} parent=23 // pred_check
        %p596 = pneg %p346
      $region66: #{encoder_forward_pallas.1} parent=23 // pred_check_branch
        %598 = sbr.rel (%p596) target = $region68
      $region67: #{encoder_forward_pallas.1} parent=23 // pred_region
        %p599 = scmp.lt.s32.totalorder %s24, 1
        %s600 = scalar_select %p599, %s24, 1
        %s601 = smul.addr %s600, 16
        %s602 = smul.addr %s601, 8
        %s603 = scalar_lea.vmem %s12, %s602
      $region68: #{encoder_forward_pallas.1} parent=23 // pred_fallthru
        _
      // Predicated region
      $region69: #{encoder_forward_pallas.1} parent=23 // pred_check
        %p604 = pneg %p372
      $region70: #{encoder_forward_pallas.1} parent=23 // pred_check_branch
        %606 = sbr.rel (%p604) target = $region72
      $region71: #{encoder_forward_pallas.1} parent=23 // pred_region
        %p607 = scmp.lt.s32.totalorder %s24, 1
        %s608 = scalar_select %p607, %s24, 1
        %s609 = scalar_lea.vmem %s13, %s608
      $region72: #{encoder_forward_pallas.1} parent=23 // pred_fallthru
        _
      // Predicated region
      $region73: #{encoder_forward_pallas.1} parent=23 // pred_check
        %p610 = pneg %p398
      $region74: #{encoder_forward_pallas.1} parent=23 // pred_check_branch
        %612 = sbr.rel (%p610) target = $region76
      $region75: #{encoder_forward_pallas.1} parent=23 // pred_region
        %p613 = scmp.lt.s32.totalorder %s24, 1
        %s614 = scalar_select %p613, %s24, 1
        %s615 = smul.addr %s614, 16
        %s616 = smul.addr %s615, 8
        %s617 = scalar_lea.vmem %s14, %s616
      $region76: #{encoder_forward_pallas.1} parent=23 // pred_fallthru
        _
      // Predicated region
      $region77: #{encoder_forward_pallas.1} parent=23 // pred_check
        %p618 = pneg %p424
      $region78: #{encoder_forward_pallas.1} parent=23 // pred_check_branch
        %620 = sbr.rel (%p618) target = $region80
      $region79: #{encoder_forward_pallas.1} parent=23 // pred_region
        %p621 = scmp.lt.s32.totalorder %s24, 1
        %s622 = scalar_select %p621, %s24, 1
        %s623 = scalar_lea.vmem %s15, %s622
      $region80: #{encoder_forward_pallas.1} parent=23 // pred_fallthru
        _
      // Predicated region
      $region81: #{encoder_forward_pallas.1} parent=23 // pred_check
        %p624 = pneg %p450
      $region82: #{encoder_forward_pallas.1} parent=23 // pred_check_branch
        %626 = sbr.rel (%p624) target = $region84
      $region83: #{encoder_forward_pallas.1} parent=23 // pred_region
        %p627 = scmp.lt.s32.totalorder %s24, 1
        %s628 = scalar_select %p627, %s24, 1
        %s629 = scalar_lea.vmem %s16, %s628
      $region84: #{encoder_forward_pallas.1} parent=23 // pred_fallthru
        _
      // Predicated region
      $region85: #{encoder_forward_pallas.1} parent=23 // pred_check
        %p630 = pneg %p476
      $region86: #{encoder_forward_pallas.1} parent=23 // pred_check_branch
        %632 = sbr.rel (%p630) target = $region88
      $region87: #{encoder_forward_pallas.1} parent=23 // pred_region
        %p633 = scmp.lt.s32.totalorder %s24, 1
        %s634 = scalar_select %p633, %s24, 1
        %s635 = scalar_lea.vmem %s17, %s634
      $region88: #{encoder_forward_pallas.1} parent=23 // pred_fallthru
        _
    $region24: #{encoder_forward_pallas.1} parent=5 // pred_fallthru
      _
    %p636 = scmp.le.s32.totalorder 1, %s24
    %p637 = scmp.lt.s32.totalorder %s24, 3
    %p638 = pnand %p636, %p637
    %p639 = pneg %p638
    // Predicated region
    $region89: #{encoder_forward_pallas.1} parent=5 // pred_check
      _
    $region90: #{encoder_forward_pallas.1} parent=5 // pred_check_branch
      %641 = sbr.rel (%p638) target = $region92
    $region91: #{encoder_forward_pallas.1} parent=5 // pred_region
      %s642 = ssub.s32 %s24, 1
      %p643 = pneg %p45
      %p644 = pneg %p42
      %p645 = pneg %p66
      %p646 = pneg %p63
      %p647 = scmp.lt.s32.totalorder %s29, 1
      %s648 = scalar_select %p647, %s29, 1
      %s649 = smul.addr %s648, 16
      %s650 = smul.addr %s649, 8
      %s651 = scalar_lea.vmem %s2, %s650
      %p652 = pneg %p92
      %p653 = pneg %p89
      %p654 = scmp.lt.s32.totalorder %s29, 1
      %s655 = scalar_select %p654, %s29, 1
      %s656 = scalar_lea.vmem %s3, %s655
      %p657 = pneg %p118
      %p658 = pneg %p115
      %p659 = scmp.lt.s32.totalorder %s29, 1
      %s660 = scalar_select %p659, %s29, 1
      %s661 = smul.addr %s660, 16
      %s662 = smul.addr %s661, 8
      %s663 = scalar_lea.vmem %s4, %s662
      %p664 = pneg %p144
      %p665 = pneg %p141
      %p666 = scmp.lt.s32.totalorder %s29, 1
      %s667 = scalar_select %p666, %s29, 1
      %s668 = scalar_lea.vmem %s5, %s667
      %p669 = pneg %p170
      %p670 = pneg %p167
      %p671 = scmp.lt.s32.totalorder %s29, 1
      %s672 = scalar_select %p671, %s29, 1
      %s673 = smul.addr %s672, 16
      %s674 = smul.addr %s673, 8
      %s675 = scalar_lea.vmem %s6, %s674
      %p676 = pneg %p196
      %p677 = pneg %p193
      %p678 = scmp.lt.s32.totalorder %s29, 1
      %s679 = scalar_select %p678, %s29, 1
      %s680 = scalar_lea.vmem %s7, %s679
      %p681 = pneg %p222
      %p682 = pneg %p219
      %p683 = scmp.lt.s32.totalorder %s29, 1
      %s684 = scalar_select %p683, %s29, 1
      %s685 = smul.addr %s684, 16
      %s686 = smul.addr %s685, 8
      %s687 = scalar_lea.vmem %s8, %s686
      %p688 = pneg %p248
      %p689 = pneg %p245
      %p690 = scmp.lt.s32.totalorder %s29, 1
      %s691 = scalar_select %p690, %s29, 1
      %s692 = scalar_lea.vmem %s9, %s691
      %p693 = pneg %p274
      %p694 = pneg %p271
      %p695 = scmp.lt.s32.totalorder %s29, 1
      %s696 = scalar_select %p695, %s29, 1
      %s697 = scalar_lea.vmem %s10, %s696
      %p698 = pneg %p300
      %p699 = pneg %p297
      %p700 = scmp.lt.s32.totalorder %s29, 1
      %s701 = scalar_select %p700, %s29, 1
      %s702 = scalar_lea.vmem %s11, %s701
      %p703 = pneg %p326
      %p704 = pneg %p323
      %p705 = scmp.lt.s32.totalorder %s29, 1
      %s706 = scalar_select %p705, %s29, 1
      %s707 = smul.addr %s706, 16
      %s708 = smul.addr %s707, 8
      %s709 = scalar_lea.vmem %s12, %s708
      %p710 = pneg %p352
      %p711 = pneg %p349
      %p712 = scmp.lt.s32.totalorder %s29, 1
      %s713 = scalar_select %p712, %s29, 1
      %s714 = scalar_lea.vmem %s13, %s713
      %p715 = pneg %p378
      %p716 = pneg %p375
      %p717 = scmp.lt.s32.totalorder %s29, 1
      %s718 = scalar_select %p717, %s29, 1
      %s719 = smul.addr %s718, 16
      %s720 = smul.addr %s719, 8
      %s721 = scalar_lea.vmem %s14, %s720
      %p722 = pneg %p404
      %p723 = pneg %p401
      %p724 = scmp.lt.s32.totalorder %s29, 1
      %s725 = scalar_select %p724, %s29, 1
      %s726 = scalar_lea.vmem %s15, %s725
      %p727 = pneg %p430
      %p728 = pneg %p427
      %p729 = scmp.lt.s32.totalorder %s29, 1
      %s730 = scalar_select %p729, %s29, 1
      %s731 = scalar_lea.vmem %s16, %s730
      %p732 = pneg %p456
      %p733 = pneg %p453
      %p734 = scmp.lt.s32.totalorder %s29, 1
      %s735 = scalar_select %p734, %s29, 1
      %s736 = scalar_lea.vmem %s17, %s735
      %p737 = pneg %p482
      %p738 = pneg %p479
      %p739 = pneg %p503
      %p740 = pneg %p500
      %p741 = scmp.lt.s32.totalorder %s29, 1
      %s742 = scalar_select %p741, %s29, 1
      %s743 = smul.addr %s742, 16
      %s744 = smul.addr %s743, 8
      %s745 = scalar_lea.vmem %s2, %s744
      %p746 = scmp.lt.s32.totalorder %s29, 1
      %s747 = scalar_select %p746, %s29, 1
      %s748 = scalar_lea.vmem %s3, %s747
      %p749 = scmp.lt.s32.totalorder %s29, 1
      %s750 = scalar_select %p749, %s29, 1
      %s751 = smul.addr %s750, 16
      %s752 = smul.addr %s751, 8
      %s753 = scalar_lea.vmem %s4, %s752
      %p754 = scmp.lt.s32.totalorder %s29, 1
      %s755 = scalar_select %p754, %s29, 1
      %s756 = scalar_lea.vmem %s5, %s755
      %p757 = scmp.lt.s32.totalorder %s29, 1
      %s758 = scalar_select %p757, %s29, 1
      %s759 = smul.addr %s758, 16
      %s760 = smul.addr %s759, 8
      %s761 = scalar_lea.vmem %s6, %s760
      %p762 = scmp.lt.s32.totalorder %s29, 1
      %s763 = scalar_select %p762, %s29, 1
      %s764 = scalar_lea.vmem %s7, %s763
      %p765 = scmp.lt.s32.totalorder %s29, 1
      %s766 = scalar_select %p765, %s29, 1
      %s767 = smul.addr %s766, 16
      %s768 = smul.addr %s767, 8
      %s769 = scalar_lea.vmem %s8, %s768
      %p770 = scmp.lt.s32.totalorder %s29, 1
      %s771 = scalar_select %p770, %s29, 1
      %s772 = scalar_lea.vmem %s9, %s771
      %p773 = scmp.lt.s32.totalorder %s29, 1
      %s774 = scalar_select %p773, %s29, 1
      %s775 = scalar_lea.vmem %s10, %s774
      %p776 = scmp.lt.s32.totalorder %s29, 1
      %s777 = scalar_select %p776, %s29, 1
      %s778 = scalar_lea.vmem %s11, %s777
      %p779 = scmp.lt.s32.totalorder %s29, 1
      %s780 = scalar_select %p779, %s29, 1
      %s781 = smul.addr %s780, 16
      %s782 = smul.addr %s781, 8
      %s783 = scalar_lea.vmem %s12, %s782
      %p784 = scmp.lt.s32.totalorder %s29, 1
      %s785 = scalar_select %p784, %s29, 1
      %s786 = scalar_lea.vmem %s13, %s785
      %p787 = scmp.lt.s32.totalorder %s29, 1
      %s788 = scalar_select %p787, %s29, 1
      %s789 = smul.addr %s788, 16
      %s790 = smul.addr %s789, 8
      %s791 = scalar_lea.vmem %s14, %s790
      %p792 = scmp.lt.s32.totalorder %s29, 1
      %s793 = scalar_select %p792, %s29, 1
      %s794 = scalar_lea.vmem %s15, %s793
      %p795 = scmp.lt.s32.totalorder %s29, 1
      %s796 = scalar_select %p795, %s29, 1
      %s797 = scalar_lea.vmem %s16, %s796
      %p798 = scmp.lt.s32.totalorder %s29, 1
      %s799 = scalar_select %p798, %s29, 1
      %s800 = scalar_lea.vmem %s17, %s799
      %p801 = scmp.eq.s32.totalorder %s29, 0
      // Predicated region
      $region93: #{encoder_forward_pallas.1} parent=91 // pred_check
        %p802 = pneg %p801
      $region94: #{encoder_forward_pallas.1} parent=91 // pred_check_branch
        %804 = sbr.rel (%p802) target = $region96
      $region95: #{encoder_forward_pallas.1} parent=91 // pred_region
        %v805 = vld [vmem:[%s0] sm:$0xff]
        %v806 = vld [vmem:[%s0 + $0x8] sm:$0xff]
        %807 = vst [vmem:[%s18] sm:$0xff] %v805
        %808 = vst [vmem:[%s18 + $0x8] sm:$0xff] %v806
      $region96: #{encoder_forward_pallas.1} parent=91 // pred_fallthru
        _
      %v809 = vld [vmem:[%s18] sm:$0xff]
      %v810 = vld [vmem:[%s18 + $0x8] sm:$0xff]
      %v811 = vld [vmem:[%s745] sm:$0xff]
      %v812 = vld [vmem:[%s745 + $0x8] sm:$0xff]
      %v813 = vld [vmem:[%s745 + $0x10] sm:$0xff]
      %v814 = vld [vmem:[%s745 + $0x18] sm:$0xff]
      %v815 = vld [vmem:[%s745 + $0x20] sm:$0xff]
      %v816 = vld [vmem:[%s745 + $0x28] sm:$0xff]
      %v817 = vld [vmem:[%s745 + $0x30] sm:$0xff]
      %v818 = vld [vmem:[%s745 + $0x38] sm:$0xff]
      %v819 = vld [vmem:[%s745 + $0x40] sm:$0xff]
      %v820 = vld [vmem:[%s745 + $0x48] sm:$0xff]
      %v821 = vld [vmem:[%s745 + $0x50] sm:$0xff]
      %v822 = vld [vmem:[%s745 + $0x58] sm:$0xff]
      %v823 = vld [vmem:[%s745 + $0x60] sm:$0xff]
      %v824 = vld [vmem:[%s745 + $0x68] sm:$0xff]
      %v825 = vld [vmem:[%s745 + $0x70] sm:$0xff]
      %v826 = vld [vmem:[%s745 + $0x78] sm:$0xff]
      %v827 = vld [vmem:[%s748] sm:$0x1]
      %v829 = vlaneseq
      %v830 = vshrl.u32 %v829, 7
      %v831 = vsub.s32 0, %v830
      %v832 = vrot.slane %v827, %v831
      %834 = vmatprep.subr.mxu0 0.0
      %835 = vmatpush1.msra.mxu0 %v826
      %836 = vmatprep.subr.mxu0 0.0
      %837 = vmatpush1.msra.mxu0 %v825
      %838 = vmatprep.subr.mxu0 0.0
      %839 = vmatpush1.msra.mxu0 %v824
      %840 = vmatprep.subr.mxu0 0.0
      %841 = vmatpush1.msra.mxu0 %v823
      %842 = vmatprep.subr.mxu0 0.0
      %843 = vmatpush1.msra.mxu0 %v822
      %844 = vmatprep.subr.mxu0 0.0
      %845 = vmatpush1.msra.mxu0 %v821
      %846 = vmatprep.subr.mxu0 0.0
      %847 = vmatpush1.msra.mxu0 %v820
      %848 = vmatprep.subr.mxu0 0.0
      %849 = vmatpush1.msra.mxu0 %v819
      %850 = vmatprep.subr.mxu0 0.0
      %851 = vmatpush1.msra.mxu0 %v818
      %852 = vmatprep.subr.mxu0 0.0
      %853 = vmatpush1.msra.mxu0 %v817
      %854 = vmatprep.subr.mxu0 0.0
      %855 = vmatpush1.msra.mxu0 %v816
      %856 = vmatprep.subr.mxu0 0.0
      %857 = vmatpush1.msra.mxu0 %v815
      %858 = vmatprep.subr.mxu0 0.0
      %859 = vmatpush1.msra.mxu0 %v814
      %860 = vmatprep.subr.mxu0 0.0
      %861 = vmatpush1.msra.mxu0 %v813
      %862 = vmatprep.subr.mxu0 0.0
      %863 = vmatpush1.msra.mxu0 %v812
      %864 = vmatprep.subr.mxu0 0.0
      %865 = vmatpush1.msra.mxu0 %v811
      %866 = vmatprep.subr.mxu0 0.0
      %867 = vmatpush2.msra.mxu0 0.0
      %868 = vmatprep.subr.mxu0 0.0
      %869 = vmatpush2.msra.mxu0 0.0
      %870 = vmatprep.subr.mxu0 0.0
      %871 = vmatpush2.msra.mxu0 0.0
      %872 = vmatprep.subr.mxu0 0.0
      %873 = vmatpush2.msra.mxu0 0.0
      %874 = vmatprep.subr.mxu0 0.0
      %875 = vmatpush2.msra.mxu0 0.0
      %876 = vmatprep.subr.mxu0 0.0
      %877 = vmatpush2.msra.mxu0 0.0
      %878 = vmatprep.subr.mxu0 0.0
      %879 = vmatpush2.msra.mxu0 0.0
      %880 = vmatprep.subr.mxu0 0.0
      %881 = vmatpush2.msra.mxu0 0.0
      %882 = vmatprep.subr.mxu0 0.0
      %883 = vmatpush2.msra.mxu0 0.0
      %884 = vmatprep.subr.mxu0 0.0
      %885 = vmatpush2.msra.mxu0 0.0
      %886 = vmatprep.subr.mxu0 0.0
      %887 = vmatpush2.msra.mxu0 0.0
      %888 = vmatprep.subr.mxu0 0.0
      %889 = vmatpush2.msra.mxu0 0.0
      %890 = vmatprep.subr.mxu0 0.0
      %891 = vmatpush2.msra.mxu0 0.0
      %892 = vmatprep.subr.mxu0 0.0
      %893 = vmatpush2.msra.mxu0 0.0
      %894 = vmatprep.subr.mxu0 0.0
      %895 = vmatpush2.msra.mxu0 0.0
      %896 = vmatprep.subr.mxu0 0.0
      %897 = vmatpush2.msra.mxu0 0.0
      %898 = vmatprep.mubr.f32.mxu0 0.0
      %899 = vmatmul.mubr.f32.gmra.mxu0 %v809
      %v900 = vpop.f32.mrf.mxu0
      %v901 = vadd.f32 %v832, %v900
      %v902 = vpop.f32.mrf.mxu0
      %903 = vmatprep.mubr.f32.mxu0 0.0
      %904 = vmatmul.mubr.f32.gmra.mxu0 %v810
      %v905 = vpop.f32.mrf.mxu0
      %v906 = vadd.f32 %v832, %v905
      %v907 = vpop.f32.mrf.mxu0
      %908 = vdwg.mxu0
      %v909 = vmul.f32 %v901, 0.35355338
      %v910 = vmul.f32 %v906, 0.35355338
      %v911 = vld [vmem:[%s753] sm:$0xff]
      %v912 = vld [vmem:[%s753 + $0x8] sm:$0xff]
      %v913 = vld [vmem:[%s753 + $0x10] sm:$0xff]
      %v914 = vld [vmem:[%s753 + $0x18] sm:$0xff]
      %v915 = vld [vmem:[%s753 + $0x20] sm:$0xff]
      %v916 = vld [vmem:[%s753 + $0x28] sm:$0xff]
      %v917 = vld [vmem:[%s753 + $0x30] sm:$0xff]
      %v918 = vld [vmem:[%s753 + $0x38] sm:$0xff]
      %v919 = vld [vmem:[%s753 + $0x40] sm:$0xff]
      %v920 = vld [vmem:[%s753 + $0x48] sm:$0xff]
      %v921 = vld [vmem:[%s753 + $0x50] sm:$0xff]
      %v922 = vld [vmem:[%s753 + $0x58] sm:$0xff]
      %v923 = vld [vmem:[%s753 + $0x60] sm:$0xff]
      %v924 = vld [vmem:[%s753 + $0x68] sm:$0xff]
      %v925 = vld [vmem:[%s753 + $0x70] sm:$0xff]
      %v926 = vld [vmem:[%s753 + $0x78] sm:$0xff]
      %v927 = vld [vmem:[%s756] sm:$0x1]
      %v929 = vlaneseq
      %v930 = vshrl.u32 %v929, 7
      %v931 = vsub.s32 0, %v930
      %v932 = vrot.slane %v927, %v931
      %934 = vmatprep.subr.mxu0 0.0
      %935 = vmatpush1.msra.mxu0 %v926
      %936 = vmatprep.subr.mxu0 0.0
      %937 = vmatpush1.msra.mxu0 %v925
      %938 = vmatprep.subr.mxu0 0.0
      %939 = vmatpush1.msra.mxu0 %v924
      %940 = vmatprep.subr.mxu0 0.0
      %941 = vmatpush1.msra.mxu0 %v923
      %942 = vmatprep.subr.mxu0 0.0
      %943 = vmatpush1.msra.mxu0 %v922
      %944 = vmatprep.subr.mxu0 0.0
      %945 = vmatpush1.msra.mxu0 %v921
      %946 = vmatprep.subr.mxu0 0.0
      %947 = vmatpush1.msra.mxu0 %v920
      %948 = vmatprep.subr.mxu0 0.0
      %949 = vmatpush1.msra.mxu0 %v919
      %950 = vmatprep.subr.mxu0 0.0
      %951 = vmatpush1.msra.mxu0 %v918
      %952 = vmatprep.subr.mxu0 0.0
      %953 = vmatpush1.msra.mxu0 %v917
      %954 = vmatprep.subr.mxu0 0.0
      %955 = vmatpush1.msra.mxu0 %v916
      %956 = vmatprep.subr.mxu0 0.0
      %957 = vmatpush1.msra.mxu0 %v915
      %958 = vmatprep.subr.mxu0 0.0
      %959 = vmatpush1.msra.mxu0 %v914
      %960 = vmatprep.subr.mxu0 0.0
      %961 = vmatpush1.msra.mxu0 %v913
      %962 = vmatprep.subr.mxu0 0.0
      %963 = vmatpush1.msra.mxu0 %v912
      %964 = vmatprep.subr.mxu0 0.0
      %965 = vmatpush1.msra.mxu0 %v911
      %966 = vmatprep.subr.mxu0 0.0
      %967 = vmatpush2.msra.mxu0 0.0
      %968 = vmatprep.subr.mxu0 0.0
      %969 = vmatpush2.msra.mxu0 0.0
      %970 = vmatprep.subr.mxu0 0.0
      %971 = vmatpush2.msra.mxu0 0.0
      %972 = vmatprep.subr.mxu0 0.0
      %973 = vmatpush2.msra.mxu0 0.0
      %974 = vmatprep.subr.mxu0 0.0
      %975 = vmatpush2.msra.mxu0 0.0
      %976 = vmatprep.subr.mxu0 0.0
      %977 = vmatpush2.msra.mxu0 0.0
      %978 = vmatprep.subr.mxu0 0.0
      %979 = vmatpush2.msra.mxu0 0.0
      %980 = vmatprep.subr.mxu0 0.0
      %981 = vmatpush2.msra.mxu0 0.0
      %982 = vmatprep.subr.mxu0 0.0
      %983 = vmatpush2.msra.mxu0 0.0
      %984 = vmatprep.subr.mxu0 0.0
      %985 = vmatpush2.msra.mxu0 0.0
      %986 = vmatprep.subr.mxu0 0.0
      %987 = vmatpush2.msra.mxu0 0.0
      %988 = vmatprep.subr.mxu0 0.0
      %989 = vmatpush2.msra.mxu0 0.0
      %990 = vmatprep.subr.mxu0 0.0
      %991 = vmatpush2.msra.mxu0 0.0
      %992 = vmatprep.subr.mxu0 0.0
      %993 = vmatpush2.msra.mxu0 0.0
      %994 = vmatprep.subr.mxu0 0.0
      %995 = vmatpush2.msra.mxu0 0.0
      %996 = vmatprep.subr.mxu0 0.0
      %997 = vmatpush2.msra.mxu0 0.0
      %998 = vmatprep.mubr.f32.mxu0 0.0
      %999 = vmatmul.mubr.f32.gmra.mxu0 %v809
      %v1000 = vpop.f32.mrf.mxu0
      %v1001 = vadd.f32 %v932, %v1000
      %v1002 = vpop.f32.mrf.mxu0
      %1003 = vmatprep.mubr.f32.mxu0 0.0
      %1004 = vmatmul.mubr.f32.gmra.mxu0 %v810
      %v1005 = vpop.f32.mrf.mxu0
      %v1006 = vadd.f32 %v932, %v1005
      %v1007 = vpop.f32.mrf.mxu0
      %1008 = vdwg.mxu0
      %v1009 = vld [vmem:[%s761] sm:$0xff]
      %v1010 = vld [vmem:[%s761 + $0x8] sm:$0xff]
      %v1011 = vld [vmem:[%s761 + $0x10] sm:$0xff]
      %v1012 = vld [vmem:[%s761 + $0x18] sm:$0xff]
      %v1013 = vld [vmem:[%s761 + $0x20] sm:$0xff]
      %v1014 = vld [vmem:[%s761 + $0x28] sm:$0xff]
      %v1015 = vld [vmem:[%s761 + $0x30] sm:$0xff]
      %v1016 = vld [vmem:[%s761 + $0x38] sm:$0xff]
      %v1017 = vld [vmem:[%s761 + $0x40] sm:$0xff]
      %v1018 = vld [vmem:[%s761 + $0x48] sm:$0xff]
      %v1019 = vld [vmem:[%s761 + $0x50] sm:$0xff]
      %v1020 = vld [vmem:[%s761 + $0x58] sm:$0xff]
      %v1021 = vld [vmem:[%s761 + $0x60] sm:$0xff]
      %v1022 = vld [vmem:[%s761 + $0x68] sm:$0xff]
      %v1023 = vld [vmem:[%s761 + $0x70] sm:$0xff]
      %v1024 = vld [vmem:[%s761 + $0x78] sm:$0xff]
      %v1025 = vld [vmem:[%s764] sm:$0x1]
      %v1027 = vlaneseq
      %v1028 = vshrl.u32 %v1027, 7
      %v1029 = vsub.s32 0, %v1028
      %v1030 = vrot.slane %v1025, %v1029
      %1032 = vmatprep.subr.mxu0 0.0
      %1033 = vmatpush1.msra.mxu0 %v1024
      %1034 = vmatprep.subr.mxu0 0.0
      %1035 = vmatpush1.msra.mxu0 %v1023
      %1036 = vmatprep.subr.mxu0 0.0
      %1037 = vmatpush1.msra.mxu0 %v1022
      %1038 = vmatprep.subr.mxu0 0.0
      %1039 = vmatpush1.msra.mxu0 %v1021
      %1040 = vmatprep.subr.mxu0 0.0
      %1041 = vmatpush1.msra.mxu0 %v1020
      %1042 = vmatprep.subr.mxu0 0.0
      %1043 = vmatpush1.msra.mxu0 %v1019
      %1044 = vmatprep.subr.mxu0 0.0
      %1045 = vmatpush1.msra.mxu0 %v1018
      %1046 = vmatprep.subr.mxu0 0.0
      %1047 = vmatpush1.msra.mxu0 %v1017
      %1048 = vmatprep.subr.mxu0 0.0
      %1049 = vmatpush1.msra.mxu0 %v1016
      %1050 = vmatprep.subr.mxu0 0.0
      %1051 = vmatpush1.msra.mxu0 %v1015
      %1052 = vmatprep.subr.mxu0 0.0
      %1053 = vmatpush1.msra.mxu0 %v1014
      %1054 = vmatprep.subr.mxu0 0.0
      %1055 = vmatpush1.msra.mxu0 %v1013
      %1056 = vmatprep.subr.mxu0 0.0
      %1057 = vmatpush1.msra.mxu0 %v1012
      %1058 = vmatprep.subr.mxu0 0.0
      %1059 = vmatpush1.msra.mxu0 %v1011
      %1060 = vmatprep.subr.mxu0 0.0
      %1061 = vmatpush1.msra.mxu0 %v1010
      %1062 = vmatprep.subr.mxu0 0.0
      %1063 = vmatpush1.msra.mxu0 %v1009
      %1064 = vmatprep.subr.mxu0 0.0
      %1065 = vmatpush2.msra.mxu0 0.0
      %1066 = vmatprep.subr.mxu0 0.0
      %1067 = vmatpush2.msra.mxu0 0.0
      %1068 = vmatprep.subr.mxu0 0.0
      %1069 = vmatpush2.msra.mxu0 0.0
      %1070 = vmatprep.subr.mxu0 0.0
      %1071 = vmatpush2.msra.mxu0 0.0
      %1072 = vmatprep.subr.mxu0 0.0
      %1073 = vmatpush2.msra.mxu0 0.0
      %1074 = vmatprep.subr.mxu0 0.0
      %1075 = vmatpush2.msra.mxu0 0.0
      %1076 = vmatprep.subr.mxu0 0.0
      %1077 = vmatpush2.msra.mxu0 0.0
      %1078 = vmatprep.subr.mxu0 0.0
      %1079 = vmatpush2.msra.mxu0 0.0
      %1080 = vmatprep.subr.mxu0 0.0
      %1081 = vmatpush2.msra.mxu0 0.0
      %1082 = vmatprep.subr.mxu0 0.0
      %1083 = vmatpush2.msra.mxu0 0.0
      %1084 = vmatprep.subr.mxu0 0.0
      %1085 = vmatpush2.msra.mxu0 0.0
      %1086 = vmatprep.subr.mxu0 0.0
      %1087 = vmatpush2.msra.mxu0 0.0
      %1088 = vmatprep.subr.mxu0 0.0
      %1089 = vmatpush2.msra.mxu0 0.0
      %1090 = vmatprep.subr.mxu0 0.0
      %1091 = vmatpush2.msra.mxu0 0.0
      %1092 = vmatprep.subr.mxu0 0.0
      %1093 = vmatpush2.msra.mxu0 0.0
      %1094 = vmatprep.subr.mxu0 0.0
      %1095 = vmatpush2.msra.mxu0 0.0
      %1096 = vmatprep.mubr.f32.mxu0 0.0
      %1097 = vmatmul.mubr.f32.gmra.mxu0 %v809
      %v1098 = vpop.f32.mrf.mxu0
      %v1099 = vadd.f32 %v1030, %v1098
      %v1100 = vpop.f32.mrf.mxu0
      %1101 = vmatprep.mubr.f32.mxu0 0.0
      %1102 = vmatmul.mubr.f32.gmra.mxu0 %v810
      %v1103 = vpop.f32.mrf.mxu0
      %v1104 = vadd.f32 %v1030, %v1103
      %v1105 = vpop.f32.mrf.mxu0
      %1106 = vdwg.mxu0
      %v1107 = vld [vmem:[%s1] sm:$0xff]
      %v1108 = vld [vmem:[%s1 + $0x8] sm:$0xff]
      %v1109 = vld [vmem:[%s769] sm:$0xff]
      %v1110 = vld [vmem:[%s769 + $0x8] sm:$0xff]
      %v1111 = vld [vmem:[%s769 + $0x10] sm:$0xff]
      %v1112 = vld [vmem:[%s769 + $0x18] sm:$0xff]
      %v1113 = vld [vmem:[%s769 + $0x20] sm:$0xff]
      %v1114 = vld [vmem:[%s769 + $0x28] sm:$0xff]
      %v1115 = vld [vmem:[%s769 + $0x30] sm:$0xff]
      %v1116 = vld [vmem:[%s769 + $0x38] sm:$0xff]
      %v1117 = vld [vmem:[%s769 + $0x40] sm:$0xff]
      %v1118 = vld [vmem:[%s769 + $0x48] sm:$0xff]
      %v1119 = vld [vmem:[%s769 + $0x50] sm:$0xff]
      %v1120 = vld [vmem:[%s769 + $0x58] sm:$0xff]
      %v1121 = vld [vmem:[%s769 + $0x60] sm:$0xff]
      %v1122 = vld [vmem:[%s769 + $0x68] sm:$0xff]
      %v1123 = vld [vmem:[%s769 + $0x70] sm:$0xff]
      %v1124 = vld [vmem:[%s769 + $0x78] sm:$0xff]
      %vm1125 = vcmask 261120
      %v1127 = vsel %vm1125, %v909, 0
      %v1130 = vsel %vm1125, %v910, 0
      %v1133 = vsel %vm1125, %v1001, 0
      %v1136 = vsel %vm1125, %v1006, 0
      %1138 = vmatprep.subr.mxu0 0.0
      %1139 = vmatpush1.xpose.msra.mxu0 0.0
      %1140 = vmatprep.subr.mxu0 0.0
      %1141 = vmatpush1.xpose.msra.mxu0 0.0
      %1142 = vmatprep.subr.mxu0 0.0
      %1143 = vmatpush1.xpose.msra.mxu0 0.0
      %1144 = vmatprep.subr.mxu0 0.0
      %1145 = vmatpush1.xpose.msra.mxu0 0.0
      %1146 = vmatprep.subr.mxu0 0.0
      %1147 = vmatpush1.xpose.msra.mxu0 0.0
      %1148 = vmatprep.subr.mxu0 0.0
      %1149 = vmatpush1.xpose.msra.mxu0 0.0
      %1150 = vmatprep.subr.mxu0 0.0
      %1151 = vmatpush1.xpose.msra.mxu0 0.0
      %1152 = vmatprep.subr.mxu0 0.0
      %1153 = vmatpush1.xpose.msra.mxu0 0.0
      %1154 = vmatprep.subr.mxu0 0.0
      %1155 = vmatpush1.xpose.msra.mxu0 0.0
      %1156 = vmatprep.subr.mxu0 0.0
      %1157 = vmatpush1.xpose.msra.mxu0 0.0
      %1158 = vmatprep.subr.mxu0 0.0
      %1159 = vmatpush1.xpose.msra.mxu0 0.0
      %1160 = vmatprep.subr.mxu0 0.0
      %1161 = vmatpush1.xpose.msra.mxu0 0.0
      %1162 = vmatprep.subr.mxu0 0.0
      %1163 = vmatpush1.xpose.msra.mxu0 0.0
      %1164 = vmatprep.subr.mxu0 0.0
      %1165 = vmatpush1.xpose.msra.mxu0 0.0
      %1166 = vmatprep.subr.mxu0 0.0
      %1167 = vmatpush1.xpose.msra.mxu0 %v1136
      %1168 = vmatprep.subr.mxu0 0.0
      %1169 = vmatpush1.xpose.msra.mxu0 %v1133
      %1170 = vmatprep.subr.mxu0 0.0
      %1171 = vmatpush2.xpose.msra.mxu0 0.0
      %1172 = vmatprep.subr.mxu0 0.0
      %1173 = vmatpush2.xpose.msra.mxu0 0.0
      %1174 = vmatprep.subr.mxu0 0.0
      %1175 = vmatpush2.xpose.msra.mxu0 0.0
      %1176 = vmatprep.subr.mxu0 0.0
      %1177 = vmatpush2.xpose.msra.mxu0 0.0
      %1178 = vmatprep.subr.mxu0 0.0
      %1179 = vmatpush2.xpose.msra.mxu0 0.0
      %1180 = vmatprep.subr.mxu0 0.0
      %1181 = vmatpush2.xpose.msra.mxu0 0.0
      %1182 = vmatprep.subr.mxu0 0.0
      %1183 = vmatpush2.xpose.msra.mxu0 0.0
      %1184 = vmatprep.subr.mxu0 0.0
      %1185 = vmatpush2.xpose.msra.mxu0 0.0
      %1186 = vmatprep.subr.mxu0 0.0
      %1187 = vmatpush2.xpose.msra.mxu0 0.0
      %1188 = vmatprep.subr.mxu0 0.0
      %1189 = vmatpush2.xpose.msra.mxu0 0.0
      %1190 = vmatprep.subr.mxu0 0.0
      %1191 = vmatpush2.xpose.msra.mxu0 0.0
      %1192 = vmatprep.subr.mxu0 0.0
      %1193 = vmatpush2.xpose.msra.mxu0 0.0
      %1194 = vmatprep.subr.mxu0 0.0
      %1195 = vmatpush2.xpose.msra.mxu0 0.0
      %1196 = vmatprep.subr.mxu0 0.0
      %1197 = vmatpush2.xpose.msra.mxu0 0.0
      %1198 = vmatprep.subr.mxu0 0.0
      %1199 = vmatpush2.xpose.msra.mxu0 0.0
      %1200 = vmatprep.subr.mxu0 0.0
      %1201 = vmatpush2.xpose.msra.mxu0 0.0
      %1202 = vmatprep.mubr.f32.mxu0 0.0
      %1203 = vmatmul.mubr.f32.gmra.mxu0 %v1127
      %v1204 = vpop.f32.mrf.mxu0
      %v1205 = vadd.f32 %v1107, %v1204
      %v1206 = vpop.f32.mrf.mxu0
      %1207 = vmatprep.mubr.f32.mxu0 0.0
      %1208 = vmatmul.mubr.f32.gmra.mxu0 %v1130
      %v1209 = vpop.f32.mrf.mxu0
      %v1210 = vadd.f32 %v1108, %v1209
      %v1211 = vpop.f32.mrf.mxu0
      %1212 = vdwg.mxu0
      %vm1213 = vcmask 130048
      %v1214 = vsel %vm1213, %v1205, -inf
      %1215 = vmax.xlane.f32.xlu0 %v1214
      %v1216 = vpop.xlane.xlu0 %1215
      %v1217 = vsel %vm1213, %v1210, -inf
      %1218 = vmax.xlane.f32.xlu0 %v1217
      %v1219 = vpop.xlane.xlu0 %1218
      %v1220 = vsub.f32 %v1205, %v1216
      %v1221 = vsub.f32 %v1210, %v1219
      %v1222 = vmul.f32 %v1220, 1.442695
      %v1223 = vpow.pop %v1222
      %v1224 = vmul.f32 %v1221, 1.442695
      %v1225 = vpow.pop %v1224
      %v1226 = vsel %vm1213, %v1223, 0.0
      %1227 = vadd.xlane.f32.xlu0 %v1226
      %v1228 = vpop.xlane.xlu0 %1227
      %v1229 = vsel %vm1213, %v1225, 0.0
      %1230 = vadd.xlane.f32.xlu0 %v1229
      %v1231 = vpop.xlane.xlu0 %1230
      %v1232 = vrcp.pop %v1228
      %v1233 = vrcp.pop %v1231
      %v1234 = vmul.f32 %v1223, %v1232
      %v1235 = vmul.f32 %v1225, %v1233
      %v1237 = vsel %vm1213, %v1234, 0
      %v1240 = vsel %vm1213, %v1235, 0
      %1242 = vmatprep.subr.mxu0 0.0
      %1243 = vmatpush1.msra.mxu0 0.0
      %1244 = vmatprep.subr.mxu0 0.0
      %1245 = vmatpush1.msra.mxu0 0.0
      %1246 = vmatprep.subr.mxu0 0.0
      %1247 = vmatpush1.msra.mxu0 0.0
      %1248 = vmatprep.subr.mxu0 0.0
      %1249 = vmatpush1.msra.mxu0 0.0
      %1250 = vmatprep.subr.mxu0 0.0
      %1251 = vmatpush1.msra.mxu0 0.0
      %1252 = vmatprep.subr.mxu0 0.0
      %1253 = vmatpush1.msra.mxu0 0.0
      %1254 = vmatprep.subr.mxu0 0.0
      %1255 = vmatpush1.msra.mxu0 0.0
      %1256 = vmatprep.subr.mxu0 0.0
      %1257 = vmatpush1.msra.mxu0 0.0
      %1258 = vmatprep.subr.mxu0 0.0
      %1259 = vmatpush1.msra.mxu0 0.0
      %1260 = vmatprep.subr.mxu0 0.0
      %1261 = vmatpush1.msra.mxu0 0.0
      %1262 = vmatprep.subr.mxu0 0.0
      %1263 = vmatpush1.msra.mxu0 0.0
      %1264 = vmatprep.subr.mxu0 0.0
      %1265 = vmatpush1.msra.mxu0 0.0
      %1266 = vmatprep.subr.mxu0 0.0
      %1267 = vmatpush1.msra.mxu0 0.0
      %1268 = vmatprep.subr.mxu0 0.0
      %1269 = vmatpush1.msra.mxu0 0.0
      %1270 = vmatprep.subr.mxu0 0.0
      %1271 = vmatpush1.msra.mxu0 %v1104
      %1272 = vmatprep.subr.mxu0 0.0
      %1273 = vmatpush1.msra.mxu0 %v1099
      %1274 = vmatprep.subr.mxu0 0.0
      %1275 = vmatpush2.msra.mxu0 0.0
      %1276 = vmatprep.subr.mxu0 0.0
      %1277 = vmatpush2.msra.mxu0 0.0
      %1278 = vmatprep.subr.mxu0 0.0
      %1279 = vmatpush2.msra.mxu0 0.0
      %1280 = vmatprep.subr.mxu0 0.0
      %1281 = vmatpush2.msra.mxu0 0.0
      %1282 = vmatprep.subr.mxu0 0.0
      %1283 = vmatpush2.msra.mxu0 0.0
      %1284 = vmatprep.subr.mxu0 0.0
      %1285 = vmatpush2.msra.mxu0 0.0
      %1286 = vmatprep.subr.mxu0 0.0
      %1287 = vmatpush2.msra.mxu0 0.0
      %1288 = vmatprep.subr.mxu0 0.0
      %1289 = vmatpush2.msra.mxu0 0.0
      %1290 = vmatprep.subr.mxu0 0.0
      %1291 = vmatpush2.msra.mxu0 0.0
      %1292 = vmatprep.subr.mxu0 0.0
      %1293 = vmatpush2.msra.mxu0 0.0
      %1294 = vmatprep.subr.mxu0 0.0
      %1295 = vmatpush2.msra.mxu0 0.0
      %1296 = vmatprep.subr.mxu0 0.0
      %1297 = vmatpush2.msra.mxu0 0.0
      %1298 = vmatprep.subr.mxu0 0.0
      %1299 = vmatpush2.msra.mxu0 0.0
      %1300 = vmatprep.subr.mxu0 0.0
      %1301 = vmatpush2.msra.mxu0 0.0
      %1302 = vmatprep.subr.mxu0 0.0
      %1303 = vmatpush2.msra.mxu0 0.0
      %1304 = vmatprep.subr.mxu0 0.0
      %1305 = vmatpush2.msra.mxu0 0.0
      %1306 = vmatprep.mubr.f32.mxu0 0.0
      %1307 = vmatmul.mubr.f32.gmra.mxu0 %v1237
      %v1308 = vpop.f32.mrf.mxu0
      %v1309 = vadd.f32 0.0, %v1308
      %v1310 = vpop.f32.mrf.mxu0
      %1311 = vmatprep.mubr.f32.mxu0 0.0
      %1312 = vmatmul.mubr.f32.gmra.mxu0 %v1240
      %v1313 = vpop.f32.mrf.mxu0
      %v1314 = vadd.f32 0.0, %v1313
      %v1315 = vpop.f32.mrf.mxu0
      %1316 = vdwg.mxu0
      %1317 = vrot.lane.b32.xlu0 %v909, 96
      %v1318 = vpop.permute.xlu0 %1317
      %1319 = vrot.lane.b32.xlu0 %v910, 96
      %v1320 = vpop.permute.xlu0 %1319
      %1321 = vrot.lane.b32.xlu0 %v1001, 96
      %v1322 = vpop.permute.xlu0 %1321
      %1323 = vrot.lane.b32.xlu0 %v1006, 96
      %v1324 = vpop.permute.xlu0 %1323
      %v1325 = vsel %vm1125, %v1318, 0
      %v1327 = vsel %vm1125, %v1320, 0
      %v1329 = vsel %vm1125, %v1322, 0
      %v1331 = vsel %vm1125, %v1324, 0
      %1333 = vmatprep.subr.mxu0 0.0
      %1334 = vmatpush1.xpose.msra.mxu0 0.0
      %1335 = vmatprep.subr.mxu0 0.0
      %1336 = vmatpush1.xpose.msra.mxu0 0.0
      %1337 = vmatprep.subr.mxu0 0.0
      %1338 = vmatpush1.xpose.msra.mxu0 0.0
      %1339 = vmatprep.subr.mxu0 0.0
      %1340 = vmatpush1.xpose.msra.mxu0 0.0
      %1341 = vmatprep.subr.mxu0 0.0
      %1342 = vmatpush1.xpose.msra.mxu0 0.0
      %1343 = vmatprep.subr.mxu0 0.0
      %1344 = vmatpush1.xpose.msra.mxu0 0.0
      %1345 = vmatprep.subr.mxu0 0.0
      %1346 = vmatpush1.xpose.msra.mxu0 0.0
      %1347 = vmatprep.subr.mxu0 0.0
      %1348 = vmatpush1.xpose.msra.mxu0 0.0
      %1349 = vmatprep.subr.mxu0 0.0
      %1350 = vmatpush1.xpose.msra.mxu0 0.0
      %1351 = vmatprep.subr.mxu0 0.0
      %1352 = vmatpush1.xpose.msra.mxu0 0.0
      %1353 = vmatprep.subr.mxu0 0.0
      %1354 = vmatpush1.xpose.msra.mxu0 0.0
      %1355 = vmatprep.subr.mxu0 0.0
      %1356 = vmatpush1.xpose.msra.mxu0 0.0
      %1357 = vmatprep.subr.mxu0 0.0
      %1358 = vmatpush1.xpose.msra.mxu0 0.0
      %1359 = vmatprep.subr.mxu0 0.0
      %1360 = vmatpush1.xpose.msra.mxu0 0.0
      %1361 = vmatprep.subr.mxu0 0.0
      %1362 = vmatpush1.xpose.msra.mxu0 %v1331
      %1363 = vmatprep.subr.mxu0 0.0
      %1364 = vmatpush1.xpose.msra.mxu0 %v1329
      %1365 = vmatprep.subr.mxu0 0.0
      %1366 = vmatpush2.xpose.msra.mxu0 0.0
      %1367 = vmatprep.subr.mxu0 0.0
      %1368 = vmatpush2.xpose.msra.mxu0 0.0
      %1369 = vmatprep.subr.mxu0 0.0
      %1370 = vmatpush2.xpose.msra.mxu0 0.0
      %1371 = vmatprep.subr.mxu0 0.0
      %1372 = vmatpush2.xpose.msra.mxu0 0.0
      %1373 = vmatprep.subr.mxu0 0.0
      %1374 = vmatpush2.xpose.msra.mxu0 0.0
      %1375 = vmatprep.subr.mxu0 0.0
      %1376 = vmatpush2.xpose.msra.mxu0 0.0
      %1377 = vmatprep.subr.mxu0 0.0
      %1378 = vmatpush2.xpose.msra.mxu0 0.0
      %1379 = vmatprep.subr.mxu0 0.0
      %1380 = vmatpush2.xpose.msra.mxu0 0.0
      %1381 = vmatprep.subr.mxu0 0.0
      %1382 = vmatpush2.xpose.msra.mxu0 0.0
      %1383 = vmatprep.subr.mxu0 0.0
      %1384 = vmatpush2.xpose.msra.mxu0 0.0
      %1385 = vmatprep.subr.mxu0 0.0
      %1386 = vmatpush2.xpose.msra.mxu0 0.0
      %1387 = vmatprep.subr.mxu0 0.0
      %1388 = vmatpush2.xpose.msra.mxu0 0.0
      %1389 = vmatprep.subr.mxu0 0.0
      %1390 = vmatpush2.xpose.msra.mxu0 0.0
      %1391 = vmatprep.subr.mxu0 0.0
      %1392 = vmatpush2.xpose.msra.mxu0 0.0
      %1393 = vmatprep.subr.mxu0 0.0
      %1394 = vmatpush2.xpose.msra.mxu0 0.0
      %1395 = vmatprep.subr.mxu0 0.0
      %1396 = vmatpush2.xpose.msra.mxu0 0.0
      %1397 = vmatprep.mubr.f32.mxu0 0.0
      %1398 = vmatmul.mubr.f32.gmra.mxu0 %v1325
      %v1399 = vpop.f32.mrf.mxu0
      %v1400 = vadd.f32 %v1107, %v1399
      %v1401 = vpop.f32.mrf.mxu0
      %1402 = vmatprep.mubr.f32.mxu0 0.0
      %1403 = vmatmul.mubr.f32.gmra.mxu0 %v1327
      %v1404 = vpop.f32.mrf.mxu0
      %v1405 = vadd.f32 %v1108, %v1404
      %v1406 = vpop.f32.mrf.mxu0
      %1407 = vdwg.mxu0
      %v1408 = vsel %vm1213, %v1400, -inf
      %1409 = vmax.xlane.f32.xlu0 %v1408
      %v1410 = vpop.xlane.xlu0 %1409
      %v1411 = vsel %vm1213, %v1405, -inf
      %1412 = vmax.xlane.f32.xlu0 %v1411
      %v1413 = vpop.xlane.xlu0 %1412
      %v1414 = vsub.f32 %v1400, %v1410
      %v1415 = vsub.f32 %v1405, %v1413
      %v1416 = vmul.f32 %v1414, 1.442695
      %v1417 = vpow.pop %v1416
      %v1418 = vmul.f32 %v1415, 1.442695
      %v1419 = vpow.pop %v1418
      %v1420 = vsel %vm1213, %v1417, 0.0
      %1421 = vadd.xlane.f32.xlu0 %v1420
      %v1422 = vpop.xlane.xlu0 %1421
      %v1423 = vsel %vm1213, %v1419, 0.0
      %1424 = vadd.xlane.f32.xlu0 %v1423
      %v1425 = vpop.xlane.xlu0 %1424
      %v1426 = vrcp.pop %v1422
      %v1427 = vrcp.pop %v1425
      %v1428 = vmul.f32 %v1417, %v1426
      %v1429 = vmul.f32 %v1419, %v1427
      %1432 = vrot.lane.b32.xlu0 %v1099, 96
      %v1433 = vpop.permute.xlu0 %1432
      %1434 = vrot.lane.b32.xlu0 %v1104, 96
      %v1435 = vpop.permute.xlu0 %1434
      %v1439 = vsel %vm1213, %v1428, 0
      %v1442 = vsel %vm1213, %v1429, 0
      %1444 = vmatprep.subr.mxu0 0.0
      %1445 = vmatpush1.msra.mxu0 0.0
      %1446 = vmatprep.subr.mxu0 0.0
      %1447 = vmatpush1.msra.mxu0 0.0
      %1448 = vmatprep.subr.mxu0 0.0
      %1449 = vmatpush1.msra.mxu0 0.0
      %1450 = vmatprep.subr.mxu0 0.0
      %1451 = vmatpush1.msra.mxu0 0.0
      %1452 = vmatprep.subr.mxu0 0.0
      %1453 = vmatpush1.msra.mxu0 0.0
      %1454 = vmatprep.subr.mxu0 0.0
      %1455 = vmatpush1.msra.mxu0 0.0
      %1456 = vmatprep.subr.mxu0 0.0
      %1457 = vmatpush1.msra.mxu0 0.0
      %1458 = vmatprep.subr.mxu0 0.0
      %1459 = vmatpush1.msra.mxu0 0.0
      %1460 = vmatprep.subr.mxu0 0.0
      %1461 = vmatpush1.msra.mxu0 0.0
      %1462 = vmatprep.subr.mxu0 0.0
      %1463 = vmatpush1.msra.mxu0 0.0
      %1464 = vmatprep.subr.mxu0 0.0
      %1465 = vmatpush1.msra.mxu0 0.0
      %1466 = vmatprep.subr.mxu0 0.0
      %1467 = vmatpush1.msra.mxu0 0.0
      %1468 = vmatprep.subr.mxu0 0.0
      %1469 = vmatpush1.msra.mxu0 0.0
      %1470 = vmatprep.subr.mxu0 0.0
      %1471 = vmatpush1.msra.mxu0 0.0
      %1472 = vmatprep.subr.mxu0 0.0
      %1473 = vmatpush1.msra.mxu0 %v1435
      %1474 = vmatprep.subr.mxu0 0.0
      %1475 = vmatpush1.msra.mxu0 %v1433
      %1476 = vmatprep.subr.mxu0 0.0
      %1477 = vmatpush2.msra.mxu0 0.0
      %1478 = vmatprep.subr.mxu0 0.0
      %1479 = vmatpush2.msra.mxu0 0.0
      %1480 = vmatprep.subr.mxu0 0.0
      %1481 = vmatpush2.msra.mxu0 0.0
      %1482 = vmatprep.subr.mxu0 0.0
      %1483 = vmatpush2.msra.mxu0 0.0
      %1484 = vmatprep.subr.mxu0 0.0
      %1485 = vmatpush2.msra.mxu0 0.0
      %1486 = vmatprep.subr.mxu0 0.0
      %1487 = vmatpush2.msra.mxu0 0.0
      %1488 = vmatprep.subr.mxu0 0.0
      %1489 = vmatpush2.msra.mxu0 0.0
      %1490 = vmatprep.subr.mxu0 0.0
      %1491 = vmatpush2.msra.mxu0 0.0
      %1492 = vmatprep.subr.mxu0 0.0
      %1493 = vmatpush2.msra.mxu0 0.0
      %1494 = vmatprep.subr.mxu0 0.0
      %1495 = vmatpush2.msra.mxu0 0.0
      %1496 = vmatprep.subr.mxu0 0.0
      %1497 = vmatpush2.msra.mxu0 0.0
      %1498 = vmatprep.subr.mxu0 0.0
      %1499 = vmatpush2.msra.mxu0 0.0
      %1500 = vmatprep.subr.mxu0 0.0
      %1501 = vmatpush2.msra.mxu0 0.0
      %1502 = vmatprep.subr.mxu0 0.0
      %1503 = vmatpush2.msra.mxu0 0.0
      %1504 = vmatprep.subr.mxu0 0.0
      %1505 = vmatpush2.msra.mxu0 0.0
      %1506 = vmatprep.subr.mxu0 0.0
      %1507 = vmatpush2.msra.mxu0 0.0
      %1508 = vmatprep.mubr.f32.mxu0 0.0
      %1509 = vmatmul.mubr.f32.gmra.mxu0 %v1439
      %v1510 = vpop.f32.mrf.mxu0
      %v1511 = vadd.f32 0.0, %v1510
      %v1512 = vpop.f32.mrf.mxu0
      %1513 = vmatprep.mubr.f32.mxu0 0.0
      %1514 = vmatmul.mubr.f32.gmra.mxu0 %v1442
      %v1515 = vpop.f32.mrf.mxu0
      %v1516 = vadd.f32 0.0, %v1515
      %v1517 = vpop.f32.mrf.mxu0
      %1518 = vdwg.mxu0
      %v1520 = vsel %vm1125, %v1511, 0
      %v1523 = vsel %vm1125, %v1516, 0
      %1525 = vmatprep.subr.mxu0 0.0
      %1526 = vmatpush1.msra.mxu0 0.0
      %1527 = vmatprep.subr.mxu0 0.0
      %1528 = vmatpush1.msra.mxu0 0.0
      %1529 = vmatprep.subr.mxu0 0.0
      %1530 = vmatpush1.msra.mxu0 0.0
      %1531 = vmatprep.subr.mxu0 0.0
      %1532 = vmatpush1.msra.mxu0 0.0
      %1533 = vmatprep.subr.mxu0 0.0
      %1534 = vmatpush1.msra.mxu0 0.0
      %1535 = vmatprep.subr.mxu0 0.0
      %1536 = vmatpush1.msra.mxu0 0.0
      %1537 = vmatprep.subr.mxu0 0.0
      %1538 = vmatpush1.msra.mxu0 0.0
      %1539 = vmatprep.subr.mxu0 0.0
      %1540 = vmatpush1.msra.mxu0 0.0
      %1541 = vmatprep.subr.mxu0 0.0
      %1542 = vmatpush1.msra.mxu0 0.0
      %1543 = vmatprep.subr.mxu0 0.0
      %1544 = vmatpush1.msra.mxu0 0.0
      %1545 = vmatprep.subr.mxu0 0.0
      %1546 = vmatpush1.msra.mxu0 0.0
      %1547 = vmatprep.subr.mxu0 0.0
      %1548 = vmatpush1.msra.mxu0 0.0
      %1549 = vmatprep.subr.mxu0 0.0
      %1550 = vmatpush1.msra.mxu0 %v1116
      %1551 = vmatprep.subr.mxu0 0.0
      %1552 = vmatpush1.msra.mxu0 %v1115
      %1553 = vmatprep.subr.mxu0 0.0
      %1554 = vmatpush1.msra.mxu0 %v1114
      %1555 = vmatprep.subr.mxu0 0.0
      %1556 = vmatpush1.msra.mxu0 %v1113
      %1557 = vmatprep.subr.mxu0 0.0
      %1558 = vmatpush2.msra.mxu0 0.0
      %1559 = vmatprep.subr.mxu0 0.0
      %1560 = vmatpush2.msra.mxu0 0.0
      %1561 = vmatprep.subr.mxu0 0.0
      %1562 = vmatpush2.msra.mxu0 0.0
      %1563 = vmatprep.subr.mxu0 0.0
      %1564 = vmatpush2.msra.mxu0 0.0
      %1565 = vmatprep.subr.mxu0 0.0
      %1566 = vmatpush2.msra.mxu0 0.0
      %1567 = vmatprep.subr.mxu0 0.0
      %1568 = vmatpush2.msra.mxu0 0.0
      %1569 = vmatprep.subr.mxu0 0.0
      %1570 = vmatpush2.msra.mxu0 0.0
      %1571 = vmatprep.subr.mxu0 0.0
      %1572 = vmatpush2.msra.mxu0 0.0
      %1573 = vmatprep.subr.mxu0 0.0
      %1574 = vmatpush2.msra.mxu0 0.0
      %1575 = vmatprep.subr.mxu0 0.0
      %1576 = vmatpush2.msra.mxu0 0.0
      %1577 = vmatprep.subr.mxu0 0.0
      %1578 = vmatpush2.msra.mxu0 0.0
      %1579 = vmatprep.subr.mxu0 0.0
      %1580 = vmatpush2.msra.mxu0 0.0
      %1581 = vmatprep.subr.mxu0 0.0
      %1582 = vmatpush2.msra.mxu0 0.0
      %1583 = vmatprep.subr.mxu0 0.0
      %1584 = vmatpush2.msra.mxu0 0.0
      %1585 = vmatprep.subr.mxu0 0.0
      %1586 = vmatpush2.msra.mxu0 0.0
      %1587 = vmatprep.subr.mxu0 0.0
      %1588 = vmatpush2.msra.mxu0 0.0
      %1589 = vmatprep.mubr.f32.mxu0 0.0
      %1590 = vmatmul.mubr.f32.gmra.mxu0 %v1520
      %v1591 = vpop.f32.mrf.mxu0
      %v1592 = vadd.f32 0.0, %v1591
      %v1593 = vpop.f32.mrf.mxu0
      %1594 = vmatprep.mubr.f32.mxu0 0.0
      %1595 = vmatmul.mubr.f32.gmra.mxu0 %v1523
      %v1596 = vpop.f32.mrf.mxu0
      %v1597 = vadd.f32 0.0, %v1596
      %v1598 = vpop.f32.mrf.mxu0
      %1599 = vdwg.mxu0
      %v1601 = vsel %vm1125, %v1309, 0
      %v1604 = vsel %vm1125, %v1314, 0
      %1606 = vmatprep.subr.mxu0 0.0
      %1607 = vmatpush1.msra.mxu0 0.0
      %1608 = vmatprep.subr.mxu0 0.0
      %1609 = vmatpush1.msra.mxu0 0.0
      %1610 = vmatprep.subr.mxu0 0.0
      %1611 = vmatpush1.msra.mxu0 0.0
      %1612 = vmatprep.subr.mxu0 0.0
      %1613 = vmatpush1.msra.mxu0 0.0
      %1614 = vmatprep.subr.mxu0 0.0
      %1615 = vmatpush1.msra.mxu0 0.0
      %1616 = vmatprep.subr.mxu0 0.0
      %1617 = vmatpush1.msra.mxu0 0.0
      %1618 = vmatprep.subr.mxu0 0.0
      %1619 = vmatpush1.msra.mxu0 0.0
      %1620 = vmatprep.subr.mxu0 0.0
      %1621 = vmatpush1.msra.mxu0 0.0
      %1622 = vmatprep.subr.mxu0 0.0
      %1623 = vmatpush1.msra.mxu0 0.0
      %1624 = vmatprep.subr.mxu0 0.0
      %1625 = vmatpush1.msra.mxu0 0.0
      %1626 = vmatprep.subr.mxu0 0.0
      %1627 = vmatpush1.msra.mxu0 0.0
      %1628 = vmatprep.subr.mxu0 0.0
      %1629 = vmatpush1.msra.mxu0 0.0
      %1630 = vmatprep.subr.mxu0 0.0
      %1631 = vmatpush1.msra.mxu0 %v1112
      %1632 = vmatprep.subr.mxu0 0.0
      %1633 = vmatpush1.msra.mxu0 %v1111
      %1634 = vmatprep.subr.mxu0 0.0
      %1635 = vmatpush1.msra.mxu0 %v1110
      %1636 = vmatprep.subr.mxu0 0.0
      %1637 = vmatpush1.msra.mxu0 %v1109
      %1638 = vmatprep.subr.mxu0 0.0
      %1639 = vmatpush2.msra.mxu0 0.0
      %1640 = vmatprep.subr.mxu0 0.0
      %1641 = vmatpush2.msra.mxu0 0.0
      %1642 = vmatprep.subr.mxu0 0.0
      %1643 = vmatpush2.msra.mxu0 0.0
      %1644 = vmatprep.subr.mxu0 0.0
      %1645 = vmatpush2.msra.mxu0 0.0
      %1646 = vmatprep.subr.mxu0 0.0
      %1647 = vmatpush2.msra.mxu0 0.0
      %1648 = vmatprep.subr.mxu0 0.0
      %1649 = vmatpush2.msra.mxu0 0.0
      %1650 = vmatprep.subr.mxu0 0.0
      %1651 = vmatpush2.msra.mxu0 0.0
      %1652 = vmatprep.subr.mxu0 0.0
      %1653 = vmatpush2.msra.mxu0 0.0
      %1654 = vmatprep.subr.mxu0 0.0
      %1655 = vmatpush2.msra.mxu0 0.0
      %1656 = vmatprep.subr.mxu0 0.0
      %1657 = vmatpush2.msra.mxu0 0.0
      %1658 = vmatprep.subr.mxu0 0.0
      %1659 = vmatpush2.msra.mxu0 0.0
      %1660 = vmatprep.subr.mxu0 0.0
      %1661 = vmatpush2.msra.mxu0 0.0
      %1662 = vmatprep.subr.mxu0 0.0
      %1663 = vmatpush2.msra.mxu0 0.0
      %1664 = vmatprep.subr.mxu0 0.0
      %1665 = vmatpush2.msra.mxu0 0.0
      %1666 = vmatprep.subr.mxu0 0.0
      %1667 = vmatpush2.msra.mxu0 0.0
      %1668 = vmatprep.subr.mxu0 0.0
      %1669 = vmatpush2.msra.mxu0 0.0
      %1670 = vmatprep.mubr.f32.mxu0 0.0
      %1671 = vmatmul.mubr.f32.gmra.mxu0 %v1601
      %v1672 = vpop.f32.mrf.mxu0
      %v1673 = vadd.f32 %v1592, %v1672
      %v1674 = vpop.f32.mrf.mxu0
      %1675 = vmatprep.mubr.f32.mxu0 0.0
      %1676 = vmatmul.mubr.f32.gmra.mxu0 %v1604
      %v1677 = vpop.f32.mrf.mxu0
      %v1678 = vadd.f32 %v1597, %v1677
      %v1679 = vpop.f32.mrf.mxu0
      %1680 = vdwg.mxu0
      %1681 = vrot.lane.b32.xlu0 %v909, 64
      %v1682 = vpop.permute.xlu0 %1681
      %1683 = vrot.lane.b32.xlu0 %v910, 64
      %v1684 = vpop.permute.xlu0 %1683
      %1685 = vrot.lane.b32.xlu0 %v1001, 64
      %v1686 = vpop.permute.xlu0 %1685
      %1687 = vrot.lane.b32.xlu0 %v1006, 64
      %v1688 = vpop.permute.xlu0 %1687
      %v1689 = vsel %vm1125, %v1682, 0
      %v1691 = vsel %vm1125, %v1684, 0
      %v1693 = vsel %vm1125, %v1686, 0
      %v1695 = vsel %vm1125, %v1688, 0
      %1697 = vmatprep.subr.mxu0 0.0
      %1698 = vmatpush1.xpose.msra.mxu0 0.0
      %1699 = vmatprep.subr.mxu0 0.0
      %1700 = vmatpush1.xpose.msra.mxu0 0.0
      %1701 = vmatprep.subr.mxu0 0.0
      %1702 = vmatpush1.xpose.msra.mxu0 0.0
      %1703 = vmatprep.subr.mxu0 0.0
      %1704 = vmatpush1.xpose.msra.mxu0 0.0
      %1705 = vmatprep.subr.mxu0 0.0
      %1706 = vmatpush1.xpose.msra.mxu0 0.0
      %1707 = vmatprep.subr.mxu0 0.0
      %1708 = vmatpush1.xpose.msra.mxu0 0.0
      %1709 = vmatprep.subr.mxu0 0.0
      %1710 = vmatpush1.xpose.msra.mxu0 0.0
      %1711 = vmatprep.subr.mxu0 0.0
      %1712 = vmatpush1.xpose.msra.mxu0 0.0
      %1713 = vmatprep.subr.mxu0 0.0
      %1714 = vmatpush1.xpose.msra.mxu0 0.0
      %1715 = vmatprep.subr.mxu0 0.0
      %1716 = vmatpush1.xpose.msra.mxu0 0.0
      %1717 = vmatprep.subr.mxu0 0.0
      %1718 = vmatpush1.xpose.msra.mxu0 0.0
      %1719 = vmatprep.subr.mxu0 0.0
      %1720 = vmatpush1.xpose.msra.mxu0 0.0
      %1721 = vmatprep.subr.mxu0 0.0
      %1722 = vmatpush1.xpose.msra.mxu0 0.0
      %1723 = vmatprep.subr.mxu0 0.0
      %1724 = vmatpush1.xpose.msra.mxu0 0.0
      %1725 = vmatprep.subr.mxu0 0.0
      %1726 = vmatpush1.xpose.msra.mxu0 %v1695
      %1727 = vmatprep.subr.mxu0 0.0
      %1728 = vmatpush1.xpose.msra.mxu0 %v1693
      %1729 = vmatprep.subr.mxu0 0.0
      %1730 = vmatpush2.xpose.msra.mxu0 0.0
      %1731 = vmatprep.subr.mxu0 0.0
      %1732 = vmatpush2.xpose.msra.mxu0 0.0
      %1733 = vmatprep.subr.mxu0 0.0
      %1734 = vmatpush2.xpose.msra.mxu0 0.0
      %1735 = vmatprep.subr.mxu0 0.0
      %1736 = vmatpush2.xpose.msra.mxu0 0.0
      %1737 = vmatprep.subr.mxu0 0.0
      %1738 = vmatpush2.xpose.msra.mxu0 0.0
      %1739 = vmatprep.subr.mxu0 0.0
      %1740 = vmatpush2.xpose.msra.mxu0 0.0
      %1741 = vmatprep.subr.mxu0 0.0
      %1742 = vmatpush2.xpose.msra.mxu0 0.0
      %1743 = vmatprep.subr.mxu0 0.0
      %1744 = vmatpush2.xpose.msra.mxu0 0.0
      %1745 = vmatprep.subr.mxu0 0.0
      %1746 = vmatpush2.xpose.msra.mxu0 0.0
      %1747 = vmatprep.subr.mxu0 0.0
      %1748 = vmatpush2.xpose.msra.mxu0 0.0
      %1749 = vmatprep.subr.mxu0 0.0
      %1750 = vmatpush2.xpose.msra.mxu0 0.0
      %1751 = vmatprep.subr.mxu0 0.0
      %1752 = vmatpush2.xpose.msra.mxu0 0.0
      %1753 = vmatprep.subr.mxu0 0.0
      %1754 = vmatpush2.xpose.msra.mxu0 0.0
      %1755 = vmatprep.subr.mxu0 0.0
      %1756 = vmatpush2.xpose.msra.mxu0 0.0
      %1757 = vmatprep.subr.mxu0 0.0
      %1758 = vmatpush2.xpose.msra.mxu0 0.0
      %1759 = vmatprep.subr.mxu0 0.0
      %1760 = vmatpush2.xpose.msra.mxu0 0.0
      %1761 = vmatprep.mubr.f32.mxu0 0.0
      %1762 = vmatmul.mubr.f32.gmra.mxu0 %v1689
      %v1763 = vpop.f32.mrf.mxu0
      %v1764 = vadd.f32 %v1107, %v1763
      %v1765 = vpop.f32.mrf.mxu0
      %1766 = vmatprep.mubr.f32.mxu0 0.0
      %1767 = vmatmul.mubr.f32.gmra.mxu0 %v1691
      %v1768 = vpop.f32.mrf.mxu0
      %v1769 = vadd.f32 %v1108, %v1768
      %v1770 = vpop.f32.mrf.mxu0
      %1771 = vdwg.mxu0
      %v1772 = vsel %vm1213, %v1764, -inf
      %1773 = vmax.xlane.f32.xlu0 %v1772
      %v1774 = vpop.xlane.xlu0 %1773
      %v1775 = vsel %vm1213, %v1769, -inf
      %1776 = vmax.xlane.f32.xlu0 %v1775
      %v1777 = vpop.xlane.xlu0 %1776
      %v1778 = vsub.f32 %v1764, %v1774
      %v1779 = vsub.f32 %v1769, %v1777
      %v1780 = vmul.f32 %v1778, 1.442695
      %v1781 = vpow.pop %v1780
      %v1782 = vmul.f32 %v1779, 1.442695
      %v1783 = vpow.pop %v1782
      %v1784 = vsel %vm1213, %v1781, 0.0
      %1785 = vadd.xlane.f32.xlu0 %v1784
      %v1786 = vpop.xlane.xlu0 %1785
      %v1787 = vsel %vm1213, %v1783, 0.0
      %1788 = vadd.xlane.f32.xlu0 %v1787
      %v1789 = vpop.xlane.xlu0 %1788
      %v1790 = vrcp.pop %v1786
      %v1791 = vrcp.pop %v1789
      %v1792 = vmul.f32 %v1781, %v1790
      %v1793 = vmul.f32 %v1783, %v1791
      %1794 = vrot.lane.b32.xlu0 %v1099, 64
      %v1795 = vpop.permute.xlu0 %1794
      %1796 = vrot.lane.b32.xlu0 %v1104, 64
      %v1797 = vpop.permute.xlu0 %1796
      %v1801 = vsel %vm1213, %v1792, 0
      %v1804 = vsel %vm1213, %v1793, 0
      %1806 = vmatprep.subr.mxu0 0.0
      %1807 = vmatpush1.msra.mxu0 0.0
      %1808 = vmatprep.subr.mxu0 0.0
      %1809 = vmatpush1.msra.mxu0 0.0
      %1810 = vmatprep.subr.mxu0 0.0
      %1811 = vmatpush1.msra.mxu0 0.0
      %1812 = vmatprep.subr.mxu0 0.0
      %1813 = vmatpush1.msra.mxu0 0.0
      %1814 = vmatprep.subr.mxu0 0.0
      %1815 = vmatpush1.msra.mxu0 0.0
      %1816 = vmatprep.subr.mxu0 0.0
      %1817 = vmatpush1.msra.mxu0 0.0
      %1818 = vmatprep.subr.mxu0 0.0
      %1819 = vmatpush1.msra.mxu0 0.0
      %1820 = vmatprep.subr.mxu0 0.0
      %1821 = vmatpush1.msra.mxu0 0.0
      %1822 = vmatprep.subr.mxu0 0.0
      %1823 = vmatpush1.msra.mxu0 0.0
      %1824 = vmatprep.subr.mxu0 0.0
      %1825 = vmatpush1.msra.mxu0 0.0
      %1826 = vmatprep.subr.mxu0 0.0
      %1827 = vmatpush1.msra.mxu0 0.0
      %1828 = vmatprep.subr.mxu0 0.0
      %1829 = vmatpush1.msra.mxu0 0.0
      %1830 = vmatprep.subr.mxu0 0.0
      %1831 = vmatpush1.msra.mxu0 0.0
      %1832 = vmatprep.subr.mxu0 0.0
      %1833 = vmatpush1.msra.mxu0 0.0
      %1834 = vmatprep.subr.mxu0 0.0
      %1835 = vmatpush1.msra.mxu0 %v1797
      %1836 = vmatprep.subr.mxu0 0.0
      %1837 = vmatpush1.msra.mxu0 %v1795
      %1838 = vmatprep.subr.mxu0 0.0
      %1839 = vmatpush2.msra.mxu0 0.0
      %1840 = vmatprep.subr.mxu0 0.0
      %1841 = vmatpush2.msra.mxu0 0.0
      %1842 = vmatprep.subr.mxu0 0.0
      %1843 = vmatpush2.msra.mxu0 0.0
      %1844 = vmatprep.subr.mxu0 0.0
      %1845 = vmatpush2.msra.mxu0 0.0
      %1846 = vmatprep.subr.mxu0 0.0
      %1847 = vmatpush2.msra.mxu0 0.0
      %1848 = vmatprep.subr.mxu0 0.0
      %1849 = vmatpush2.msra.mxu0 0.0
      %1850 = vmatprep.subr.mxu0 0.0
      %1851 = vmatpush2.msra.mxu0 0.0
      %1852 = vmatprep.subr.mxu0 0.0
      %1853 = vmatpush2.msra.mxu0 0.0
      %1854 = vmatprep.subr.mxu0 0.0
      %1855 = vmatpush2.msra.mxu0 0.0
      %1856 = vmatprep.subr.mxu0 0.0
      %1857 = vmatpush2.msra.mxu0 0.0
      %1858 = vmatprep.subr.mxu0 0.0
      %1859 = vmatpush2.msra.mxu0 0.0
      %1860 = vmatprep.subr.mxu0 0.0
      %1861 = vmatpush2.msra.mxu0 0.0
      %1862 = vmatprep.subr.mxu0 0.0
      %1863 = vmatpush2.msra.mxu0 0.0
      %1864 = vmatprep.subr.mxu0 0.0
      %1865 = vmatpush2.msra.mxu0 0.0
      %1866 = vmatprep.subr.mxu0 0.0
      %1867 = vmatpush2.msra.mxu0 0.0
      %1868 = vmatprep.subr.mxu0 0.0
      %1869 = vmatpush2.msra.mxu0 0.0
      %1870 = vmatprep.mubr.f32.mxu0 0.0
      %1871 = vmatmul.mubr.f32.gmra.mxu0 %v1801
      %v1872 = vpop.f32.mrf.mxu0
      %v1873 = vadd.f32 0.0, %v1872
      %v1874 = vpop.f32.mrf.mxu0
      %1875 = vmatprep.mubr.f32.mxu0 0.0
      %1876 = vmatmul.mubr.f32.gmra.mxu0 %v1804
      %v1877 = vpop.f32.mrf.mxu0
      %v1878 = vadd.f32 0.0, %v1877
      %v1879 = vpop.f32.mrf.mxu0
      %1880 = vdwg.mxu0
      %v1882 = vsel %vm1125, %v1873, 0
      %v1885 = vsel %vm1125, %v1878, 0
      %1887 = vmatprep.subr.mxu0 0.0
      %1888 = vmatpush1.msra.mxu0 0.0
      %1889 = vmatprep.subr.mxu0 0.0
      %1890 = vmatpush1.msra.mxu0 0.0
      %1891 = vmatprep.subr.mxu0 0.0
      %1892 = vmatpush1.msra.mxu0 0.0
      %1893 = vmatprep.subr.mxu0 0.0
      %1894 = vmatpush1.msra.mxu0 0.0
      %1895 = vmatprep.subr.mxu0 0.0
      %1896 = vmatpush1.msra.mxu0 0.0
      %1897 = vmatprep.subr.mxu0 0.0
      %1898 = vmatpush1.msra.mxu0 0.0
      %1899 = vmatprep.subr.mxu0 0.0
      %1900 = vmatpush1.msra.mxu0 0.0
      %1901 = vmatprep.subr.mxu0 0.0
      %1902 = vmatpush1.msra.mxu0 0.0
      %1903 = vmatprep.subr.mxu0 0.0
      %1904 = vmatpush1.msra.mxu0 0.0
      %1905 = vmatprep.subr.mxu0 0.0
      %1906 = vmatpush1.msra.mxu0 0.0
      %1907 = vmatprep.subr.mxu0 0.0
      %1908 = vmatpush1.msra.mxu0 0.0
      %1909 = vmatprep.subr.mxu0 0.0
      %1910 = vmatpush1.msra.mxu0 0.0
      %1911 = vmatprep.subr.mxu0 0.0
      %1912 = vmatpush1.msra.mxu0 %v1120
      %1913 = vmatprep.subr.mxu0 0.0
      %1914 = vmatpush1.msra.mxu0 %v1119
      %1915 = vmatprep.subr.mxu0 0.0
      %1916 = vmatpush1.msra.mxu0 %v1118
      %1917 = vmatprep.subr.mxu0 0.0
      %1918 = vmatpush1.msra.mxu0 %v1117
      %1919 = vmatprep.subr.mxu0 0.0
      %1920 = vmatpush2.msra.mxu0 0.0
      %1921 = vmatprep.subr.mxu0 0.0
      %1922 = vmatpush2.msra.mxu0 0.0
      %1923 = vmatprep.subr.mxu0 0.0
      %1924 = vmatpush2.msra.mxu0 0.0
      %1925 = vmatprep.subr.mxu0 0.0
      %1926 = vmatpush2.msra.mxu0 0.0
      %1927 = vmatprep.subr.mxu0 0.0
      %1928 = vmatpush2.msra.mxu0 0.0
      %1929 = vmatprep.subr.mxu0 0.0
      %1930 = vmatpush2.msra.mxu0 0.0
      %1931 = vmatprep.subr.mxu0 0.0
      %1932 = vmatpush2.msra.mxu0 0.0
      %1933 = vmatprep.subr.mxu0 0.0
      %1934 = vmatpush2.msra.mxu0 0.0
      %1935 = vmatprep.subr.mxu0 0.0
      %1936 = vmatpush2.msra.mxu0 0.0
      %1937 = vmatprep.subr.mxu0 0.0
      %1938 = vmatpush2.msra.mxu0 0.0
      %1939 = vmatprep.subr.mxu0 0.0
      %1940 = vmatpush2.msra.mxu0 0.0
      %1941 = vmatprep.subr.mxu0 0.0
      %1942 = vmatpush2.msra.mxu0 0.0
      %1943 = vmatprep.subr.mxu0 0.0
      %1944 = vmatpush2.msra.mxu0 0.0
      %1945 = vmatprep.subr.mxu0 0.0
      %1946 = vmatpush2.msra.mxu0 0.0
      %1947 = vmatprep.subr.mxu0 0.0
      %1948 = vmatpush2.msra.mxu0 0.0
      %1949 = vmatprep.subr.mxu0 0.0
      %1950 = vmatpush2.msra.mxu0 0.0
      %1951 = vmatprep.mubr.f32.mxu0 0.0
      %1952 = vmatmul.mubr.f32.gmra.mxu0 %v1882
      %v1953 = vpop.f32.mrf.mxu0
      %v1954 = vadd.f32 0.0, %v1953
      %v1955 = vpop.f32.mrf.mxu0
      %1956 = vmatprep.mubr.f32.mxu0 0.0
      %1957 = vmatmul.mubr.f32.gmra.mxu0 %v1885
      %v1958 = vpop.f32.mrf.mxu0
      %v1959 = vadd.f32 0.0, %v1958
      %v1960 = vpop.f32.mrf.mxu0
      %1961 = vdwg.mxu0
      %v1962 = vadd.f32 %v1673, %v1954
      %v1963 = vadd.f32 %v1678, %v1959
      %1964 = vrot.lane.b32.xlu0 %v909, 32
      %v1965 = vpop.permute.xlu0 %1964
      %1966 = vrot.lane.b32.xlu0 %v910, 32
      %v1967 = vpop.permute.xlu0 %1966
      %1968 = vrot.lane.b32.xlu0 %v1001, 32
      %v1969 = vpop.permute.xlu0 %1968
      %1970 = vrot.lane.b32.xlu0 %v1006, 32
      %v1971 = vpop.permute.xlu0 %1970
      %v1972 = vsel %vm1125, %v1965, 0
      %v1974 = vsel %vm1125, %v1967, 0
      %v1976 = vsel %vm1125, %v1969, 0
      %v1978 = vsel %vm1125, %v1971, 0
      %1980 = vmatprep.subr.mxu0 0.0
      %1981 = vmatpush1.xpose.msra.mxu0 0.0
      %1982 = vmatprep.subr.mxu0 0.0
      %1983 = vmatpush1.xpose.msra.mxu0 0.0
      %1984 = vmatprep.subr.mxu0 0.0
      %1985 = vmatpush1.xpose.msra.mxu0 0.0
      %1986 = vmatprep.subr.mxu0 0.0
      %1987 = vmatpush1.xpose.msra.mxu0 0.0
      %1988 = vmatprep.subr.mxu0 0.0
      %1989 = vmatpush1.xpose.msra.mxu0 0.0
      %1990 = vmatprep.subr.mxu0 0.0
      %1991 = vmatpush1.xpose.msra.mxu0 0.0
      %1992 = vmatprep.subr.mxu0 0.0
      %1993 = vmatpush1.xpose.msra.mxu0 0.0
      %1994 = vmatprep.subr.mxu0 0.0
      %1995 = vmatpush1.xpose.msra.mxu0 0.0
      %1996 = vmatprep.subr.mxu0 0.0
      %1997 = vmatpush1.xpose.msra.mxu0 0.0
      %1998 = vmatprep.subr.mxu0 0.0
      %1999 = vmatpush1.xpose.msra.mxu0 0.0
      %2000 = vmatprep.subr.mxu0 0.0
      %2001 = vmatpush1.xpose.msra.mxu0 0.0
      %2002 = vmatprep.subr.mxu0 0.0
      %2003 = vmatpush1.xpose.msra.mxu0 0.0
      %2004 = vmatprep.subr.mxu0 0.0
      %2005 = vmatpush1.xpose.msra.mxu0 0.0
      %2006 = vmatprep.subr.mxu0 0.0
      %2007 = vmatpush1.xpose.msra.mxu0 0.0
      %2008 = vmatprep.subr.mxu0 0.0
      %2009 = vmatpush1.xpose.msra.mxu0 %v1978
      %2010 = vmatprep.subr.mxu0 0.0
      %2011 = vmatpush1.xpose.msra.mxu0 %v1976
      %2012 = vmatprep.subr.mxu0 0.0
      %2013 = vmatpush2.xpose.msra.mxu0 0.0
      %2014 = vmatprep.subr.mxu0 0.0
      %2015 = vmatpush2.xpose.msra.mxu0 0.0
      %2016 = vmatprep.subr.mxu0 0.0
      %2017 = vmatpush2.xpose.msra.mxu0 0.0
      %2018 = vmatprep.subr.mxu0 0.0
      %2019 = vmatpush2.xpose.msra.mxu0 0.0
      %2020 = vmatprep.subr.mxu0 0.0
      %2021 = vmatpush2.xpose.msra.mxu0 0.0
      %2022 = vmatprep.subr.mxu0 0.0
      %2023 = vmatpush2.xpose.msra.mxu0 0.0
      %2024 = vmatprep.subr.mxu0 0.0
      %2025 = vmatpush2.xpose.msra.mxu0 0.0
      %2026 = vmatprep.subr.mxu0 0.0
      %2027 = vmatpush2.xpose.msra.mxu0 0.0
      %2028 = vmatprep.subr.mxu0 0.0
      %2029 = vmatpush2.xpose.msra.mxu0 0.0
      %2030 = vmatprep.subr.mxu0 0.0
      %2031 = vmatpush2.xpose.msra.mxu0 0.0
      %2032 = vmatprep.subr.mxu0 0.0
      %2033 = vmatpush2.xpose.msra.mxu0 0.0
      %2034 = vmatprep.subr.mxu0 0.0
      %2035 = vmatpush2.xpose.msra.mxu0 0.0
      %2036 = vmatprep.subr.mxu0 0.0
      %2037 = vmatpush2.xpose.msra.mxu0 0.0
      %2038 = vmatprep.subr.mxu0 0.0
      %2039 = vmatpush2.xpose.msra.mxu0 0.0
      %2040 = vmatprep.subr.mxu0 0.0
      %2041 = vmatpush2.xpose.msra.mxu0 0.0
      %2042 = vmatprep.subr.mxu0 0.0
      %2043 = vmatpush2.xpose.msra.mxu0 0.0
      %2044 = vmatprep.mubr.f32.mxu0 0.0
      %2045 = vmatmul.mubr.f32.gmra.mxu0 %v1972
      %v2046 = vpop.f32.mrf.mxu0
      %v2047 = vadd.f32 %v1107, %v2046
      %v2048 = vpop.f32.mrf.mxu0
      %2049 = vmatprep.mubr.f32.mxu0 0.0
      %2050 = vmatmul.mubr.f32.gmra.mxu0 %v1974
      %v2051 = vpop.f32.mrf.mxu0
      %v2052 = vadd.f32 %v1108, %v2051
      %v2053 = vpop.f32.mrf.mxu0
      %2054 = vdwg.mxu0
      %v2055 = vsel %vm1213, %v2047, -inf
      %2056 = vmax.xlane.f32.xlu0 %v2055
      %v2057 = vpop.xlane.xlu0 %2056
      %v2058 = vsel %vm1213, %v2052, -inf
      %2059 = vmax.xlane.f32.xlu0 %v2058
      %v2060 = vpop.xlane.xlu0 %2059
      %v2061 = vsub.f32 %v2047, %v2057
      %v2062 = vsub.f32 %v2052, %v2060
      %v2063 = vmul.f32 %v2061, 1.442695
      %v2064 = vpow.pop %v2063
      %v2065 = vmul.f32 %v2062, 1.442695
      %v2066 = vpow.pop %v2065
      %v2067 = vsel %vm1213, %v2064, 0.0
      %2068 = vadd.xlane.f32.xlu0 %v2067
      %v2069 = vpop.xlane.xlu0 %2068
      %v2070 = vsel %vm1213, %v2066, 0.0
      %2071 = vadd.xlane.f32.xlu0 %v2070
      %v2072 = vpop.xlane.xlu0 %2071
      %v2073 = vrcp.pop %v2069
      %v2074 = vrcp.pop %v2072
      %v2075 = vmul.f32 %v2064, %v2073
      %v2076 = vmul.f32 %v2066, %v2074
      %2077 = vrot.lane.b32.xlu0 %v1099, 32
      %v2078 = vpop.permute.xlu0 %2077
      %2079 = vrot.lane.b32.xlu0 %v1104, 32
      %v2080 = vpop.permute.xlu0 %2079
      %v2084 = vsel %vm1213, %v2075, 0
      %v2087 = vsel %vm1213, %v2076, 0
      %2089 = vmatprep.subr.mxu0 0.0
      %2090 = vmatpush1.msra.mxu0 0.0
      %2091 = vmatprep.subr.mxu0 0.0
      %2092 = vmatpush1.msra.mxu0 0.0
      %2093 = vmatprep.subr.mxu0 0.0
      %2094 = vmatpush1.msra.mxu0 0.0
      %2095 = vmatprep.subr.mxu0 0.0
      %2096 = vmatpush1.msra.mxu0 0.0
      %2097 = vmatprep.subr.mxu0 0.0
      %2098 = vmatpush1.msra.mxu0 0.0
      %2099 = vmatprep.subr.mxu0 0.0
      %2100 = vmatpush1.msra.mxu0 0.0
      %2101 = vmatprep.subr.mxu0 0.0
      %2102 = vmatpush1.msra.mxu0 0.0
      %2103 = vmatprep.subr.mxu0 0.0
      %2104 = vmatpush1.msra.mxu0 0.0
      %2105 = vmatprep.subr.mxu0 0.0
      %2106 = vmatpush1.msra.mxu0 0.0
      %2107 = vmatprep.subr.mxu0 0.0
      %2108 = vmatpush1.msra.mxu0 0.0
      %2109 = vmatprep.subr.mxu0 0.0
      %2110 = vmatpush1.msra.mxu0 0.0
      %2111 = vmatprep.subr.mxu0 0.0
      %2112 = vmatpush1.msra.mxu0 0.0
      %2113 = vmatprep.subr.mxu0 0.0
      %2114 = vmatpush1.msra.mxu0 0.0
      %2115 = vmatprep.subr.mxu0 0.0
      %2116 = vmatpush1.msra.mxu0 0.0
      %2117 = vmatprep.subr.mxu0 0.0
      %2118 = vmatpush1.msra.mxu0 %v2080
      %2119 = vmatprep.subr.mxu0 0.0
      %2120 = vmatpush1.msra.mxu0 %v2078
      %2121 = vmatprep.subr.mxu0 0.0
      %2122 = vmatpush2.msra.mxu0 0.0
      %2123 = vmatprep.subr.mxu0 0.0
      %2124 = vmatpush2.msra.mxu0 0.0
      %2125 = vmatprep.subr.mxu0 0.0
      %2126 = vmatpush2.msra.mxu0 0.0
      %2127 = vmatprep.subr.mxu0 0.0
      %2128 = vmatpush2.msra.mxu0 0.0
      %2129 = vmatprep.subr.mxu0 0.0
      %2130 = vmatpush2.msra.mxu0 0.0
      %2131 = vmatprep.subr.mxu0 0.0
      %2132 = vmatpush2.msra.mxu0 0.0
      %2133 = vmatprep.subr.mxu0 0.0
      %2134 = vmatpush2.msra.mxu0 0.0
      %2135 = vmatprep.subr.mxu0 0.0
      %2136 = vmatpush2.msra.mxu0 0.0
      %2137 = vmatprep.subr.mxu0 0.0
      %2138 = vmatpush2.msra.mxu0 0.0
      %2139 = vmatprep.subr.mxu0 0.0
      %2140 = vmatpush2.msra.mxu0 0.0
      %2141 = vmatprep.subr.mxu0 0.0
      %2142 = vmatpush2.msra.mxu0 0.0
      %2143 = vmatprep.subr.mxu0 0.0
      %2144 = vmatpush2.msra.mxu0 0.0
      %2145 = vmatprep.subr.mxu0 0.0
      %2146 = vmatpush2.msra.mxu0 0.0
      %2147 = vmatprep.subr.mxu0 0.0
      %2148 = vmatpush2.msra.mxu0 0.0
      %2149 = vmatprep.subr.mxu0 0.0
      %2150 = vmatpush2.msra.mxu0 0.0
      %2151 = vmatprep.subr.mxu0 0.0
      %2152 = vmatpush2.msra.mxu0 0.0
      %2153 = vmatprep.mubr.f32.mxu0 0.0
      %2154 = vmatmul.mubr.f32.gmra.mxu0 %v2084
      %v2155 = vpop.f32.mrf.mxu0
      %v2156 = vadd.f32 0.0, %v2155
      %v2157 = vpop.f32.mrf.mxu0
      %2158 = vmatprep.mubr.f32.mxu0 0.0
      %2159 = vmatmul.mubr.f32.gmra.mxu0 %v2087
      %v2160 = vpop.f32.mrf.mxu0
      %v2161 = vadd.f32 0.0, %v2160
      %v2162 = vpop.f32.mrf.mxu0
      %2163 = vdwg.mxu0
      %v2165 = vsel %vm1125, %v2156, 0
      %v2168 = vsel %vm1125, %v2161, 0
      %2170 = vmatprep.subr.mxu0 0.0
      %2171 = vmatpush1.msra.mxu0 0.0
      %2172 = vmatprep.subr.mxu0 0.0
      %2173 = vmatpush1.msra.mxu0 0.0
      %2174 = vmatprep.subr.mxu0 0.0
      %2175 = vmatpush1.msra.mxu0 0.0
      %2176 = vmatprep.subr.mxu0 0.0
      %2177 = vmatpush1.msra.mxu0 0.0
      %2178 = vmatprep.subr.mxu0 0.0
      %2179 = vmatpush1.msra.mxu0 0.0
      %2180 = vmatprep.subr.mxu0 0.0
      %2181 = vmatpush1.msra.mxu0 0.0
      %2182 = vmatprep.subr.mxu0 0.0
      %2183 = vmatpush1.msra.mxu0 0.0
      %2184 = vmatprep.subr.mxu0 0.0
      %2185 = vmatpush1.msra.mxu0 0.0
      %2186 = vmatprep.subr.mxu0 0.0
      %2187 = vmatpush1.msra.mxu0 0.0
      %2188 = vmatprep.subr.mxu0 0.0
      %2189 = vmatpush1.msra.mxu0 0.0
      %2190 = vmatprep.subr.mxu0 0.0
      %2191 = vmatpush1.msra.mxu0 0.0
      %2192 = vmatprep.subr.mxu0 0.0
      %2193 = vmatpush1.msra.mxu0 0.0
      %2194 = vmatprep.subr.mxu0 0.0
      %2195 = vmatpush1.msra.mxu0 %v1124
      %2196 = vmatprep.subr.mxu0 0.0
      %2197 = vmatpush1.msra.mxu0 %v1123
      %2198 = vmatprep.subr.mxu0 0.0
      %2199 = vmatpush1.msra.mxu0 %v1122
      %2200 = vmatprep.subr.mxu0 0.0
      %2201 = vmatpush1.msra.mxu0 %v1121
      %2202 = vmatprep.subr.mxu0 0.0
      %2203 = vmatpush2.msra.mxu0 0.0
      %2204 = vmatprep.subr.mxu0 0.0
      %2205 = vmatpush2.msra.mxu0 0.0
      %2206 = vmatprep.subr.mxu0 0.0
      %2207 = vmatpush2.msra.mxu0 0.0
      %2208 = vmatprep.subr.mxu0 0.0
      %2209 = vmatpush2.msra.mxu0 0.0
      %2210 = vmatprep.subr.mxu0 0.0
      %2211 = vmatpush2.msra.mxu0 0.0
      %2212 = vmatprep.subr.mxu0 0.0
      %2213 = vmatpush2.msra.mxu0 0.0
      %2214 = vmatprep.subr.mxu0 0.0
      %2215 = vmatpush2.msra.mxu0 0.0
      %2216 = vmatprep.subr.mxu0 0.0
      %2217 = vmatpush2.msra.mxu0 0.0
      %2218 = vmatprep.subr.mxu0 0.0
      %2219 = vmatpush2.msra.mxu0 0.0
      %2220 = vmatprep.subr.mxu0 0.0
      %2221 = vmatpush2.msra.mxu0 0.0
      %2222 = vmatprep.subr.mxu0 0.0
      %2223 = vmatpush2.msra.mxu0 0.0
      %2224 = vmatprep.subr.mxu0 0.0
      %2225 = vmatpush2.msra.mxu0 0.0
      %2226 = vmatprep.subr.mxu0 0.0
      %2227 = vmatpush2.msra.mxu0 0.0
      %2228 = vmatprep.subr.mxu0 0.0
      %2229 = vmatpush2.msra.mxu0 0.0
      %2230 = vmatprep.subr.mxu0 0.0
      %2231 = vmatpush2.msra.mxu0 0.0
      %2232 = vmatprep.subr.mxu0 0.0
      %2233 = vmatpush2.msra.mxu0 0.0
      %2234 = vmatprep.mubr.f32.mxu0 0.0
      %2235 = vmatmul.mubr.f32.gmra.mxu0 %v2165
      %v2236 = vpop.f32.mrf.mxu0
      %v2237 = vadd.f32 0.0, %v2236
      %v2238 = vpop.f32.mrf.mxu0
      %2239 = vmatprep.mubr.f32.mxu0 0.0
      %2240 = vmatmul.mubr.f32.gmra.mxu0 %v2168
      %v2241 = vpop.f32.mrf.mxu0
      %v2242 = vadd.f32 0.0, %v2241
      %v2243 = vpop.f32.mrf.mxu0
      %2244 = vdwg.mxu0
      %v2245 = vadd.f32 %v1962, %v2237
      %v2246 = vadd.f32 %v1963, %v2242
      %v2247 = vld [vmem:[%s772] sm:$0x1]
      %v2249 = vlaneseq
      %v2250 = vshrl.u32 %v2249, 7
      %v2251 = vsub.s32 0, %v2250
      %v2252 = vrot.slane %v2247, %v2251
      %v2254 = vadd.f32 %v2245, %v2252
      %v2255 = vadd.f32 %v2246, %v2252
      %v2256 = vadd.f32 %v809, %v2254
      %v2257 = vadd.f32 %v810, %v2255
      %2258 = vadd.xlane.f32.xlu0 %v2256
      %v2259 = vpop.xlane.xlu0 %2258
      %2260 = vadd.xlane.f32.xlu0 %v2257
      %v2261 = vpop.xlane.xlu0 %2260
      %v2262 = vmul.f32 %v2259, 0.03125
      %v2263 = vmul.f32 %v2261, 0.03125
      %v2264 = vmul.f32 %v2256, %v2256
      %v2265 = vmul.f32 %v2257, %v2257
      %2266 = vadd.xlane.f32.xlu0 %v2264
      %v2267 = vpop.xlane.xlu0 %2266
      %2268 = vadd.xlane.f32.xlu0 %v2265
      %v2269 = vpop.xlane.xlu0 %2268
      %v2270 = vmul.f32 %v2267, 0.03125
      %v2271 = vmul.f32 %v2269, 0.03125
      %v2272 = vmul.f32 %v2262, %v2262
      %v2273 = vmul.f32 %v2263, %v2263
      %v2274 = vsub.f32 %v2270, %v2272
      %v2275 = vsub.f32 %v2271, %v2273
      %v2276 = vadd.f32 %v2274, 1e-05
      %v2277 = vadd.f32 %v2275, 1e-05
      %v2278 = vrsqrt.pop %v2276
      %v2279 = vrsqrt.pop %v2277
      %v2280 = vsub.f32 %v2256, %v2262
      %v2281 = vsub.f32 %v2257, %v2263
      %v2282 = vmul.f32 %v2280, %v2278
      %v2283 = vmul.f32 %v2281, %v2279
      %v2284 = vld [vmem:[%s775] sm:$0x1]
      %v2286 = vlaneseq
      %v2287 = vshrl.u32 %v2286, 7
      %v2288 = vsub.s32 0, %v2287
      %v2289 = vrot.slane %v2284, %v2288
      %v2291 = vmul.f32 %v2282, %v2289
      %v2292 = vmul.f32 %v2283, %v2289
      %v2293 = vld [vmem:[%s778] sm:$0x1]
      %v2295 = vlaneseq
      %v2296 = vshrl.u32 %v2295, 7
      %v2297 = vsub.s32 0, %v2296
      %v2298 = vrot.slane %v2293, %v2297
      %v2300 = vadd.f32 %v2291, %v2298
      %v2301 = vadd.f32 %v2292, %v2298
      %v2302 = vld [vmem:[%s783] sm:$0xff]
      %v2303 = vld [vmem:[%s783 + $0x8] sm:$0xff]
      %v2304 = vld [vmem:[%s783 + $0x10] sm:$0xff]
      %v2305 = vld [vmem:[%s783 + $0x18] sm:$0xff]
      %v2306 = vld [vmem:[%s783 + $0x20] sm:$0xff]
      %v2307 = vld [vmem:[%s783 + $0x28] sm:$0xff]
      %v2308 = vld [vmem:[%s783 + $0x30] sm:$0xff]
      %v2309 = vld [vmem:[%s783 + $0x38] sm:$0xff]
      %v2310 = vld [vmem:[%s783 + $0x40] sm:$0xff]
      %v2311 = vld [vmem:[%s783 + $0x48] sm:$0xff]
      %v2312 = vld [vmem:[%s783 + $0x50] sm:$0xff]
      %v2313 = vld [vmem:[%s783 + $0x58] sm:$0xff]
      %v2314 = vld [vmem:[%s783 + $0x60] sm:$0xff]
      %v2315 = vld [vmem:[%s783 + $0x68] sm:$0xff]
      %v2316 = vld [vmem:[%s783 + $0x70] sm:$0xff]
      %v2317 = vld [vmem:[%s783 + $0x78] sm:$0xff]
      %v2318 = vld [vmem:[%s786] sm:$0x1]
      %v2320 = vlaneseq
      %v2321 = vshrl.u32 %v2320, 7
      %v2322 = vsub.s32 0, %v2321
      %v2323 = vrot.slane %v2318, %v2322
      %2325 = vmatprep.subr.mxu0 0.0
      %2326 = vmatpush1.msra.mxu0 %v2317
      %2327 = vmatprep.subr.mxu0 0.0
      %2328 = vmatpush1.msra.mxu0 %v2316
      %2329 = vmatprep.subr.mxu0 0.0
      %2330 = vmatpush1.msra.mxu0 %v2315
      %2331 = vmatprep.subr.mxu0 0.0
      %2332 = vmatpush1.msra.mxu0 %v2314
      %2333 = vmatprep.subr.mxu0 0.0
      %2334 = vmatpush1.msra.mxu0 %v2313
      %2335 = vmatprep.subr.mxu0 0.0
      %2336 = vmatpush1.msra.mxu0 %v2312
      %2337 = vmatprep.subr.mxu0 0.0
      %2338 = vmatpush1.msra.mxu0 %v2311
      %2339 = vmatprep.subr.mxu0 0.0
      %2340 = vmatpush1.msra.mxu0 %v2310
      %2341 = vmatprep.subr.mxu0 0.0
      %2342 = vmatpush1.msra.mxu0 %v2309
      %2343 = vmatprep.subr.mxu0 0.0
      %2344 = vmatpush1.msra.mxu0 %v2308
      %2345 = vmatprep.subr.mxu0 0.0
      %2346 = vmatpush1.msra.mxu0 %v2307
      %2347 = vmatprep.subr.mxu0 0.0
      %2348 = vmatpush1.msra.mxu0 %v2306
      %2349 = vmatprep.subr.mxu0 0.0
      %2350 = vmatpush1.msra.mxu0 %v2305
      %2351 = vmatprep.subr.mxu0 0.0
      %2352 = vmatpush1.msra.mxu0 %v2304
      %2353 = vmatprep.subr.mxu0 0.0
      %2354 = vmatpush1.msra.mxu0 %v2303
      %2355 = vmatprep.subr.mxu0 0.0
      %2356 = vmatpush1.msra.mxu0 %v2302
      %2357 = vmatprep.subr.mxu0 0.0
      %2358 = vmatpush2.msra.mxu0 0.0
      %2359 = vmatprep.subr.mxu0 0.0
      %2360 = vmatpush2.msra.mxu0 0.0
      %2361 = vmatprep.subr.mxu0 0.0
      %2362 = vmatpush2.msra.mxu0 0.0
      %2363 = vmatprep.subr.mxu0 0.0
      %2364 = vmatpush2.msra.mxu0 0.0
      %2365 = vmatprep.subr.mxu0 0.0
      %2366 = vmatpush2.msra.mxu0 0.0
      %2367 = vmatprep.subr.mxu0 0.0
      %2368 = vmatpush2.msra.mxu0 0.0
      %2369 = vmatprep.subr.mxu0 0.0
      %2370 = vmatpush2.msra.mxu0 0.0
      %2371 = vmatprep.subr.mxu0 0.0
      %2372 = vmatpush2.msra.mxu0 0.0
      %2373 = vmatprep.subr.mxu0 0.0
      %2374 = vmatpush2.msra.mxu0 0.0
      %2375 = vmatprep.subr.mxu0 0.0
      %2376 = vmatpush2.msra.mxu0 0.0
      %2377 = vmatprep.subr.mxu0 0.0
      %2378 = vmatpush2.msra.mxu0 0.0
      %2379 = vmatprep.subr.mxu0 0.0
      %2380 = vmatpush2.msra.mxu0 0.0
      %2381 = vmatprep.subr.mxu0 0.0
      %2382 = vmatpush2.msra.mxu0 0.0
      %2383 = vmatprep.subr.mxu0 0.0
      %2384 = vmatpush2.msra.mxu0 0.0
      %2385 = vmatprep.subr.mxu0 0.0
      %2386 = vmatpush2.msra.mxu0 0.0
      %2387 = vmatprep.subr.mxu0 0.0
      %2388 = vmatpush2.msra.mxu0 0.0
      %2389 = vmatprep.mubr.f32.mxu0 0.0
      %2390 = vmatmul.mubr.f32.gmra.mxu0 %v2300
      %v2391 = vpop.f32.mrf.mxu0
      %v2392 = vadd.f32 %v2323, %v2391
      %v2393 = vpop.f32.mrf.mxu0
      %2394 = vmatprep.mubr.f32.mxu0 0.0
      %2395 = vmatmul.mubr.f32.gmra.mxu0 %v2301
      %v2396 = vpop.f32.mrf.mxu0
      %v2397 = vadd.f32 %v2323, %v2396
      %v2398 = vpop.f32.mrf.mxu0
      %2399 = vdwg.mxu0
      %v2400 = vmax.f32 %v2392, 0.0
      %v2401 = vmax.f32 %v2397, 0.0
      %v2402 = vld [vmem:[%s791] sm:$0xff]
      %v2403 = vld [vmem:[%s791 + $0x8] sm:$0xff]
      %v2404 = vld [vmem:[%s791 + $0x10] sm:$0xff]
      %v2405 = vld [vmem:[%s791 + $0x18] sm:$0xff]
      %v2406 = vld [vmem:[%s791 + $0x20] sm:$0xff]
      %v2407 = vld [vmem:[%s791 + $0x28] sm:$0xff]
      %v2408 = vld [vmem:[%s791 + $0x30] sm:$0xff]
      %v2409 = vld [vmem:[%s791 + $0x38] sm:$0xff]
      %v2410 = vld [vmem:[%s791 + $0x40] sm:$0xff]
      %v2411 = vld [vmem:[%s791 + $0x48] sm:$0xff]
      %v2412 = vld [vmem:[%s791 + $0x50] sm:$0xff]
      %v2413 = vld [vmem:[%s791 + $0x58] sm:$0xff]
      %v2414 = vld [vmem:[%s791 + $0x60] sm:$0xff]
      %v2415 = vld [vmem:[%s791 + $0x68] sm:$0xff]
      %v2416 = vld [vmem:[%s791 + $0x70] sm:$0xff]
      %v2417 = vld [vmem:[%s791 + $0x78] sm:$0xff]
      %v2418 = vld [vmem:[%s794] sm:$0x1]
      %v2420 = vlaneseq
      %v2421 = vshrl.u32 %v2420, 7
      %v2422 = vsub.s32 0, %v2421
      %v2423 = vrot.slane %v2418, %v2422
      %2425 = vmatprep.subr.mxu0 0.0
      %2426 = vmatpush1.msra.mxu0 %v2417
      %2427 = vmatprep.subr.mxu0 0.0
      %2428 = vmatpush1.msra.mxu0 %v2416
      %2429 = vmatprep.subr.mxu0 0.0
      %2430 = vmatpush1.msra.mxu0 %v2415
      %2431 = vmatprep.subr.mxu0 0.0
      %2432 = vmatpush1.msra.mxu0 %v2414
      %2433 = vmatprep.subr.mxu0 0.0
      %2434 = vmatpush1.msra.mxu0 %v2413
      %2435 = vmatprep.subr.mxu0 0.0
      %2436 = vmatpush1.msra.mxu0 %v2412
      %2437 = vmatprep.subr.mxu0 0.0
      %2438 = vmatpush1.msra.mxu0 %v2411
      %2439 = vmatprep.subr.mxu0 0.0
      %2440 = vmatpush1.msra.mxu0 %v2410
      %2441 = vmatprep.subr.mxu0 0.0
      %2442 = vmatpush1.msra.mxu0 %v2409
      %2443 = vmatprep.subr.mxu0 0.0
      %2444 = vmatpush1.msra.mxu0 %v2408
      %2445 = vmatprep.subr.mxu0 0.0
      %2446 = vmatpush1.msra.mxu0 %v2407
      %2447 = vmatprep.subr.mxu0 0.0
      %2448 = vmatpush1.msra.mxu0 %v2406
      %2449 = vmatprep.subr.mxu0 0.0
      %2450 = vmatpush1.msra.mxu0 %v2405
      %2451 = vmatprep.subr.mxu0 0.0
      %2452 = vmatpush1.msra.mxu0 %v2404
      %2453 = vmatprep.subr.mxu0 0.0
      %2454 = vmatpush1.msra.mxu0 %v2403
      %2455 = vmatprep.subr.mxu0 0.0
      %2456 = vmatpush1.msra.mxu0 %v2402
      %2457 = vmatprep.subr.mxu0 0.0
      %2458 = vmatpush2.msra.mxu0 0.0
      %2459 = vmatprep.subr.mxu0 0.0
      %2460 = vmatpush2.msra.mxu0 0.0
      %2461 = vmatprep.subr.mxu0 0.0
      %2462 = vmatpush2.msra.mxu0 0.0
      %2463 = vmatprep.subr.mxu0 0.0
      %2464 = vmatpush2.msra.mxu0 0.0
      %2465 = vmatprep.subr.mxu0 0.0
      %2466 = vmatpush2.msra.mxu0 0.0
      %2467 = vmatprep.subr.mxu0 0.0
      %2468 = vmatpush2.msra.mxu0 0.0
      %2469 = vmatprep.subr.mxu0 0.0
      %2470 = vmatpush2.msra.mxu0 0.0
      %2471 = vmatprep.subr.mxu0 0.0
      %2472 = vmatpush2.msra.mxu0 0.0
      %2473 = vmatprep.subr.mxu0 0.0
      %2474 = vmatpush2.msra.mxu0 0.0
      %2475 = vmatprep.subr.mxu0 0.0
      %2476 = vmatpush2.msra.mxu0 0.0
      %2477 = vmatprep.subr.mxu0 0.0
      %2478 = vmatpush2.msra.mxu0 0.0
      %2479 = vmatprep.subr.mxu0 0.0
      %2480 = vmatpush2.msra.mxu0 0.0
      %2481 = vmatprep.subr.mxu0 0.0
      %2482 = vmatpush2.msra.mxu0 0.0
      %2483 = vmatprep.subr.mxu0 0.0
      %2484 = vmatpush2.msra.mxu0 0.0
      %2485 = vmatprep.subr.mxu0 0.0
      %2486 = vmatpush2.msra.mxu0 0.0
      %2487 = vmatprep.subr.mxu0 0.0
      %2488 = vmatpush2.msra.mxu0 0.0
      %2489 = vmatprep.mubr.f32.mxu0 0.0
      %2490 = vmatmul.mubr.f32.gmra.mxu0 %v2400
      %v2491 = vpop.f32.mrf.mxu0
      %v2492 = vadd.f32 %v2423, %v2491
      %v2493 = vpop.f32.mrf.mxu0
      %2494 = vmatprep.mubr.f32.mxu0 0.0
      %2495 = vmatmul.mubr.f32.gmra.mxu0 %v2401
      %v2496 = vpop.f32.mrf.mxu0
      %v2497 = vadd.f32 %v2423, %v2496
      %v2498 = vpop.f32.mrf.mxu0
      %2499 = vdwg.mxu0
      %v2500 = vadd.f32 %v2300, %v2492
      %v2501 = vadd.f32 %v2301, %v2497
      %2502 = vadd.xlane.f32.xlu0 %v2500
      %v2503 = vpop.xlane.xlu0 %2502
      %2504 = vadd.xlane.f32.xlu0 %v2501
      %v2505 = vpop.xlane.xlu0 %2504
      %v2506 = vmul.f32 %v2503, 0.03125
      %v2507 = vmul.f32 %v2505, 0.03125
      %v2508 = vmul.f32 %v2500, %v2500
      %v2509 = vmul.f32 %v2501, %v2501
      %2510 = vadd.xlane.f32.xlu0 %v2508
      %v2511 = vpop.xlane.xlu0 %2510
      %2512 = vadd.xlane.f32.xlu0 %v2509
      %v2513 = vpop.xlane.xlu0 %2512
      %v2514 = vmul.f32 %v2511, 0.03125
      %v2515 = vmul.f32 %v2513, 0.03125
      %v2516 = vmul.f32 %v2506, %v2506
      %v2517 = vmul.f32 %v2507, %v2507
      %v2518 = vsub.f32 %v2514, %v2516
      %v2519 = vsub.f32 %v2515, %v2517
      %v2520 = vadd.f32 %v2518, 1e-05
      %v2521 = vadd.f32 %v2519, 1e-05
      %v2522 = vrsqrt.pop %v2520
      %v2523 = vrsqrt.pop %v2521
      %v2524 = vsub.f32 %v2500, %v2506
      %v2525 = vsub.f32 %v2501, %v2507
      %v2526 = vmul.f32 %v2524, %v2522
      %v2527 = vmul.f32 %v2525, %v2523
      %v2528 = vld [vmem:[%s797] sm:$0x1]
      %v2530 = vlaneseq
      %v2531 = vshrl.u32 %v2530, 7
      %v2532 = vsub.s32 0, %v2531
      %v2533 = vrot.slane %v2528, %v2532
      %v2535 = vmul.f32 %v2526, %v2533
      %v2536 = vmul.f32 %v2527, %v2533
      %v2537 = vld [vmem:[%s800] sm:$0x1]
      %v2539 = vlaneseq
      %v2540 = vshrl.u32 %v2539, 7
      %v2541 = vsub.s32 0, %v2540
      %v2542 = vrot.slane %v2537, %v2541
      %v2544 = vadd.f32 %v2535, %v2542
      %v2545 = vadd.f32 %v2536, %v2542
      %2546 = vst [vmem:[%s18] sm:$0xff] %v2544
      %2547 = vst [vmem:[%s18 + $0x8] sm:$0xff] %v2545
      // Predicated region
      $region97: #{encoder_forward_pallas.1} parent=91 // pred_check
        %p2548 = pneg %p500
      $region98: #{encoder_forward_pallas.1} parent=91 // pred_check_branch
        %2550 = sbr.rel (%p2548) target = $region100
      $region99: #{encoder_forward_pallas.1} parent=91 // pred_region
        _
      $region100: #{encoder_forward_pallas.1} parent=91 // pred_fallthru
        _
      // Predicated region
      $region101: #{encoder_forward_pallas.1} parent=91 // pred_check
        %p2551 = pneg %p500
      $region102: #{encoder_forward_pallas.1} parent=91 // pred_check_branch
        %2553 = sbr.rel (%p2551) target = $region104
      $region103: #{encoder_forward_pallas.1} parent=91 // pred_region
        _
      $region104: #{encoder_forward_pallas.1} parent=91 // pred_fallthru
        _
    $region92: #{encoder_forward_pallas.1} parent=5 // pred_fallthru
      _
    %p2554 = scmp.le.s32.totalorder 2, %s24
    // Predicated region
    $region105: #{encoder_forward_pallas.1} parent=5 // pred_check
      %p2555 = pneg %p2554
    $region106: #{encoder_forward_pallas.1} parent=5 // pred_check_branch
      %2557 = sbr.rel (%p2555) target = $region108
    $region107: #{encoder_forward_pallas.1} parent=5 // pred_region
      %s2558 = ssub.s32 %s24, 2
    $region108: #{encoder_forward_pallas.1} parent=5 // pred_fallthru
      _
  $region6: #{encoder_forward_pallas.1} parent=0 // loop_footer
    %s28 = sadd.s32 1, %s24
  $region7: #{encoder_forward_pallas.1} parent=0 // loop_footer_branch
    %23 = sbr.rel target = $region3
  $region8: #{encoder_forward_pallas.1} parent=0 // loop_exit
    _

</llo_original>
